<compile_context>
chip_gen: v5e
topology: v5e:2x2
jax: 0.10.0
libtpu: 0.0.40
codegen_flags: <defaults>
</compile_context>

<pallas_src>
import jax
import jax.numpy as jnp
from jax import lax
from jax.experimental import pallas as pl
from jax.experimental.pallas import tpu as pltpu

LEAKY_SLOPE = 0.2
EPS = 1e-5  # PyTorch InstanceNorm2d default
_TAPS = ((0, 0), (0, 1), (1, 0), (1, 1))  # (dh, dw) order used for the K-fold


def _vmem_limit_bytes():
    """Generation-aware scoped-VMEM request (~7/8 of physical); None -> default."""
    try:
        cap = getattr(pltpu.get_tpu_info(), "vmem_capacity_bytes", None)
        if not cap or cap <= 0:
            return None
        return int(cap) * 7 // 8      # ~56 MiB on v7x (64), ~112 MiB on v5e/v6e (128)
    except Exception:
        return None


def _conv_up_block_kernel(x_ref, w_ref, o_ref, x2_ref, y_ref):
    """One sample per grid step.

    x_ref : (1, H+2, W+2, Cin)   zero-padded NHWC input (matmul dtype)
    w_ref : (4, 4*Cin, Cout)     folded per-phase weights, phase k = 2*p + q
    o_ref : (1, H, 2, W, 2*Cout) phase (p, q) at [0, :, p, :, q*Cout:(q+1)*Cout]
    x2_ref: (H+1, W+1, 4*Cin)    scratch: the four 2x2 tap views, channel-concat
    y_ref : (4, H*W, Cout)       scratch: raw (pre-norm) conv output per phase
    """
    H = o_ref.shape[1]
    W = o_ref.shape[3]
    Cin = x_ref.shape[-1]
    Cout = y_ref.shape[-1]
    HW = H * W

    # ---- Build the 4-tap channel-concatenated input once (hoisted views).
    # TODO(synk): when Cin % 128 != 0 these writes land at lane offsets t*Cin and
    # need an XLU lane shift; pad Cin wrapper-side to a multiple of 128 if this
    # shows up as the bottleneck (costs extra input-DMA bytes).
    for t, (dh, dw) in enumerate(_TAPS):
        x2_ref[:, :, t * Cin:(t + 1) * Cin] = x_ref[0, dh:dh + H + 1, dw:dw + W + 1, :]

    # ---- Pass 1: one K=4*Cin MXU matmul per phase; accumulate f32 channel stats.
    s1 = jnp.zeros((1, Cout), jnp.float32)
    s2 = jnp.zeros((1, Cout), jnp.float32)
    for p in range(2):
        for q in range(2):
            k = 2 * p + q
            # (H, W, 4Cin) -> (H*W, 4Cin) is a layout-free collapse when W % 8 == 0.
            lhs = x2_ref[p:p + H, q:q + W, :].reshape(HW, 4 * Cin)
            y = jnp.dot(lhs, w_ref[k], preferred_element_type=jnp.float32)  # (HW,Cout) f32
            s1 = s1 + jnp.sum(y, axis=0, keepdims=True)
            s2 = s2 + jnp.sum(y * y, axis=0, keepdims=True)
            y_ref[k] = y.astype(y_ref.dtype)   # bf16 store: halves the big scratch

    # ---- InstanceNorm2d (affine=False): biased variance over all 4*H*W pixels.
    inv_n = 1.0 / (4.0 * HW)
    mean = s1 * inv_n
    var = jnp.maximum(s2 * inv_n - mean * mean, 0.0)   # clamp single-pass variance
    scale = lax.rsqrt(var + EPS)

    # ---- Pass 2: normalize + LeakyReLU(0.2) + phase-layout stores.
    for p in range(2):
        for q in range(2):
            k = 2 * p + q
            yn = (y_ref[k].astype(jnp.float32) - mean) * scale
            yn = jnp.where(yn >= 0, yn, LEAKY_SLOPE * yn)
            o_ref[0, :, p, :, q * Cout:(q + 1) * Cout] = (
                yn.reshape(H, W, Cout).astype(o_ref.dtype))


def conv_up_block(x_nchw, weight, bias=None, *, matmul_dtype=jnp.bfloat16):
    """Forward of ConvUpBlock.

    x_nchw : (N, Cin, H, W)
    weight : (Cin, Cout, 4, 4)   PyTorch ConvTranspose2d weight layout
    bias   : (Cout,) or None.    Accepted for API parity but unused: a
                                 per-channel constant is exactly cancelled by
                                 InstanceNorm's mean subtraction (affine=False).
    returns: (N, Cout, 2H, 2W) in x_nchw.dtype
    """
    del bias  # mathematically a no-op before InstanceNorm2d(affine=False)
    N, Cin, H, W = x_nchw.shape
    Cout = weight.shape[1]

    # NCHW -> NHWC, 1px zero halo, cast to the MXU dtype (one fused XLA op; bf16
    # halves input HBM bytes and the x2 VMEM scratch).
    x_pad = jnp.pad(jnp.transpose(x_nchw, (0, 2, 3, 1)),
                    ((0, 0), (1, 1), (1, 1), (0, 0))).astype(matmul_dtype)

    # Phase decomposition of ConvTranspose2d(k=4, s=2, p=1):
    #   out[n, 2i+p, 2j+q, :] = sum_{dh,dw in {0,1}}
    #       x_pad[n, i+p+dh, j+q+dw, :] @ W[:, :, 3-p-2dh, 3-q-2dw]
    # The four (dh, dw) taps are folded into the contraction (K = 4*Cin).
    w_hw_io = jnp.transpose(weight, (2, 3, 0, 1))                  # (4, 4, Cin, Cout)
    wsub = jnp.stack([
        jnp.concatenate([w_hw_io[3 - p - 2 * dh, 3 - q - 2 * dw]
                         for (dh, dw) in _TAPS], axis=0)           # (4*Cin, Cout)
        for p in range(2) for q in range(2)]).astype(matmul_dtype)  # (4, 4*Cin, Cout)

    # TODO(synk): for large decoder shapes on v7x (64 MiB VMEM) add an H-tile grid
    # axis ("arbitrary") with a two-pass InstanceNorm (per-sample s1/s2 scratch),
    # which also lets batch-1 use both v7x TensorCores; for tiny per-sample work
    # (v5e) fold several samples into one grid step to amortize the ~0.35us/step
    # overhead; pipeline_mode=pl.Buffered(1) on the weight spec would drop its
    # useless second buffer on big-channel configs.
    grid_spec = pltpu.PrefetchScalarGridSpec(
        num_scalar_prefetch=0,
        grid=(N,),  # one sample per step; N >= 2 keeps both v7x TCs busy
        in_specs=[
            pl.BlockSpec((1, H + 2, W + 2, Cin), lambda n: (n, 0, 0, 0)),
            pl.BlockSpec((4, 4 * Cin, Cout), lambda n: (0, 0, 0)),
        ],
        out_specs=pl.BlockSpec((1, H, 2, W, 2 * Cout),
                               lambda n: (n, 0, 0, 0, 0)),
        scratch_shapes=[
            pltpu.VMEM((H + 1, W + 1, 4 * Cin), matmul_dtype),  # tap-folded input
            pltpu.VMEM((4, H * W, Cout), matmul_dtype),         # pre-norm phases
        ],
    )

    out = pl.pallas_call(
        _conv_up_block_kernel,
        out_shape=jax.ShapeDtypeStruct((N, H, 2, W, 2 * Cout), matmul_dtype),
        grid_spec=grid_spec,
        compiler_params=pltpu.CompilerParams(
            dimension_semantics=("parallel",),
            vmem_limit_bytes=_vmem_limit_bytes()),
    )(x_pad, wsub)

    # (N, H, 2, W, 2*Cout) -> (N, 2H, 2W, Cout) is a pure reshape (the phase
    # interleave is already in memory order); then the one remaining
    # NHWC -> NCHW transpose required by the PyTorch output layout + dtype cast.
    out = out.reshape(N, 2 * H, 2 * W, Cout)
    return jnp.transpose(out, (0, 3, 1, 2)).astype(x_nchw.dtype)


def _reference(x_nchw, weight, bias):
    # Pure-JAX reference of the PyTorch forward (for self-check).
    k_oihw = jnp.transpose(jnp.flip(weight, axis=(2, 3)), (1, 0, 2, 3))
    y = lax.conv_general_dilated(
        x_nchw, k_oihw, window_strides=(1, 1),
        padding=((2, 2), (2, 2)), lhs_dilation=(2, 2),
        dimension_numbers=("NCHW", "OIHW", "NCHW"))
    y = y + bias.reshape(1, -1, 1, 1)
    mean = jnp.mean(y, axis=(2, 3), keepdims=True)
    var = jnp.mean(jnp.square(y - mean), axis=(2, 3), keepdims=True)
    yn = (y - mean) * lax.rsqrt(var + EPS)
    return jnp.where(yn >= 0, yn, LEAKY_SLOPE * yn)


if __name__ == "__main__":
    key = jax.random.PRNGKey(0)
    kx, kw, kb = jax.random.split(key, 3)
    N, Cin, Cout, H, W = 2, 4, 8, 16, 16

    x = jax.random.normal(kx, (N, Cin, H, W), jnp.float32)
    w = 0.1 * jax.random.normal(kw, (Cin, Cout, 4, 4), jnp.float32)
    b = 0.1 * jax.random.normal(kb, (Cout,), jnp.float32)

    ref = _reference(x, w, b)

    # f32 MXU operands: strict check against the pure-JAX reference.
    out = jax.block_until_ready(conv_up_block(x, w, b, matmul_dtype=jnp.float32))
    assert out.shape == (N, Cout, 2 * H, 2 * W), out.shape
    err = float(jnp.max(jnp.abs(out - ref)))
    assert jnp.allclose(out, ref, atol=1e-3, rtol=1e-3), err

    # bf16 data path (default, recommended on v6e/v7x): looser check for rounding.
    out_bf16 = jax.block_until_ready(conv_up_block(x, w, b, matmul_dtype=jnp.bfloat16))
    err_bf16 = float(jnp.max(jnp.abs(out_bf16 - ref)))
    assert jnp.allclose(out_bf16, ref, atol=6e-2, rtol=6e-2), err_bf16

    print("KERNEL_OK")
</pallas_src>

<mosaic_0001>
module attributes {stable_mosaic.version = 11 : i64} {
  func.func @_conv_up_block_kernel(%arg0: i32, %arg1: memref<1x18x18x4xf32, #tpu.memory_space<vmem>>, %arg2: memref<4x16x8xf32, #tpu.memory_space<vmem>>, %arg3: memref<1x16x2x16x16xf32, #tpu.memory_space<vmem>>, %arg4: memref<17x17x16xf32, #tpu.memory_space<vmem>>, %arg5: memref<4x256x8xf32, #tpu.memory_space<vmem>>) attributes {dimension_semantics = [#tpu.dimension_semantics<parallel>], iteration_bounds = array<i64: 2>, scalar_prefetch = 0 : i64, scratch_operands = 2 : i64, tpu.core_type = #tpu.core_type<tc>, window_params = [{transform_indices = @transform_0, window_bounds = array<i64: 1, 18, 18, 4>}, {pipeline_mode = #tpu.pipeline_mode<synchronous>, transform_indices = @transform_1, window_bounds = array<i64: 4, 16, 8>}, {transform_indices = @transform_2, window_bounds = array<i64: 1, 16, 2, 16, 16>}]} {
    %c0 = arith.constant 0 : index
    %c0_0 = arith.constant 0 : index
    %c0_1 = arith.constant 0 : index
    %c0_2 = arith.constant 0 : index
    %0 = vector.load %arg1[%c0, %c0_0, %c0_1, %c0_2] : memref<1x18x18x4xf32, #tpu.memory_space<vmem>>, vector<1x17x17x4xf32>
    %1 = vector.shape_cast %0 : vector<1x17x17x4xf32> to vector<17x17x4xf32>
    %c0_3 = arith.constant 0 : index
    %c0_4 = arith.constant 0 : index
    %c0_5 = arith.constant 0 : index
    %2 = vector.load %arg4[%c0_3, %c0_4, %c0_5] : memref<17x17x16xf32, #tpu.memory_space<vmem>>, vector<17x17x4xf32>
    tpu.vector_store %arg4[%c0_3, %c0_4, %c0_5], %1 {strides = array<i32>} : memref<17x17x16xf32, #tpu.memory_space<vmem>>, vector<17x17x4xf32>,
    %c0_6 = arith.constant 0 : index
    %c0_7 = arith.constant 0 : index
    %c1 = arith.constant 1 : index
    %c0_8 = arith.constant 0 : index
    %3 = vector.load %arg1[%c0_6, %c0_7, %c1, %c0_8] : memref<1x18x18x4xf32, #tpu.memory_space<vmem>>, vector<1x17x17x4xf32>
    %4 = vector.shape_cast %3 : vector<1x17x17x4xf32> to vector<17x17x4xf32>
    %c0_9 = arith.constant 0 : index
    %c0_10 = arith.constant 0 : index
    %c4 = arith.constant 4 : index
    %5 = vector.load %arg4[%c0_9, %c0_10, %c4] : memref<17x17x16xf32, #tpu.memory_space<vmem>>, vector<17x17x4xf32>
    tpu.vector_store %arg4[%c0_9, %c0_10, %c4], %4 {strides = array<i32>} : memref<17x17x16xf32, #tpu.memory_space<vmem>>, vector<17x17x4xf32>,
    %c0_11 = arith.constant 0 : index
    %c1_12 = arith.constant 1 : index
    %c0_13 = arith.constant 0 : index
    %c0_14 = arith.constant 0 : index
    %6 = vector.load %arg1[%c0_11, %c1_12, %c0_13, %c0_14] : memref<1x18x18x4xf32, #tpu.memory_space<vmem>>, vector<1x17x17x4xf32>
    %7 = vector.shape_cast %6 : vector<1x17x17x4xf32> to vector<17x17x4xf32>
    %c0_15 = arith.constant 0 : index
    %c0_16 = arith.constant 0 : index
    %c8 = arith.constant 8 : index
    %8 = vector.load %arg4[%c0_15, %c0_16, %c8] : memref<17x17x16xf32, #tpu.memory_space<vmem>>, vector<17x17x4xf32>
    tpu.vector_store %arg4[%c0_15, %c0_16, %c8], %7 {strides = array<i32>} : memref<17x17x16xf32, #tpu.memory_space<vmem>>, vector<17x17x4xf32>,
    %c0_17 = arith.constant 0 : index
    %c1_18 = arith.constant 1 : index
    %c1_19 = arith.constant 1 : index
    %c0_20 = arith.constant 0 : index
    %9 = vector.load %arg1[%c0_17, %c1_18, %c1_19, %c0_20] : memref<1x18x18x4xf32, #tpu.memory_space<vmem>>, vector<1x17x17x4xf32>
    %10 = vector.shape_cast %9 : vector<1x17x17x4xf32> to vector<17x17x4xf32>
    %c0_21 = arith.constant 0 : index
    %c0_22 = arith.constant 0 : index
    %c12 = arith.constant 12 : index
    %11 = vector.load %arg4[%c0_21, %c0_22, %c12] : memref<17x17x16xf32, #tpu.memory_space<vmem>>, vector<17x17x4xf32>
    tpu.vector_store %arg4[%c0_21, %c0_22, %c12], %10 {strides = array<i32>} : memref<17x17x16xf32, #tpu.memory_space<vmem>>, vector<17x17x4xf32>,
    %cst = arith.constant 0.000000e+00 : f32
    %12 = vector.broadcast %cst : f32 to vector<1x8xf32>
    %cst_23 = arith.constant 0.000000e+00 : f32
    %13 = vector.broadcast %cst_23 : f32 to vector<1x8xf32>
    %c0_24 = arith.constant 0 : index
    %c0_25 = arith.constant 0 : index
    %c0_26 = arith.constant 0 : index
    %14 = vector.load %arg4[%c0_24, %c0_25, %c0_26] : memref<17x17x16xf32, #tpu.memory_space<vmem>>, vector<16x16x16xf32>
    %15 = vector.shape_cast %14 : vector<16x16x16xf32> to vector<256x16xf32>
    %c0_27 = arith.constant 0 : index
    %c0_28 = arith.constant 0 : index
    %c0_29 = arith.constant 0 : index
    %16 = vector.load %arg2[%c0_27, %c0_28, %c0_29] : memref<4x16x8xf32, #tpu.memory_space<vmem>>, vector<1x16x8xf32>
    %17 = vector.shape_cast %16 : vector<1x16x8xf32> to vector<16x8xf32>
    %cst_30 = arith.constant dense<0.000000e+00> : vector<256x8xf32>
    %18 = tpu.matmul %15, %17, %cst_30 {dimension_numbers = #tpu.dot_dimension_numbers<[1], [0], [0], [1], [0, 0, 1, 1], [], []>} : vector<256x16xf32>, vector<16x8xf32>, vector<256x8xf32> -> vector<256x8xf32>
    %cst_31 = arith.constant dense<0.000000e+00> : vector<8xf32>
    %19 = vector.multi_reduction <add>, %18, %cst_31 [0] : vector<256x8xf32> to vector<8xf32>
    %20 = vector.shape_cast %19 : vector<8xf32> to vector<1x8xf32>
    %21 = arith.addf %12, %20 : vector<1x8xf32>
    %22 = arith.mulf %18, %18 : vector<256x8xf32>
    %cst_32 = arith.constant dense<0.000000e+00> : vector<8xf32>
    %23 = vector.multi_reduction <add>, %22, %cst_32 [0] : vector<256x8xf32> to vector<8xf32>
    %24 = vector.shape_cast %23 : vector<8xf32> to vector<1x8xf32>
    %25 = arith.addf %13, %24 : vector<1x8xf32>
    %c0_33 = arith.constant 0 : index
    %c0_34 = arith.constant 0 : index
    %c0_35 = arith.constant 0 : index
    %26 = vector.load %arg5[%c0_33, %c0_34, %c0_35] : memref<4x256x8xf32, #tpu.memory_space<vmem>>, vector<1x256x8xf32>
    %27 = vector.shape_cast %26 : vector<1x256x8xf32> to vector<256x8xf32>
    %28 = vector.shape_cast %18 : vector<256x8xf32> to vector<1x256x8xf32>
    tpu.vector_store %arg5[%c0_33, %c0_34, %c0_35], %28 {strides = array<i32>} : memref<4x256x8xf32, #tpu.memory_space<vmem>>, vector<1x256x8xf32>,
    %c0_36 = arith.constant 0 : index
    %c1_37 = arith.constant 1 : index
    %c0_38 = arith.constant 0 : index
    %29 = vector.load %arg4[%c0_36, %c1_37, %c0_38] : memref<17x17x16xf32, #tpu.memory_space<vmem>>, vector<16x16x16xf32>
    %30 = vector.shape_cast %29 : vector<16x16x16xf32> to vector<256x16xf32>
    %c1_39 = arith.constant 1 : index
    %c0_40 = arith.constant 0 : index
    %c0_41 = arith.constant 0 : index
    %31 = vector.load %arg2[%c1_39, %c0_40, %c0_41] : memref<4x16x8xf32, #tpu.memory_space<vmem>>, vector<1x16x8xf32>
    %32 = vector.shape_cast %31 : vector<1x16x8xf32> to vector<16x8xf32>
    %cst_42 = arith.constant dense<0.000000e+00> : vector<256x8xf32>
    %33 = tpu.matmul %30, %32, %cst_42 {dimension_numbers = #tpu.dot_dimension_numbers<[1], [0], [0], [1], [0, 0, 1, 1], [], []>} : vector<256x16xf32>, vector<16x8xf32>, vector<256x8xf32> -> vector<256x8xf32>
    %cst_43 = arith.constant dense<0.000000e+00> : vector<8xf32>
    %34 = vector.multi_reduction <add>, %33, %cst_43 [0] : vector<256x8xf32> to vector<8xf32>
    %35 = vector.shape_cast %34 : vector<8xf32> to vector<1x8xf32>
    %36 = arith.addf %21, %35 : vector<1x8xf32>
    %37 = arith.mulf %33, %33 : vector<256x8xf32>
    %cst_44 = arith.constant dense<0.000000e+00> : vector<8xf32>
    %38 = vector.multi_reduction <add>, %37, %cst_44 [0] : vector<256x8xf32> to vector<8xf32>
    %39 = vector.shape_cast %38 : vector<8xf32> to vector<1x8xf32>
    %40 = arith.addf %25, %39 : vector<1x8xf32>
    %c1_45 = arith.constant 1 : index
    %c0_46 = arith.constant 0 : index
    %c0_47 = arith.constant 0 : index
    %41 = vector.load %arg5[%c1_45, %c0_46, %c0_47] : memref<4x256x8xf32, #tpu.memory_space<vmem>>, vector<1x256x8xf32>
    %42 = vector.shape_cast %41 : vector<1x256x8xf32> to vector<256x8xf32>
    %43 = vector.shape_cast %33 : vector<256x8xf32> to vector<1x256x8xf32>
    tpu.vector_store %arg5[%c1_45, %c0_46, %c0_47], %43 {strides = array<i32>} : memref<4x256x8xf32, #tpu.memory_space<vmem>>, vector<1x256x8xf32>,
    %c1_48 = arith.constant 1 : index
    %c0_49 = arith.constant 0 : index
    %c0_50 = arith.constant 0 : index
    %44 = vector.load %arg4[%c1_48, %c0_49, %c0_50] : memref<17x17x16xf32, #tpu.memory_space<vmem>>, vector<16x16x16xf32>
    %45 = vector.shape_cast %44 : vector<16x16x16xf32> to vector<256x16xf32>
    %c2 = arith.constant 2 : index
    %c0_51 = arith.constant 0 : index
    %c0_52 = arith.constant 0 : index
    %46 = vector.load %arg2[%c2, %c0_51, %c0_52] : memref<4x16x8xf32, #tpu.memory_space<vmem>>, vector<1x16x8xf32>
    %47 = vector.shape_cast %46 : vector<1x16x8xf32> to vector<16x8xf32>
    %cst_53 = arith.constant dense<0.000000e+00> : vector<256x8xf32>
    %48 = tpu.matmul %45, %47, %cst_53 {dimension_numbers = #tpu.dot_dimension_numbers<[1], [0], [0], [1], [0, 0, 1, 1], [], []>} : vector<256x16xf32>, vector<16x8xf32>, vector<256x8xf32> -> vector<256x8xf32>
    %cst_54 = arith.constant dense<0.000000e+00> : vector<8xf32>
    %49 = vector.multi_reduction <add>, %48, %cst_54 [0] : vector<256x8xf32> to vector<8xf32>
    %50 = vector.shape_cast %49 : vector<8xf32> to vector<1x8xf32>
    %51 = arith.addf %36, %50 : vector<1x8xf32>
    %52 = arith.mulf %48, %48 : vector<256x8xf32>
    %cst_55 = arith.constant dense<0.000000e+00> : vector<8xf32>
    %53 = vector.multi_reduction <add>, %52, %cst_55 [0] : vector<256x8xf32> to vector<8xf32>
    %54 = vector.shape_cast %53 : vector<8xf32> to vector<1x8xf32>
    %55 = arith.addf %40, %54 : vector<1x8xf32>
    %c2_56 = arith.constant 2 : index
    %c0_57 = arith.constant 0 : index
    %c0_58 = arith.constant 0 : index
    %56 = vector.load %arg5[%c2_56, %c0_57, %c0_58] : memref<4x256x8xf32, #tpu.memory_space<vmem>>, vector<1x256x8xf32>
    %57 = vector.shape_cast %56 : vector<1x256x8xf32> to vector<256x8xf32>
    %58 = vector.shape_cast %48 : vector<256x8xf32> to vector<1x256x8xf32>
    tpu.vector_store %arg5[%c2_56, %c0_57, %c0_58], %58 {strides = array<i32>} : memref<4x256x8xf32, #tpu.memory_space<vmem>>, vector<1x256x8xf32>,
    %c1_59 = arith.constant 1 : index
    %c1_60 = arith.constant 1 : index
    %c0_61 = arith.constant 0 : index
    %59 = vector.load %arg4[%c1_59, %c1_60, %c0_61] : memref<17x17x16xf32, #tpu.memory_space<vmem>>, vector<16x16x16xf32>
    %60 = vector.shape_cast %59 : vector<16x16x16xf32> to vector<256x16xf32>
    %c3 = arith.constant 3 : index
    %c0_62 = arith.constant 0 : index
    %c0_63 = arith.constant 0 : index
    %61 = vector.load %arg2[%c3, %c0_62, %c0_63] : memref<4x16x8xf32, #tpu.memory_space<vmem>>, vector<1x16x8xf32>
    %62 = vector.shape_cast %61 : vector<1x16x8xf32> to vector<16x8xf32>
    %cst_64 = arith.constant dense<0.000000e+00> : vector<256x8xf32>
    %63 = tpu.matmul %60, %62, %cst_64 {dimension_numbers = #tpu.dot_dimension_numbers<[1], [0], [0], [1], [0, 0, 1, 1], [], []>} : vector<256x16xf32>, vector<16x8xf32>, vector<256x8xf32> -> vector<256x8xf32>
    %cst_65 = arith.constant dense<0.000000e+00> : vector<8xf32>
    %64 = vector.multi_reduction <add>, %63, %cst_65 [0] : vector<256x8xf32> to vector<8xf32>
    %65 = vector.shape_cast %64 : vector<8xf32> to vector<1x8xf32>
    %66 = arith.addf %51, %65 : vector<1x8xf32>
    %67 = arith.mulf %63, %63 : vector<256x8xf32>
    %cst_66 = arith.constant dense<0.000000e+00> : vector<8xf32>
    %68 = vector.multi_reduction <add>, %67, %cst_66 [0] : vector<256x8xf32> to vector<8xf32>
    %69 = vector.shape_cast %68 : vector<8xf32> to vector<1x8xf32>
    %70 = arith.addf %55, %69 : vector<1x8xf32>
    %c3_67 = arith.constant 3 : index
    %c0_68 = arith.constant 0 : index
    %c0_69 = arith.constant 0 : index
    %71 = vector.load %arg5[%c3_67, %c0_68, %c0_69] : memref<4x256x8xf32, #tpu.memory_space<vmem>>, vector<1x256x8xf32>
    %72 = vector.shape_cast %71 : vector<1x256x8xf32> to vector<256x8xf32>
    %73 = vector.shape_cast %63 : vector<256x8xf32> to vector<1x256x8xf32>
    tpu.vector_store %arg5[%c3_67, %c0_68, %c0_69], %73 {strides = array<i32>} : memref<4x256x8xf32, #tpu.memory_space<vmem>>, vector<1x256x8xf32>,
    %cst_70 = arith.constant 9.765625E-4 : f32
    %74 = vector.broadcast %cst_70 : f32 to vector<1x8xf32>
    %75 = arith.mulf %66, %74 : vector<1x8xf32>
    %cst_71 = arith.constant 9.765625E-4 : f32
    %76 = vector.broadcast %cst_71 : f32 to vector<1x8xf32>
    %77 = arith.mulf %70, %76 : vector<1x8xf32>
    %78 = arith.mulf %75, %75 : vector<1x8xf32>
    %79 = arith.subf %77, %78 : vector<1x8xf32>
    %cst_72 = arith.constant 0.000000e+00 : f32
    %80 = vector.broadcast %cst_72 : f32 to vector<1x8xf32>
    %81 = arith.maximumf %79, %80 : vector<1x8xf32>
    %cst_73 = arith.constant 9.99999974E-6 : f32
    %82 = vector.broadcast %cst_73 : f32 to vector<1x8xf32>
    %83 = arith.addf %81, %82 : vector<1x8xf32>
    %84 = math.rsqrt %83 : vector<1x8xf32>
    %c0_74 = arith.constant 0 : index
    %c0_75 = arith.constant 0 : index
    %c0_76 = arith.constant 0 : index
    %85 = vector.load %arg5[%c0_74, %c0_75, %c0_76] : memref<4x256x8xf32, #tpu.memory_space<vmem>>, vector<1x256x8xf32>
    %86 = vector.shape_cast %85 : vector<1x256x8xf32> to vector<256x8xf32>
    %87 = vector.broadcast %75 : vector<1x8xf32> to vector<256x8xf32>
    %88 = arith.subf %86, %87 : vector<256x8xf32>
    %89 = vector.broadcast %84 : vector<1x8xf32> to vector<256x8xf32>
    %90 = arith.mulf %88, %89 : vector<256x8xf32>
    %cst_77 = arith.constant 0.000000e+00 : f32
    %91 = vector.broadcast %cst_77 : f32 to vector<256x8xf32>
    %92 = arith.cmpf oge, %90, %91 : vector<256x8xf32>
    %cst_78 = arith.constant 2.000000e-01 : f32
    %93 = vector.broadcast %cst_78 : f32 to vector<256x8xf32>
    %94 = arith.mulf %93, %90 : vector<256x8xf32>
    %95 = arith.select %92, %90, %94 : vector<256x8xi1>, vector<256x8xf32>
    %96 = vector.shape_cast %95 : vector<256x8xf32> to vector<16x16x8xf32>
    %c0_79 = arith.constant 0 : index
    %c0_80 = arith.constant 0 : index
    %c0_81 = arith.constant 0 : index
    %c0_82 = arith.constant 0 : index
    %c0_83 = arith.constant 0 : index
    %97 = vector.load %arg3[%c0_79, %c0_80, %c0_81, %c0_82, %c0_83] : memref<1x16x2x16x16xf32, #tpu.memory_space<vmem>>, vector<1x16x1x16x8xf32>
    %98 = vector.shape_cast %97 : vector<1x16x1x16x8xf32> to vector<16x16x8xf32>
    %99 = vector.shape_cast %96 : vector<16x16x8xf32> to vector<1x16x1x16x8xf32>
    tpu.vector_store %arg3[%c0_79, %c0_80, %c0_81, %c0_82, %c0_83], %99 {strides = array<i32>} : memref<1x16x2x16x16xf32, #tpu.memory_space<vmem>>, vector<1x16x1x16x8xf32>,
    %c1_84 = arith.constant 1 : index
    %c0_85 = arith.constant 0 : index
    %c0_86 = arith.constant 0 : index
    %100 = vector.load %arg5[%c1_84, %c0_85, %c0_86] : memref<4x256x8xf32, #tpu.memory_space<vmem>>, vector<1x256x8xf32>
    %101 = vector.shape_cast %100 : vector<1x256x8xf32> to vector<256x8xf32>
    %102 = vector.broadcast %75 : vector<1x8xf32> to vector<256x8xf32>
    %103 = arith.subf %101, %102 : vector<256x8xf32>
    %104 = vector.broadcast %84 : vector<1x8xf32> to vector<256x8xf32>
    %105 = arith.mulf %103, %104 : vector<256x8xf32>
    %cst_87 = arith.constant 0.000000e+00 : f32
    %106 = vector.broadcast %cst_87 : f32 to vector<256x8xf32>
    %107 = arith.cmpf oge, %105, %106 : vector<256x8xf32>
    %cst_88 = arith.constant 2.000000e-01 : f32
    %108 = vector.broadcast %cst_88 : f32 to vector<256x8xf32>
    %109 = arith.mulf %108, %105 : vector<256x8xf32>
    %110 = arith.select %107, %105, %109 : vector<256x8xi1>, vector<256x8xf32>
    %111 = vector.shape_cast %110 : vector<256x8xf32> to vector<16x16x8xf32>
    %c0_89 = arith.constant 0 : index
    %c0_90 = arith.constant 0 : index
    %c0_91 = arith.constant 0 : index
    %c0_92 = arith.constant 0 : index
    %c8_93 = arith.constant 8 : index
    %112 = vector.load %arg3[%c0_89, %c0_90, %c0_91, %c0_92, %c8_93] : memref<1x16x2x16x16xf32, #tpu.memory_space<vmem>>, vector<1x16x1x16x8xf32>
    %113 = vector.shape_cast %112 : vector<1x16x1x16x8xf32> to vector<16x16x8xf32>
    %114 = vector.shape_cast %111 : vector<16x16x8xf32> to vector<1x16x1x16x8xf32>
    tpu.vector_store %arg3[%c0_89, %c0_90, %c0_91, %c0_92, %c8_93], %114 {strides = array<i32>} : memref<1x16x2x16x16xf32, #tpu.memory_space<vmem>>, vector<1x16x1x16x8xf32>,
    %c2_94 = arith.constant 2 : index
    %c0_95 = arith.constant 0 : index
    %c0_96 = arith.constant 0 : index
    %115 = vector.load %arg5[%c2_94, %c0_95, %c0_96] : memref<4x256x8xf32, #tpu.memory_space<vmem>>, vector<1x256x8xf32>
    %116 = vector.shape_cast %115 : vector<1x256x8xf32> to vector<256x8xf32>
    %117 = vector.broadcast %75 : vector<1x8xf32> to vector<256x8xf32>
    %118 = arith.subf %116, %117 : vector<256x8xf32>
    %119 = vector.broadcast %84 : vector<1x8xf32> to vector<256x8xf32>
    %120 = arith.mulf %118, %119 : vector<256x8xf32>
    %cst_97 = arith.constant 0.000000e+00 : f32
    %121 = vector.broadcast %cst_97 : f32 to vector<256x8xf32>
    %122 = arith.cmpf oge, %120, %121 : vector<256x8xf32>
    %cst_98 = arith.constant 2.000000e-01 : f32
    %123 = vector.broadcast %cst_98 : f32 to vector<256x8xf32>
    %124 = arith.mulf %123, %120 : vector<256x8xf32>
    %125 = arith.select %122, %120, %124 : vector<256x8xi1>, vector<256x8xf32>
    %126 = vector.shape_cast %125 : vector<256x8xf32> to vector<16x16x8xf32>
    %c0_99 = arith.constant 0 : index
    %c0_100 = arith.constant 0 : index
    %c1_101 = arith.constant 1 : index
    %c0_102 = arith.constant 0 : index
    %c0_103 = arith.constant 0 : index
    %127 = vector.load %arg3[%c0_99, %c0_100, %c1_101, %c0_102, %c0_103] : memref<1x16x2x16x16xf32, #tpu.memory_space<vmem>>, vector<1x16x1x16x8xf32>
    %128 = vector.shape_cast %127 : vector<1x16x1x16x8xf32> to vector<16x16x8xf32>
    %129 = vector.shape_cast %126 : vector<16x16x8xf32> to vector<1x16x1x16x8xf32>
    tpu.vector_store %arg3[%c0_99, %c0_100, %c1_101, %c0_102, %c0_103], %129 {strides = array<i32>} : memref<1x16x2x16x16xf32, #tpu.memory_space<vmem>>, vector<1x16x1x16x8xf32>,
    %c3_104 = arith.constant 3 : index
    %c0_105 = arith.constant 0 : index
    %c0_106 = arith.constant 0 : index
    %130 = vector.load %arg5[%c3_104, %c0_105, %c0_106] : memref<4x256x8xf32, #tpu.memory_space<vmem>>, vector<1x256x8xf32>
    %131 = vector.shape_cast %130 : vector<1x256x8xf32> to vector<256x8xf32>
    %132 = vector.broadcast %75 : vector<1x8xf32> to vector<256x8xf32>
    %133 = arith.subf %131, %132 : vector<256x8xf32>
    %134 = vector.broadcast %84 : vector<1x8xf32> to vector<256x8xf32>
    %135 = arith.mulf %133, %134 : vector<256x8xf32>
    %cst_107 = arith.constant 0.000000e+00 : f32
    %136 = vector.broadcast %cst_107 : f32 to vector<256x8xf32>
    %137 = arith.cmpf oge, %135, %136 : vector<256x8xf32>
    %cst_108 = arith.constant 2.000000e-01 : f32
    %138 = vector.broadcast %cst_108 : f32 to vector<256x8xf32>
    %139 = arith.mulf %138, %135 : vector<256x8xf32>
    %140 = arith.select %137, %135, %139 : vector<256x8xi1>, vector<256x8xf32>
    %141 = vector.shape_cast %140 : vector<256x8xf32> to vector<16x16x8xf32>
    %c0_109 = arith.constant 0 : index
    %c0_110 = arith.constant 0 : index
    %c1_111 = arith.constant 1 : index
    %c0_112 = arith.constant 0 : index
    %c8_113 = arith.constant 8 : index
    %142 = vector.load %arg3[%c0_109, %c0_110, %c1_111, %c0_112, %c8_113] : memref<1x16x2x16x16xf32, #tpu.memory_space<vmem>>, vector<1x16x1x16x8xf32>
    %143 = vector.shape_cast %142 : vector<1x16x1x16x8xf32> to vector<16x16x8xf32>
    %144 = vector.shape_cast %141 : vector<16x16x8xf32> to vector<1x16x1x16x8xf32>
    tpu.vector_store %arg3[%c0_109, %c0_110, %c1_111, %c0_112, %c8_113], %144 {strides = array<i32>} : memref<1x16x2x16x16xf32, #tpu.memory_space<vmem>>, vector<1x16x1x16x8xf32>,
    return
  }
  func.func @transform_0(%arg0: i32) -> (i32, i32, i32, i32) {
    %c0_i32 = arith.constant 0 : i32
    %c0_i32_0 = arith.constant 0 : i32
    %c0_i32_1 = arith.constant 0 : i32
    %c0_i32_2 = arith.constant 0 : i32
    return %arg0, %c0_i32, %c0_i32_0, %c0_i32_1 : i32, i32, i32, i32
  }
  func.func @transform_1(%arg0: i32) -> (i32, i32, i32) {
    %c0_i32 = arith.constant 0 : i32
    %c0_i32_0 = arith.constant 0 : i32
    %c0_i32_1 = arith.constant 0 : i32
    %c0_i32_2 = arith.constant 0 : i32
    return %c0_i32, %c0_i32_0, %c0_i32_1 : i32, i32, i32
  }
  func.func @transform_2(%arg0: i32) -> (i32, i32, i32, i32, i32) {
    %c0_i32 = arith.constant 0 : i32
    %c0_i32_0 = arith.constant 0 : i32
    %c0_i32_1 = arith.constant 0 : i32
    %c0_i32_2 = arith.constant 0 : i32
    %c0_i32_3 = arith.constant 0 : i32
    return %arg0, %c0_i32, %c0_i32_0, %c0_i32_1, %c0_i32_2 : i32, i32, i32, i32, i32
  }
}

</mosaic_0001>

<llo_original>
// kernel: tpu_custom_call.1
$region0: #{tpu_custom_call.1}
  #allocation0 [shape = 'u32[]', space=smem, size = 0x4, offset = 0x4, fixed_abs, tag = 'smem constant byte address 0x4 - core index']
  #allocation1 [shape = 'u32[72,128]{1,0:T(1,128)}', space=vmem, size = 0x9000, scoped, tag = 'internal scratch']
  #allocation2 [shape = 'f32[17,17,16]{2,1,0:T(8,128)}', space=vmem, size = 0x33000, scoped, tag = 'scratch operand']
  #allocation3 [shape = 'f32[4,256,8]{2,1,0:T(8,128)}', space=vmem, size = 0x80000, scoped, tag = 'scratch operand']
  %s0 = inlined_call_operand.vmem [shape: f32[2,18,18,4], index: 0, kind: input, shape index: {}]
  %s1 = inlined_call_operand.vmem [shape: f32[4,16,8], index: 1, kind: input, shape index: {}]
  %s2 = inlined_call_operand.hbm [shape: f32[2,16,2,16,16], index: 2, kind: output, shape index: {}]
  %s3 = sld [smem:[#allocation0]]
  $region41: #{tpu_custom_call.1} parent=0
    _
  %s5 = ssub.s32 1, %s3
  %s6 = scalar_select 0, %s5, %s3
  $region1: #{tpu_custom_call.1} parent=0
    #allocation4 [shape = 'u8[524288]{0}', space=vmem, size = 0x80000, scoped, tag = 'output window, operand 0']
    #allocation5 [shape = 's32[2]{0}', space=sflag, size = 0x8, scoped, tag = 'scoped memory for tpu_custom_call.1']
    %7 = vsyncpa [#allocation5], 0
    %s8 = scalar_lea.sflag [#allocation5], 1
    %9 = vsyncpa %s8, 0
    loop: start=0, step=1, limit=4
    $region2: #{tpu_custom_call.1} parent=1 // loop_pre_header
      _
    $region3: #{tpu_custom_call.1} parent=1 // loop_header
      %s11 = sphi 0, %s15
      %p12 = scmp.ge.s32.totalorder %s11, 4
      %s21 = sphi 0, %s23
      %s24 = sphi 0, %s21
      %s25 = sphi 0, %s24
      %s41 = sphi 0, %s25
      %s45 = sphi 0, %s45
      %s47 = sphi 0, %s45
      %s48 = sphi 0, %s47
      %s62 = sphi 0, %s48
      %s68 = sphi 0, %s70
      %s71 = sphi 0, %s68
      %s72 = sphi 0, %s71
      %s88 = sphi 0, %s72
    $region4: #{tpu_custom_call.1} parent=1 // loop_header_branch
      %14 = sbr.rel (%p12) target = $region8
    $region5: #{tpu_custom_call.1} parent=1 // loop_body
      %s16 = ssub.s32 %s11, 1
      %s17 = ssub.s32 %s11, 2
      %s18 = sadd.s32 %s11, 1
      %s19 = ssub.s32 %s11, %s18
      %p20 = scmp.eq.s32.totalorder %s19, 0
      %s22 = sadd.s32 %s21, 1
      %s23 = scalar_select %p20, %s21, %s22
      %p26 = pneg %p20
      %p27 = scmp.eq.s32.totalorder %s11, 1
      %p28 = por %p26, %p27
      %p29 = scmp.ne.s32.totalorder %s21, %s24
      %p30 = scmp.eq.s32.totalorder %s11, 0
      %p31 = por %p29, %p30
      %p32 = scmp.ne.s32.totalorder %s21, %s24
      %p33 = scmp.eq.s32.totalorder %s16, 1
      %p34 = por %p32, %p33
      %p35 = scmp.ne.s32.totalorder %s24, %s25
      %p36 = scmp.eq.s32.totalorder %s16, 0
      %p37 = por %p35, %p36
      %p38 = scmp.ne.s32.totalorder %s24, %s25
      %p39 = scmp.eq.s32.totalorder %s17, 1
      %p40 = por %p38, %p39
      %p42 = scmp.ne.s32.totalorder %s25, %s41
      %p43 = scmp.eq.s32.totalorder %s17, 0
      %p44 = por %p42, %p43
      %s46 = sadd.s32 %s45, 1
      %p49 = scmp.eq.s32.totalorder %s11, 1
      %p50 = scmp.ne.s32.totalorder %s45, %s47
      %p51 = scmp.eq.s32.totalorder %s11, 0
      %p52 = por %p50, %p51
      %p53 = scmp.ne.s32.totalorder %s45, %s47
      %p54 = scmp.eq.s32.totalorder %s16, 1
      %p55 = por %p53, %p54
      %p56 = scmp.ne.s32.totalorder %s47, %s48
      %p57 = scmp.eq.s32.totalorder %s16, 0
      %p58 = por %p56, %p57
      %p59 = scmp.ne.s32.totalorder %s47, %s48
      %p60 = scmp.eq.s32.totalorder %s17, 1
      %p61 = por %p59, %p60
      %p63 = scmp.ne.s32.totalorder %s48, %s62
      %p64 = scmp.eq.s32.totalorder %s17, 0
      %p65 = por %p63, %p64
      %s66 = ssub.s32 %s11, %s18
      %p67 = scmp.eq.s32.totalorder %s66, 0
      %s69 = sadd.s32 %s68, 1
      %s70 = scalar_select %p67, %s68, %s69
      %p73 = pneg %p67
      %p74 = scmp.eq.s32.totalorder %s11, 1
      %p75 = por %p73, %p74
      %p76 = scmp.ne.s32.totalorder %s68, %s71
      %p77 = scmp.eq.s32.totalorder %s11, 0
      %p78 = por %p76, %p77
      %p79 = scmp.ne.s32.totalorder %s68, %s71
      %p80 = scmp.eq.s32.totalorder %s16, 1
      %p81 = por %p79, %p80
      %p82 = scmp.ne.s32.totalorder %s71, %s72
      %p83 = scmp.eq.s32.totalorder %s16, 0
      %p84 = por %p82, %p83
      %p85 = scmp.ne.s32.totalorder %s71, %s72
      %p86 = scmp.eq.s32.totalorder %s17, 1
      %p87 = por %p85, %p86
      %p89 = scmp.ne.s32.totalorder %s72, %s88
      %p90 = scmp.eq.s32.totalorder %s17, 0
      %p91 = por %p89, %p90
      %p92 = scmp.le.s32.totalorder 1, %s11
      %p93 = scmp.lt.s32.totalorder %s11, 3
      %p94 = pnand %p92, %p93
      %p95 = pneg %p94
      // Predicated region
      $region9: #{tpu_custom_call.1} parent=5 // pred_check
        _
      $region10: #{tpu_custom_call.1} parent=5 // pred_check_branch
        %97 = sbr.rel (%p94) target = $region12
      $region11: #{tpu_custom_call.1} parent=5 // pred_region
        %s98 = ssub.s32 %s11, 1
        // Predicated region
        $region13: #{tpu_custom_call.1} parent=11 // pred_check
          %p99 = pneg %p58
        $region14: #{tpu_custom_call.1} parent=11 // pred_check_branch
          %101 = sbr.rel (%p99) target = $region16
        $region15: #{tpu_custom_call.1} parent=11 // pred_region
          _
        $region16: #{tpu_custom_call.1} parent=11 // pred_fallthru
          _
      $region12: #{tpu_custom_call.1} parent=5 // pred_fallthru
        _
      %p102 = scmp.lt.s32.totalorder %s11, 2
      // Predicated region
      $region17: #{tpu_custom_call.1} parent=5 // pred_check
        %p103 = pneg %p102
      $region18: #{tpu_custom_call.1} parent=5 // pred_check_branch
        %105 = sbr.rel (%p103) target = $region20
      $region19: #{tpu_custom_call.1} parent=5 // pred_region
        // Predicated region
        $region21: #{tpu_custom_call.1} parent=19 // pred_check
          %p106 = pneg %p31
        $region22: #{tpu_custom_call.1} parent=19 // pred_check_branch
          %108 = sbr.rel (%p106) target = $region24
        $region23: #{tpu_custom_call.1} parent=19 // pred_region
          %p109 = scmp.lt.s32.totalorder %s11, 1
          %s110 = scalar_select %p109, %s11, 1
          %s111 = smul.addr %s110, 54
          %s112 = smul.addr %s111, 8
          %s113 = scalar_lea.vmem %s0, %s112
        $region24: #{tpu_custom_call.1} parent=19 // pred_fallthru
          _
      $region20: #{tpu_custom_call.1} parent=5 // pred_fallthru
        _
      %p114 = scmp.le.s32.totalorder 1, %s11
      %p115 = scmp.lt.s32.totalorder %s11, 3
      %p116 = pnand %p114, %p115
      %p117 = pneg %p116
      // Predicated region
      $region25: #{tpu_custom_call.1} parent=5 // pred_check
        _
      $region26: #{tpu_custom_call.1} parent=5 // pred_check_branch
        %119 = sbr.rel (%p116) target = $region28
      $region27: #{tpu_custom_call.1} parent=5 // pred_region
        %s120 = ssub.s32 %s11, 1
        %p121 = scmp.lt.s32.totalorder %s16, 1
        %s122 = scalar_select %p121, %s16, 1
        %s123 = smul.addr %s122, 54
        %s124 = smul.addr %s123, 8
        %s125 = scalar_lea.vmem %s0, %s124
        %p126 = pneg %p37
        %p127 = pneg %p34
        %p128 = pneg %p58
        %p129 = pneg %p55
        %p130 = pneg %p84
        %p131 = pneg %p81
        %s132 = sand.u32 %s71, 1
        %s133 = scalar_lea.sflag [#allocation5], %s132
        %s134 = sand.u32 %s71, 1
        %s135 = smul.addr %s134, 512
        %s136 = scalar_lea.vmem [#allocation4], %s135
        %p137 = scmp.lt.s32.totalorder %s16, 1
        %s138 = scalar_select %p137, %s16, 1
        %s139 = smul.addr %s138, 54
        %s140 = smul.addr %s139, 8
        %s141 = scalar_lea.vmem %s0, %s140
        %v142 = vld [vmem:[%s141] sm:$0xff]
        %v143 = vld [vmem:[%s141 + $0x8] sm:$0xff]
        %v144 = vld [vmem:[%s141 + $0x10] sm:$0x1]
        %v145 = vld [vmem:[%s141 + $0x18] sm:$0xff]
        %v146 = vld [vmem:[%s141 + $0x20] sm:$0xff]
        %v147 = vld [vmem:[%s141 + $0x28] sm:$0x1]
        %v148 = vld [vmem:[%s141 + $0x30] sm:$0xff]
        %v149 = vld [vmem:[%s141 + $0x38] sm:$0xff]
        %v150 = vld [vmem:[%s141 + $0x40] sm:$0x1]
        %v151 = vld [vmem:[%s141 + $0x48] sm:$0xff]
        %v152 = vld [vmem:[%s141 + $0x50] sm:$0xff]
        %v153 = vld [vmem:[%s141 + $0x58] sm:$0x1]
        %v154 = vld [vmem:[%s141 + $0x60] sm:$0xff]
        %v155 = vld [vmem:[%s141 + $0x68] sm:$0xff]
        %v156 = vld [vmem:[%s141 + $0x70] sm:$0x1]
        %v157 = vld [vmem:[%s141 + $0x78] sm:$0xff]
        %v158 = vld [vmem:[%s141 + $0x80] sm:$0xff]
        %v159 = vld [vmem:[%s141 + $0x88] sm:$0x1]
        %v160 = vld [vmem:[%s141 + $0x90] sm:$0xff]
        %v161 = vld [vmem:[%s141 + $0x98] sm:$0xff]
        %v162 = vld [vmem:[%s141 + $0xa0] sm:$0x1]
        %v163 = vld [vmem:[%s141 + $0xa8] sm:$0xff]
        %v164 = vld [vmem:[%s141 + $0xb0] sm:$0xff]
        %v165 = vld [vmem:[%s141 + $0xb8] sm:$0x1]
        %v166 = vld [vmem:[%s141 + $0xc0] sm:$0xff]
        %v167 = vld [vmem:[%s141 + $0xc8] sm:$0xff]
        %v168 = vld [vmem:[%s141 + $0xd0] sm:$0x1]
        %v169 = vld [vmem:[%s141 + $0xd8] sm:$0xff]
        %v170 = vld [vmem:[%s141 + $0xe0] sm:$0xff]
        %v171 = vld [vmem:[%s141 + $0xe8] sm:$0x1]
        %v172 = vld [vmem:[%s141 + $0xf0] sm:$0xff]
        %v173 = vld [vmem:[%s141 + $0xf8] sm:$0xff]
        %v174 = vld [vmem:[%s141 + $0x100] sm:$0x1]
        %v175 = vld [vmem:[%s141 + $0x108] sm:$0xff]
        %v176 = vld [vmem:[%s141 + $0x110] sm:$0xff]
        %v177 = vld [vmem:[%s141 + $0x118] sm:$0x1]
        %v178 = vld [vmem:[%s141 + $0x120] sm:$0xff]
        %v179 = vld [vmem:[%s141 + $0x128] sm:$0xff]
        %v180 = vld [vmem:[%s141 + $0x130] sm:$0x1]
        %v181 = vld [vmem:[%s141 + $0x138] sm:$0xff]
        %v182 = vld [vmem:[%s141 + $0x140] sm:$0xff]
        %v183 = vld [vmem:[%s141 + $0x148] sm:$0x1]
        %v184 = vld [vmem:[%s141 + $0x150] sm:$0xff]
        %v185 = vld [vmem:[%s141 + $0x158] sm:$0xff]
        %v186 = vld [vmem:[%s141 + $0x160] sm:$0x1]
        %v187 = vld [vmem:[%s141 + $0x168] sm:$0xff]
        %v188 = vld [vmem:[%s141 + $0x170] sm:$0xff]
        %v189 = vld [vmem:[%s141 + $0x178] sm:$0x1]
        %v190 = vld [vmem:[%s141 + $0x180] sm:$0xff]
        %v191 = vld [vmem:[%s141 + $0x188] sm:$0xff]
        %v192 = vld [vmem:[%s141 + $0x190] sm:$0x1]
        %vm193 = vcmask 31744
        %194 = vst.msk [vmem:[#allocation2] sm:$0xff] %vm193, %v142
        %195 = vst.msk [vmem:[#allocation2 + $0x8] sm:$0xff] %vm193, %v143
        %vm196 = vcmask 24576
        %197 = vst.msk [vmem:[#allocation2 + $0x10] sm:$0x1] %vm196, %v144
        %198 = vst.msk [vmem:[#allocation2 + $0x18] sm:$0xff] %vm193, %v145
        %199 = vst.msk [vmem:[#allocation2 + $0x20] sm:$0xff] %vm193, %v146
        %200 = vst.msk [vmem:[#allocation2 + $0x28] sm:$0x1] %vm196, %v147
        %201 = vst.msk [vmem:[#allocation2 + $0x30] sm:$0xff] %vm193, %v148
        %202 = vst.msk [vmem:[#allocation2 + $0x38] sm:$0xff] %vm193, %v149
        %203 = vst.msk [vmem:[#allocation2 + $0x40] sm:$0x1] %vm196, %v150
        %204 = vst.msk [vmem:[#allocation2 + $0x48] sm:$0xff] %vm193, %v151
        %205 = vst.msk [vmem:[#allocation2 + $0x50] sm:$0xff] %vm193, %v152
        %206 = vst.msk [vmem:[#allocation2 + $0x58] sm:$0x1] %vm196, %v153
        %207 = vst.msk [vmem:[#allocation2 + $0x60] sm:$0xff] %vm193, %v154
        %208 = vst.msk [vmem:[#allocation2 + $0x68] sm:$0xff] %vm193, %v155
        %209 = vst.msk [vmem:[#allocation2 + $0x70] sm:$0x1] %vm196, %v156
        %210 = vst.msk [vmem:[#allocation2 + $0x78] sm:$0xff] %vm193, %v157
        %211 = vst.msk [vmem:[#allocation2 + $0x80] sm:$0xff] %vm193, %v158
        %212 = vst.msk [vmem:[#allocation2 + $0x88] sm:$0x1] %vm196, %v159
        %213 = vst.msk [vmem:[#allocation2 + $0x90] sm:$0xff] %vm193, %v160
        %214 = vst.msk [vmem:[#allocation2 + $0x98] sm:$0xff] %vm193, %v161
        %215 = vst.msk [vmem:[#allocation2 + $0xa0] sm:$0x1] %vm196, %v162
        %216 = vst.msk [vmem:[#allocation2 + $0xa8] sm:$0xff] %vm193, %v163
        %217 = vst.msk [vmem:[#allocation2 + $0xb0] sm:$0xff] %vm193, %v164
        %218 = vst.msk [vmem:[#allocation2 + $0xb8] sm:$0x1] %vm196, %v165
        %219 = vst.msk [vmem:[#allocation2 + $0xc0] sm:$0xff] %vm193, %v166
        %220 = vst.msk [vmem:[#allocation2 + $0xc8] sm:$0xff] %vm193, %v167
        %221 = vst.msk [vmem:[#allocation2 + $0xd0] sm:$0x1] %vm196, %v168
        %222 = vst.msk [vmem:[#allocation2 + $0xd8] sm:$0xff] %vm193, %v169
        %223 = vst.msk [vmem:[#allocation2 + $0xe0] sm:$0xff] %vm193, %v170
        %224 = vst.msk [vmem:[#allocation2 + $0xe8] sm:$0x1] %vm196, %v171
        %225 = vst.msk [vmem:[#allocation2 + $0xf0] sm:$0xff] %vm193, %v172
        %226 = vst.msk [vmem:[#allocation2 + $0xf8] sm:$0xff] %vm193, %v173
        %227 = vst.msk [vmem:[#allocation2 + $0x100] sm:$0x1] %vm196, %v174
        %228 = vst.msk [vmem:[#allocation2 + $0x108] sm:$0xff] %vm193, %v175
        %229 = vst.msk [vmem:[#allocation2 + $0x110] sm:$0xff] %vm193, %v176
        %230 = vst.msk [vmem:[#allocation2 + $0x118] sm:$0x1] %vm196, %v177
        %231 = vst.msk [vmem:[#allocation2 + $0x120] sm:$0xff] %vm193, %v178
        %232 = vst.msk [vmem:[#allocation2 + $0x128] sm:$0xff] %vm193, %v179
        %233 = vst.msk [vmem:[#allocation2 + $0x130] sm:$0x1] %vm196, %v180
        %234 = vst.msk [vmem:[#allocation2 + $0x138] sm:$0xff] %vm193, %v181
        %235 = vst.msk [vmem:[#allocation2 + $0x140] sm:$0xff] %vm193, %v182
        %236 = vst.msk [vmem:[#allocation2 + $0x148] sm:$0x1] %vm196, %v183
        %237 = vst.msk [vmem:[#allocation2 + $0x150] sm:$0xff] %vm193, %v184
        %238 = vst.msk [vmem:[#allocation2 + $0x158] sm:$0xff] %vm193, %v185
        %239 = vst.msk [vmem:[#allocation2 + $0x160] sm:$0x1] %vm196, %v186
        %240 = vst.msk [vmem:[#allocation2 + $0x168] sm:$0xff] %vm193, %v187
        %241 = vst.msk [vmem:[#allocation2 + $0x170] sm:$0xff] %vm193, %v188
        %242 = vst.msk [vmem:[#allocation2 + $0x178] sm:$0x1] %vm196, %v189
        %243 = vst.msk [vmem:[#allocation2 + $0x180] sm:$0xff] %vm193, %v190
        %244 = vst.msk [vmem:[#allocation2 + $0x188] sm:$0xff] %vm193, %v191
        %245 = vst.msk [vmem:[#allocation2 + $0x190] sm:$0x1] %vm196, %v192
        %v246 = vld [vmem:[%s141 + $0x1] sm:$0xff]
        %v247 = vld [vmem:[%s141 + $0x9] sm:$0xff]
        %v248 = vld [vmem:[%s141 + $0x11] sm:$0x1]
        %v249 = vld [vmem:[%s141 + $0x19] sm:$0xff]
        %v250 = vld [vmem:[%s141 + $0x21] sm:$0xff]
        %v251 = vld [vmem:[%s141 + $0x29] sm:$0x1]
        %v252 = vld [vmem:[%s141 + $0x31] sm:$0xff]
        %v253 = vld [vmem:[%s141 + $0x39] sm:$0xff]
        %v254 = vld [vmem:[%s141 + $0x41] sm:$0x1]
        %v255 = vld [vmem:[%s141 + $0x49] sm:$0xff]
        %v256 = vld [vmem:[%s141 + $0x51] sm:$0xff]
        %v257 = vld [vmem:[%s141 + $0x59] sm:$0x1]
        %v258 = vld [vmem:[%s141 + $0x61] sm:$0xff]
        %v259 = vld [vmem:[%s141 + $0x69] sm:$0xff]
        %v260 = vld [vmem:[%s141 + $0x71] sm:$0x1]
        %v261 = vld [vmem:[%s141 + $0x79] sm:$0xff]
        %v262 = vld [vmem:[%s141 + $0x81] sm:$0xff]
        %v263 = vld [vmem:[%s141 + $0x89] sm:$0x1]
        %v264 = vld [vmem:[%s141 + $0x91] sm:$0xff]
        %v265 = vld [vmem:[%s141 + $0x99] sm:$0xff]
        %v266 = vld [vmem:[%s141 + $0xa1] sm:$0x1]
        %v267 = vld [vmem:[%s141 + $0xa9] sm:$0xff]
        %v268 = vld [vmem:[%s141 + $0xb1] sm:$0xff]
        %v269 = vld [vmem:[%s141 + $0xb9] sm:$0x1]
        %v270 = vld [vmem:[%s141 + $0xc1] sm:$0xff]
        %v271 = vld [vmem:[%s141 + $0xc9] sm:$0xff]
        %v272 = vld [vmem:[%s141 + $0xd1] sm:$0x1]
        %v273 = vld [vmem:[%s141 + $0xd9] sm:$0xff]
        %v274 = vld [vmem:[%s141 + $0xe1] sm:$0xff]
        %v275 = vld [vmem:[%s141 + $0xe9] sm:$0x1]
        %v276 = vld [vmem:[%s141 + $0xf1] sm:$0xff]
        %v277 = vld [vmem:[%s141 + $0xf9] sm:$0xff]
        %v278 = vld [vmem:[%s141 + $0x101] sm:$0x1]
        %v279 = vld [vmem:[%s141 + $0x109] sm:$0xff]
        %v280 = vld [vmem:[%s141 + $0x111] sm:$0xff]
        %v281 = vld [vmem:[%s141 + $0x119] sm:$0x1]
        %v282 = vld [vmem:[%s141 + $0x121] sm:$0xff]
        %v283 = vld [vmem:[%s141 + $0x129] sm:$0xff]
        %v284 = vld [vmem:[%s141 + $0x131] sm:$0x1]
        %v285 = vld [vmem:[%s141 + $0x139] sm:$0xff]
        %v286 = vld [vmem:[%s141 + $0x141] sm:$0xff]
        %v287 = vld [vmem:[%s141 + $0x149] sm:$0x1]
        %v288 = vld [vmem:[%s141 + $0x151] sm:$0xff]
        %v289 = vld [vmem:[%s141 + $0x159] sm:$0xff]
        %v290 = vld [vmem:[%s141 + $0x161] sm:$0x1]
        %v291 = vld [vmem:[%s141 + $0x169] sm:$0xff]
        %v292 = vld [vmem:[%s141 + $0x171] sm:$0xff]
        %v293 = vld [vmem:[%s141 + $0x179] sm:$0x1]
        %v294 = vld [vmem:[%s141 + $0x181] sm:$0xff]
        %v295 = vld [vmem:[%s141 + $0x189] sm:$0xff]
        %v296 = vld [vmem:[%s141 + $0x191] sm:$0x1]
        %348 = vrot.lane.b32.xlu0 %v246, 4
        %v349 = vpop.permute.xlu0 %348
        %350 = vrot.lane.b32.xlu0 %v247, 4
        %v351 = vpop.permute.xlu0 %350
        %352 = vrot.lane.b32.xlu0 %v248, 4
        %v353 = vpop.permute.xlu0 %352
        %354 = vrot.lane.b32.xlu0 %v249, 4
        %v355 = vpop.permute.xlu0 %354
        %356 = vrot.lane.b32.xlu0 %v250, 4
        %v357 = vpop.permute.xlu0 %356
        %358 = vrot.lane.b32.xlu0 %v251, 4
        %v359 = vpop.permute.xlu0 %358
        %360 = vrot.lane.b32.xlu0 %v252, 4
        %v361 = vpop.permute.xlu0 %360
        %362 = vrot.lane.b32.xlu0 %v253, 4
        %v363 = vpop.permute.xlu0 %362
        %364 = vrot.lane.b32.xlu0 %v254, 4
        %v365 = vpop.permute.xlu0 %364
        %366 = vrot.lane.b32.xlu0 %v255, 4
        %v367 = vpop.permute.xlu0 %366
        %368 = vrot.lane.b32.xlu0 %v256, 4
        %v369 = vpop.permute.xlu0 %368
        %370 = vrot.lane.b32.xlu0 %v257, 4
        %v371 = vpop.permute.xlu0 %370
        %372 = vrot.lane.b32.xlu0 %v258, 4
        %v373 = vpop.permute.xlu0 %372
        %374 = vrot.lane.b32.xlu0 %v259, 4
        %v375 = vpop.permute.xlu0 %374
        %376 = vrot.lane.b32.xlu0 %v260, 4
        %v377 = vpop.permute.xlu0 %376
        %378 = vrot.lane.b32.xlu0 %v261, 4
        %v379 = vpop.permute.xlu0 %378
        %380 = vrot.lane.b32.xlu0 %v262, 4
        %v381 = vpop.permute.xlu0 %380
        %382 = vrot.lane.b32.xlu0 %v263, 4
        %v383 = vpop.permute.xlu0 %382
        %384 = vrot.lane.b32.xlu0 %v264, 4
        %v385 = vpop.permute.xlu0 %384
        %386 = vrot.lane.b32.xlu0 %v265, 4
        %v387 = vpop.permute.xlu0 %386
        %388 = vrot.lane.b32.xlu0 %v266, 4
        %v389 = vpop.permute.xlu0 %388
        %390 = vrot.lane.b32.xlu0 %v267, 4
        %v391 = vpop.permute.xlu0 %390
        %392 = vrot.lane.b32.xlu0 %v268, 4
        %v393 = vpop.permute.xlu0 %392
        %394 = vrot.lane.b32.xlu0 %v269, 4
        %v395 = vpop.permute.xlu0 %394
        %396 = vrot.lane.b32.xlu0 %v270, 4
        %v397 = vpop.permute.xlu0 %396
        %398 = vrot.lane.b32.xlu0 %v271, 4
        %v399 = vpop.permute.xlu0 %398
        %400 = vrot.lane.b32.xlu0 %v272, 4
        %v401 = vpop.permute.xlu0 %400
        %402 = vrot.lane.b32.xlu0 %v273, 4
        %v403 = vpop.permute.xlu0 %402
        %404 = vrot.lane.b32.xlu0 %v274, 4
        %v405 = vpop.permute.xlu0 %404
        %406 = vrot.lane.b32.xlu0 %v275, 4
        %v407 = vpop.permute.xlu0 %406
        %408 = vrot.lane.b32.xlu0 %v276, 4
        %v409 = vpop.permute.xlu0 %408
        %410 = vrot.lane.b32.xlu0 %v277, 4
        %v411 = vpop.permute.xlu0 %410
        %412 = vrot.lane.b32.xlu0 %v278, 4
        %v413 = vpop.permute.xlu0 %412
        %414 = vrot.lane.b32.xlu0 %v279, 4
        %v415 = vpop.permute.xlu0 %414
        %416 = vrot.lane.b32.xlu0 %v280, 4
        %v417 = vpop.permute.xlu0 %416
        %418 = vrot.lane.b32.xlu0 %v281, 4
        %v419 = vpop.permute.xlu0 %418
        %420 = vrot.lane.b32.xlu0 %v282, 4
        %v421 = vpop.permute.xlu0 %420
        %422 = vrot.lane.b32.xlu0 %v283, 4
        %v423 = vpop.permute.xlu0 %422
        %424 = vrot.lane.b32.xlu0 %v284, 4
        %v425 = vpop.permute.xlu0 %424
        %426 = vrot.lane.b32.xlu0 %v285, 4
        %v427 = vpop.permute.xlu0 %426
        %428 = vrot.lane.b32.xlu0 %v286, 4
        %v429 = vpop.permute.xlu0 %428
        %430 = vrot.lane.b32.xlu0 %v287, 4
        %v431 = vpop.permute.xlu0 %430
        %432 = vrot.lane.b32.xlu0 %v288, 4
        %v433 = vpop.permute.xlu0 %432
        %434 = vrot.lane.b32.xlu0 %v289, 4
        %v435 = vpop.permute.xlu0 %434
        %436 = vrot.lane.b32.xlu0 %v290, 4
        %v437 = vpop.permute.xlu0 %436
        %438 = vrot.lane.b32.xlu0 %v291, 4
        %v439 = vpop.permute.xlu0 %438
        %440 = vrot.lane.b32.xlu0 %v292, 4
        %v441 = vpop.permute.xlu0 %440
        %442 = vrot.lane.b32.xlu0 %v293, 4
        %v443 = vpop.permute.xlu0 %442
        %444 = vrot.lane.b32.xlu0 %v294, 4
        %v445 = vpop.permute.xlu0 %444
        %446 = vrot.lane.b32.xlu0 %v295, 4
        %v447 = vpop.permute.xlu0 %446
        %448 = vrot.lane.b32.xlu0 %v296, 4
        %v449 = vpop.permute.xlu0 %448
        %vm501 = vcmask 64544
        %502 = vst.msk [vmem:[#allocation2] sm:$0xff] %vm501, %v349
        %503 = vst.msk [vmem:[#allocation2 + $0x8] sm:$0xff] %vm501, %v351
        %vm504 = vcmask 57376
        %505 = vst.msk [vmem:[#allocation2 + $0x10] sm:$0x1] %vm504, %v353
        %506 = vst.msk [vmem:[#allocation2 + $0x18] sm:$0xff] %vm501, %v355
        %507 = vst.msk [vmem:[#allocation2 + $0x20] sm:$0xff] %vm501, %v357
        %508 = vst.msk [vmem:[#allocation2 + $0x28] sm:$0x1] %vm504, %v359
        %509 = vst.msk [vmem:[#allocation2 + $0x30] sm:$0xff] %vm501, %v361
        %510 = vst.msk [vmem:[#allocation2 + $0x38] sm:$0xff] %vm501, %v363
        %511 = vst.msk [vmem:[#allocation2 + $0x40] sm:$0x1] %vm504, %v365
        %512 = vst.msk [vmem:[#allocation2 + $0x48] sm:$0xff] %vm501, %v367
        %513 = vst.msk [vmem:[#allocation2 + $0x50] sm:$0xff] %vm501, %v369
        %514 = vst.msk [vmem:[#allocation2 + $0x58] sm:$0x1] %vm504, %v371
        %515 = vst.msk [vmem:[#allocation2 + $0x60] sm:$0xff] %vm501, %v373
        %516 = vst.msk [vmem:[#allocation2 + $0x68] sm:$0xff] %vm501, %v375
        %517 = vst.msk [vmem:[#allocation2 + $0x70] sm:$0x1] %vm504, %v377
        %518 = vst.msk [vmem:[#allocation2 + $0x78] sm:$0xff] %vm501, %v379
        %519 = vst.msk [vmem:[#allocation2 + $0x80] sm:$0xff] %vm501, %v381
        %520 = vst.msk [vmem:[#allocation2 + $0x88] sm:$0x1] %vm504, %v383
        %521 = vst.msk [vmem:[#allocation2 + $0x90] sm:$0xff] %vm501, %v385
        %522 = vst.msk [vmem:[#allocation2 + $0x98] sm:$0xff] %vm501, %v387
        %523 = vst.msk [vmem:[#allocation2 + $0xa0] sm:$0x1] %vm504, %v389
        %524 = vst.msk [vmem:[#allocation2 + $0xa8] sm:$0xff] %vm501, %v391
        %525 = vst.msk [vmem:[#allocation2 + $0xb0] sm:$0xff] %vm501, %v393
        %526 = vst.msk [vmem:[#allocation2 + $0xb8] sm:$0x1] %vm504, %v395
        %527 = vst.msk [vmem:[#allocation2 + $0xc0] sm:$0xff] %vm501, %v397
        %528 = vst.msk [vmem:[#allocation2 + $0xc8] sm:$0xff] %vm501, %v399
        %529 = vst.msk [vmem:[#allocation2 + $0xd0] sm:$0x1] %vm504, %v401
        %530 = vst.msk [vmem:[#allocation2 + $0xd8] sm:$0xff] %vm501, %v403
        %531 = vst.msk [vmem:[#allocation2 + $0xe0] sm:$0xff] %vm501, %v405
        %532 = vst.msk [vmem:[#allocation2 + $0xe8] sm:$0x1] %vm504, %v407
        %533 = vst.msk [vmem:[#allocation2 + $0xf0] sm:$0xff] %vm501, %v409
        %534 = vst.msk [vmem:[#allocation2 + $0xf8] sm:$0xff] %vm501, %v411
        %535 = vst.msk [vmem:[#allocation2 + $0x100] sm:$0x1] %vm504, %v413
        %536 = vst.msk [vmem:[#allocation2 + $0x108] sm:$0xff] %vm501, %v415
        %537 = vst.msk [vmem:[#allocation2 + $0x110] sm:$0xff] %vm501, %v417
        %538 = vst.msk [vmem:[#allocation2 + $0x118] sm:$0x1] %vm504, %v419
        %539 = vst.msk [vmem:[#allocation2 + $0x120] sm:$0xff] %vm501, %v421
        %540 = vst.msk [vmem:[#allocation2 + $0x128] sm:$0xff] %vm501, %v423
        %541 = vst.msk [vmem:[#allocation2 + $0x130] sm:$0x1] %vm504, %v425
        %542 = vst.msk [vmem:[#allocation2 + $0x138] sm:$0xff] %vm501, %v427
        %543 = vst.msk [vmem:[#allocation2 + $0x140] sm:$0xff] %vm501, %v429
        %544 = vst.msk [vmem:[#allocation2 + $0x148] sm:$0x1] %vm504, %v431
        %545 = vst.msk [vmem:[#allocation2 + $0x150] sm:$0xff] %vm501, %v433
        %546 = vst.msk [vmem:[#allocation2 + $0x158] sm:$0xff] %vm501, %v435
        %547 = vst.msk [vmem:[#allocation2 + $0x160] sm:$0x1] %vm504, %v437
        %548 = vst.msk [vmem:[#allocation2 + $0x168] sm:$0xff] %vm501, %v439
        %549 = vst.msk [vmem:[#allocation2 + $0x170] sm:$0xff] %vm501, %v441
        %550 = vst.msk [vmem:[#allocation2 + $0x178] sm:$0x1] %vm504, %v443
        %551 = vst.msk [vmem:[#allocation2 + $0x180] sm:$0xff] %vm501, %v445
        %552 = vst.msk [vmem:[#allocation2 + $0x188] sm:$0xff] %vm501, %v447
        %553 = vst.msk [vmem:[#allocation2 + $0x190] sm:$0x1] %vm504, %v449
        %s554 = scalar_lea.vmem %s141, 24
        %v555 = vld [vmem:[%s554] sm:$0xff]
        %v556 = vld [vmem:[%s554 + $0x8] sm:$0xff]
        %v557 = vld [vmem:[%s554 + $0x10] sm:$0x1]
        %v558 = vld [vmem:[%s554 + $0x18] sm:$0xff]
        %v559 = vld [vmem:[%s554 + $0x20] sm:$0xff]
        %v560 = vld [vmem:[%s554 + $0x28] sm:$0x1]
        %v561 = vld [vmem:[%s554 + $0x30] sm:$0xff]
        %v562 = vld [vmem:[%s554 + $0x38] sm:$0xff]
        %v563 = vld [vmem:[%s554 + $0x40] sm:$0x1]
        %v564 = vld [vmem:[%s554 + $0x48] sm:$0xff]
        %v565 = vld [vmem:[%s554 + $0x50] sm:$0xff]
        %v566 = vld [vmem:[%s554 + $0x58] sm:$0x1]
        %v567 = vld [vmem:[%s554 + $0x60] sm:$0xff]
        %v568 = vld [vmem:[%s554 + $0x68] sm:$0xff]
        %v569 = vld [vmem:[%s554 + $0x70] sm:$0x1]
        %v570 = vld [vmem:[%s554 + $0x78] sm:$0xff]
        %v571 = vld [vmem:[%s554 + $0x80] sm:$0xff]
        %v572 = vld [vmem:[%s554 + $0x88] sm:$0x1]
        %v573 = vld [vmem:[%s554 + $0x90] sm:$0xff]
        %v574 = vld [vmem:[%s554 + $0x98] sm:$0xff]
        %v575 = vld [vmem:[%s554 + $0xa0] sm:$0x1]
        %v576 = vld [vmem:[%s554 + $0xa8] sm:$0xff]
        %v577 = vld [vmem:[%s554 + $0xb0] sm:$0xff]
        %v578 = vld [vmem:[%s554 + $0xb8] sm:$0x1]
        %v579 = vld [vmem:[%s554 + $0xc0] sm:$0xff]
        %v580 = vld [vmem:[%s554 + $0xc8] sm:$0xff]
        %v581 = vld [vmem:[%s554 + $0xd0] sm:$0x1]
        %v582 = vld [vmem:[%s554 + $0xd8] sm:$0xff]
        %v583 = vld [vmem:[%s554 + $0xe0] sm:$0xff]
        %v584 = vld [vmem:[%s554 + $0xe8] sm:$0x1]
        %v585 = vld [vmem:[%s554 + $0xf0] sm:$0xff]
        %v586 = vld [vmem:[%s554 + $0xf8] sm:$0xff]
        %v587 = vld [vmem:[%s554 + $0x100] sm:$0x1]
        %v588 = vld [vmem:[%s554 + $0x108] sm:$0xff]
        %v589 = vld [vmem:[%s554 + $0x110] sm:$0xff]
        %v590 = vld [vmem:[%s554 + $0x118] sm:$0x1]
        %v591 = vld [vmem:[%s554 + $0x120] sm:$0xff]
        %v592 = vld [vmem:[%s554 + $0x128] sm:$0xff]
        %v593 = vld [vmem:[%s554 + $0x130] sm:$0x1]
        %v594 = vld [vmem:[%s554 + $0x138] sm:$0xff]
        %v595 = vld [vmem:[%s554 + $0x140] sm:$0xff]
        %v596 = vld [vmem:[%s554 + $0x148] sm:$0x1]
        %v597 = vld [vmem:[%s554 + $0x150] sm:$0xff]
        %v598 = vld [vmem:[%s554 + $0x158] sm:$0xff]
        %v599 = vld [vmem:[%s554 + $0x160] sm:$0x1]
        %v600 = vld [vmem:[%s554 + $0x168] sm:$0xff]
        %v601 = vld [vmem:[%s554 + $0x170] sm:$0xff]
        %v602 = vld [vmem:[%s554 + $0x178] sm:$0x1]
        %v603 = vld [vmem:[%s554 + $0x180] sm:$0xff]
        %v604 = vld [vmem:[%s554 + $0x188] sm:$0xff]
        %v605 = vld [vmem:[%s554 + $0x190] sm:$0x1]
        %657 = vrot.lane.b32.xlu0 %v555, 8
        %v658 = vpop.permute.xlu0 %657
        %659 = vrot.lane.b32.xlu0 %v556, 8
        %v660 = vpop.permute.xlu0 %659
        %661 = vrot.lane.b32.xlu0 %v557, 8
        %v662 = vpop.permute.xlu0 %661
        %663 = vrot.lane.b32.xlu0 %v558, 8
        %v664 = vpop.permute.xlu0 %663
        %665 = vrot.lane.b32.xlu0 %v559, 8
        %v666 = vpop.permute.xlu0 %665
        %667 = vrot.lane.b32.xlu0 %v560, 8
        %v668 = vpop.permute.xlu0 %667
        %669 = vrot.lane.b32.xlu0 %v561, 8
        %v670 = vpop.permute.xlu0 %669
        %671 = vrot.lane.b32.xlu0 %v562, 8
        %v672 = vpop.permute.xlu0 %671
        %673 = vrot.lane.b32.xlu0 %v563, 8
        %v674 = vpop.permute.xlu0 %673
        %675 = vrot.lane.b32.xlu0 %v564, 8
        %v676 = vpop.permute.xlu0 %675
        %677 = vrot.lane.b32.xlu0 %v565, 8
        %v678 = vpop.permute.xlu0 %677
        %679 = vrot.lane.b32.xlu0 %v566, 8
        %v680 = vpop.permute.xlu0 %679
        %681 = vrot.lane.b32.xlu0 %v567, 8
        %v682 = vpop.permute.xlu0 %681
        %683 = vrot.lane.b32.xlu0 %v568, 8
        %v684 = vpop.permute.xlu0 %683
        %685 = vrot.lane.b32.xlu0 %v569, 8
        %v686 = vpop.permute.xlu0 %685
        %687 = vrot.lane.b32.xlu0 %v570, 8
        %v688 = vpop.permute.xlu0 %687
        %689 = vrot.lane.b32.xlu0 %v571, 8
        %v690 = vpop.permute.xlu0 %689
        %691 = vrot.lane.b32.xlu0 %v572, 8
        %v692 = vpop.permute.xlu0 %691
        %693 = vrot.lane.b32.xlu0 %v573, 8
        %v694 = vpop.permute.xlu0 %693
        %695 = vrot.lane.b32.xlu0 %v574, 8
        %v696 = vpop.permute.xlu0 %695
        %697 = vrot.lane.b32.xlu0 %v575, 8
        %v698 = vpop.permute.xlu0 %697
        %699 = vrot.lane.b32.xlu0 %v576, 8
        %v700 = vpop.permute.xlu0 %699
        %701 = vrot.lane.b32.xlu0 %v577, 8
        %v702 = vpop.permute.xlu0 %701
        %703 = vrot.lane.b32.xlu0 %v578, 8
        %v704 = vpop.permute.xlu0 %703
        %705 = vrot.lane.b32.xlu0 %v579, 8
        %v706 = vpop.permute.xlu0 %705
        %707 = vrot.lane.b32.xlu0 %v580, 8
        %v708 = vpop.permute.xlu0 %707
        %709 = vrot.lane.b32.xlu0 %v581, 8
        %v710 = vpop.permute.xlu0 %709
        %711 = vrot.lane.b32.xlu0 %v582, 8
        %v712 = vpop.permute.xlu0 %711
        %713 = vrot.lane.b32.xlu0 %v583, 8
        %v714 = vpop.permute.xlu0 %713
        %715 = vrot.lane.b32.xlu0 %v584, 8
        %v716 = vpop.permute.xlu0 %715
        %717 = vrot.lane.b32.xlu0 %v585, 8
        %v718 = vpop.permute.xlu0 %717
        %719 = vrot.lane.b32.xlu0 %v586, 8
        %v720 = vpop.permute.xlu0 %719
        %721 = vrot.lane.b32.xlu0 %v587, 8
        %v722 = vpop.permute.xlu0 %721
        %723 = vrot.lane.b32.xlu0 %v588, 8
        %v724 = vpop.permute.xlu0 %723
        %725 = vrot.lane.b32.xlu0 %v589, 8
        %v726 = vpop.permute.xlu0 %725
        %727 = vrot.lane.b32.xlu0 %v590, 8
        %v728 = vpop.permute.xlu0 %727
        %729 = vrot.lane.b32.xlu0 %v591, 8
        %v730 = vpop.permute.xlu0 %729
        %731 = vrot.lane.b32.xlu0 %v592, 8
        %v732 = vpop.permute.xlu0 %731
        %733 = vrot.lane.b32.xlu0 %v593, 8
        %v734 = vpop.permute.xlu0 %733
        %735 = vrot.lane.b32.xlu0 %v594, 8
        %v736 = vpop.permute.xlu0 %735
        %737 = vrot.lane.b32.xlu0 %v595, 8
        %v738 = vpop.permute.xlu0 %737
        %739 = vrot.lane.b32.xlu0 %v596, 8
        %v740 = vpop.permute.xlu0 %739
        %741 = vrot.lane.b32.xlu0 %v597, 8
        %v742 = vpop.permute.xlu0 %741
        %743 = vrot.lane.b32.xlu0 %v598, 8
        %v744 = vpop.permute.xlu0 %743
        %745 = vrot.lane.b32.xlu0 %v599, 8
        %v746 = vpop.permute.xlu0 %745
        %747 = vrot.lane.b32.xlu0 %v600, 8
        %v748 = vpop.permute.xlu0 %747
        %749 = vrot.lane.b32.xlu0 %v601, 8
        %v750 = vpop.permute.xlu0 %749
        %751 = vrot.lane.b32.xlu0 %v602, 8
        %v752 = vpop.permute.xlu0 %751
        %753 = vrot.lane.b32.xlu0 %v603, 8
        %v754 = vpop.permute.xlu0 %753
        %755 = vrot.lane.b32.xlu0 %v604, 8
        %v756 = vpop.permute.xlu0 %755
        %757 = vrot.lane.b32.xlu0 %v605, 8
        %v758 = vpop.permute.xlu0 %757
        %vm810 = vcmask 97344
        %811 = vst.msk [vmem:[#allocation2] sm:$0xff] %vm810, %v658
        %812 = vst.msk [vmem:[#allocation2 + $0x8] sm:$0xff] %vm810, %v660
        %vm813 = vcmask 90176
        %814 = vst.msk [vmem:[#allocation2 + $0x10] sm:$0x1] %vm813, %v662
        %815 = vst.msk [vmem:[#allocation2 + $0x18] sm:$0xff] %vm810, %v664
        %816 = vst.msk [vmem:[#allocation2 + $0x20] sm:$0xff] %vm810, %v666
        %817 = vst.msk [vmem:[#allocation2 + $0x28] sm:$0x1] %vm813, %v668
        %818 = vst.msk [vmem:[#allocation2 + $0x30] sm:$0xff] %vm810, %v670
        %819 = vst.msk [vmem:[#allocation2 + $0x38] sm:$0xff] %vm810, %v672
        %820 = vst.msk [vmem:[#allocation2 + $0x40] sm:$0x1] %vm813, %v674
        %821 = vst.msk [vmem:[#allocation2 + $0x48] sm:$0xff] %vm810, %v676
        %822 = vst.msk [vmem:[#allocation2 + $0x50] sm:$0xff] %vm810, %v678
        %823 = vst.msk [vmem:[#allocation2 + $0x58] sm:$0x1] %vm813, %v680
        %824 = vst.msk [vmem:[#allocation2 + $0x60] sm:$0xff] %vm810, %v682
        %825 = vst.msk [vmem:[#allocation2 + $0x68] sm:$0xff] %vm810, %v684
        %826 = vst.msk [vmem:[#allocation2 + $0x70] sm:$0x1] %vm813, %v686
        %827 = vst.msk [vmem:[#allocation2 + $0x78] sm:$0xff] %vm810, %v688
        %828 = vst.msk [vmem:[#allocation2 + $0x80] sm:$0xff] %vm810, %v690
        %829 = vst.msk [vmem:[#allocation2 + $0x88] sm:$0x1] %vm813, %v692
        %830 = vst.msk [vmem:[#allocation2 + $0x90] sm:$0xff] %vm810, %v694
        %831 = vst.msk [vmem:[#allocation2 + $0x98] sm:$0xff] %vm810, %v696
        %832 = vst.msk [vmem:[#allocation2 + $0xa0] sm:$0x1] %vm813, %v698
        %833 = vst.msk [vmem:[#allocation2 + $0xa8] sm:$0xff] %vm810, %v700
        %834 = vst.msk [vmem:[#allocation2 + $0xb0] sm:$0xff] %vm810, %v702
        %835 = vst.msk [vmem:[#allocation2 + $0xb8] sm:$0x1] %vm813, %v704
        %836 = vst.msk [vmem:[#allocation2 + $0xc0] sm:$0xff] %vm810, %v706
        %837 = vst.msk [vmem:[#allocation2 + $0xc8] sm:$0xff] %vm810, %v708
        %838 = vst.msk [vmem:[#allocation2 + $0xd0] sm:$0x1] %vm813, %v710
        %839 = vst.msk [vmem:[#allocation2 + $0xd8] sm:$0xff] %vm810, %v712
        %840 = vst.msk [vmem:[#allocation2 + $0xe0] sm:$0xff] %vm810, %v714
        %841 = vst.msk [vmem:[#allocation2 + $0xe8] sm:$0x1] %vm813, %v716
        %842 = vst.msk [vmem:[#allocation2 + $0xf0] sm:$0xff] %vm810, %v718
        %843 = vst.msk [vmem:[#allocation2 + $0xf8] sm:$0xff] %vm810, %v720
        %844 = vst.msk [vmem:[#allocation2 + $0x100] sm:$0x1] %vm813, %v722
        %845 = vst.msk [vmem:[#allocation2 + $0x108] sm:$0xff] %vm810, %v724
        %846 = vst.msk [vmem:[#allocation2 + $0x110] sm:$0xff] %vm810, %v726
        %847 = vst.msk [vmem:[#allocation2 + $0x118] sm:$0x1] %vm813, %v728
        %848 = vst.msk [vmem:[#allocation2 + $0x120] sm:$0xff] %vm810, %v730
        %849 = vst.msk [vmem:[#allocation2 + $0x128] sm:$0xff] %vm810, %v732
        %850 = vst.msk [vmem:[#allocation2 + $0x130] sm:$0x1] %vm813, %v734
        %851 = vst.msk [vmem:[#allocation2 + $0x138] sm:$0xff] %vm810, %v736
        %852 = vst.msk [vmem:[#allocation2 + $0x140] sm:$0xff] %vm810, %v738
        %853 = vst.msk [vmem:[#allocation2 + $0x148] sm:$0x1] %vm813, %v740
        %854 = vst.msk [vmem:[#allocation2 + $0x150] sm:$0xff] %vm810, %v742
        %855 = vst.msk [vmem:[#allocation2 + $0x158] sm:$0xff] %vm810, %v744
        %856 = vst.msk [vmem:[#allocation2 + $0x160] sm:$0x1] %vm813, %v746
        %857 = vst.msk [vmem:[#allocation2 + $0x168] sm:$0xff] %vm810, %v748
        %858 = vst.msk [vmem:[#allocation2 + $0x170] sm:$0xff] %vm810, %v750
        %859 = vst.msk [vmem:[#allocation2 + $0x178] sm:$0x1] %vm813, %v752
        %860 = vst.msk [vmem:[#allocation2 + $0x180] sm:$0xff] %vm810, %v754
        %861 = vst.msk [vmem:[#allocation2 + $0x188] sm:$0xff] %vm810, %v756
        %862 = vst.msk [vmem:[#allocation2 + $0x190] sm:$0x1] %vm813, %v758
        %v863 = vld [vmem:[%s554 + $0x1] sm:$0xff]
        %v864 = vld [vmem:[%s554 + $0x9] sm:$0xff]
        %v865 = vld [vmem:[%s554 + $0x11] sm:$0x1]
        %v866 = vld [vmem:[%s554 + $0x19] sm:$0xff]
        %v867 = vld [vmem:[%s554 + $0x21] sm:$0xff]
        %v868 = vld [vmem:[%s554 + $0x29] sm:$0x1]
        %v869 = vld [vmem:[%s554 + $0x31] sm:$0xff]
        %v870 = vld [vmem:[%s554 + $0x39] sm:$0xff]
        %v871 = vld [vmem:[%s554 + $0x41] sm:$0x1]
        %v872 = vld [vmem:[%s554 + $0x49] sm:$0xff]
        %v873 = vld [vmem:[%s554 + $0x51] sm:$0xff]
        %v874 = vld [vmem:[%s554 + $0x59] sm:$0x1]
        %v875 = vld [vmem:[%s554 + $0x61] sm:$0xff]
        %v876 = vld [vmem:[%s554 + $0x69] sm:$0xff]
        %v877 = vld [vmem:[%s554 + $0x71] sm:$0x1]
        %v878 = vld [vmem:[%s554 + $0x79] sm:$0xff]
        %v879 = vld [vmem:[%s554 + $0x81] sm:$0xff]
        %v880 = vld [vmem:[%s554 + $0x89] sm:$0x1]
        %v881 = vld [vmem:[%s554 + $0x91] sm:$0xff]
        %v882 = vld [vmem:[%s554 + $0x99] sm:$0xff]
        %v883 = vld [vmem:[%s554 + $0xa1] sm:$0x1]
        %v884 = vld [vmem:[%s554 + $0xa9] sm:$0xff]
        %v885 = vld [vmem:[%s554 + $0xb1] sm:$0xff]
        %v886 = vld [vmem:[%s554 + $0xb9] sm:$0x1]
        %v887 = vld [vmem:[%s554 + $0xc1] sm:$0xff]
        %v888 = vld [vmem:[%s554 + $0xc9] sm:$0xff]
        %v889 = vld [vmem:[%s554 + $0xd1] sm:$0x1]
        %v890 = vld [vmem:[%s554 + $0xd9] sm:$0xff]
        %v891 = vld [vmem:[%s554 + $0xe1] sm:$0xff]
        %v892 = vld [vmem:[%s554 + $0xe9] sm:$0x1]
        %v893 = vld [vmem:[%s554 + $0xf1] sm:$0xff]
        %v894 = vld [vmem:[%s554 + $0xf9] sm:$0xff]
        %v895 = vld [vmem:[%s554 + $0x101] sm:$0x1]
        %v896 = vld [vmem:[%s554 + $0x109] sm:$0xff]
        %v897 = vld [vmem:[%s554 + $0x111] sm:$0xff]
        %v898 = vld [vmem:[%s554 + $0x119] sm:$0x1]
        %v899 = vld [vmem:[%s554 + $0x121] sm:$0xff]
        %v900 = vld [vmem:[%s554 + $0x129] sm:$0xff]
        %v901 = vld [vmem:[%s554 + $0x131] sm:$0x1]
        %v902 = vld [vmem:[%s554 + $0x139] sm:$0xff]
        %v903 = vld [vmem:[%s554 + $0x141] sm:$0xff]
        %v904 = vld [vmem:[%s554 + $0x149] sm:$0x1]
        %v905 = vld [vmem:[%s554 + $0x151] sm:$0xff]
        %v906 = vld [vmem:[%s554 + $0x159] sm:$0xff]
        %v907 = vld [vmem:[%s554 + $0x161] sm:$0x1]
        %v908 = vld [vmem:[%s554 + $0x169] sm:$0xff]
        %v909 = vld [vmem:[%s554 + $0x171] sm:$0xff]
        %v910 = vld [vmem:[%s554 + $0x179] sm:$0x1]
        %v911 = vld [vmem:[%s554 + $0x181] sm:$0xff]
        %v912 = vld [vmem:[%s554 + $0x189] sm:$0xff]
        %v913 = vld [vmem:[%s554 + $0x191] sm:$0x1]
        %965 = vrot.lane.b32.xlu0 %v863, 12
        %v966 = vpop.permute.xlu0 %965
        %967 = vrot.lane.b32.xlu0 %v864, 12
        %v968 = vpop.permute.xlu0 %967
        %969 = vrot.lane.b32.xlu0 %v865, 12
        %v970 = vpop.permute.xlu0 %969
        %971 = vrot.lane.b32.xlu0 %v866, 12
        %v972 = vpop.permute.xlu0 %971
        %973 = vrot.lane.b32.xlu0 %v867, 12
        %v974 = vpop.permute.xlu0 %973
        %975 = vrot.lane.b32.xlu0 %v868, 12
        %v976 = vpop.permute.xlu0 %975
        %977 = vrot.lane.b32.xlu0 %v869, 12
        %v978 = vpop.permute.xlu0 %977
        %979 = vrot.lane.b32.xlu0 %v870, 12
        %v980 = vpop.permute.xlu0 %979
        %981 = vrot.lane.b32.xlu0 %v871, 12
        %v982 = vpop.permute.xlu0 %981
        %983 = vrot.lane.b32.xlu0 %v872, 12
        %v984 = vpop.permute.xlu0 %983
        %985 = vrot.lane.b32.xlu0 %v873, 12
        %v986 = vpop.permute.xlu0 %985
        %987 = vrot.lane.b32.xlu0 %v874, 12
        %v988 = vpop.permute.xlu0 %987
        %989 = vrot.lane.b32.xlu0 %v875, 12
        %v990 = vpop.permute.xlu0 %989
        %991 = vrot.lane.b32.xlu0 %v876, 12
        %v992 = vpop.permute.xlu0 %991
        %993 = vrot.lane.b32.xlu0 %v877, 12
        %v994 = vpop.permute.xlu0 %993
        %995 = vrot.lane.b32.xlu0 %v878, 12
        %v996 = vpop.permute.xlu0 %995
        %997 = vrot.lane.b32.xlu0 %v879, 12
        %v998 = vpop.permute.xlu0 %997
        %999 = vrot.lane.b32.xlu0 %v880, 12
        %v1000 = vpop.permute.xlu0 %999
        %1001 = vrot.lane.b32.xlu0 %v881, 12
        %v1002 = vpop.permute.xlu0 %1001
        %1003 = vrot.lane.b32.xlu0 %v882, 12
        %v1004 = vpop.permute.xlu0 %1003
        %1005 = vrot.lane.b32.xlu0 %v883, 12
        %v1006 = vpop.permute.xlu0 %1005
        %1007 = vrot.lane.b32.xlu0 %v884, 12
        %v1008 = vpop.permute.xlu0 %1007
        %1009 = vrot.lane.b32.xlu0 %v885, 12
        %v1010 = vpop.permute.xlu0 %1009
        %1011 = vrot.lane.b32.xlu0 %v886, 12
        %v1012 = vpop.permute.xlu0 %1011
        %1013 = vrot.lane.b32.xlu0 %v887, 12
        %v1014 = vpop.permute.xlu0 %1013
        %1015 = vrot.lane.b32.xlu0 %v888, 12
        %v1016 = vpop.permute.xlu0 %1015
        %1017 = vrot.lane.b32.xlu0 %v889, 12
        %v1018 = vpop.permute.xlu0 %1017
        %1019 = vrot.lane.b32.xlu0 %v890, 12
        %v1020 = vpop.permute.xlu0 %1019
        %1021 = vrot.lane.b32.xlu0 %v891, 12
        %v1022 = vpop.permute.xlu0 %1021
        %1023 = vrot.lane.b32.xlu0 %v892, 12
        %v1024 = vpop.permute.xlu0 %1023
        %1025 = vrot.lane.b32.xlu0 %v893, 12
        %v1026 = vpop.permute.xlu0 %1025
        %1027 = vrot.lane.b32.xlu0 %v894, 12
        %v1028 = vpop.permute.xlu0 %1027
        %1029 = vrot.lane.b32.xlu0 %v895, 12
        %v1030 = vpop.permute.xlu0 %1029
        %1031 = vrot.lane.b32.xlu0 %v896, 12
        %v1032 = vpop.permute.xlu0 %1031
        %1033 = vrot.lane.b32.xlu0 %v897, 12
        %v1034 = vpop.permute.xlu0 %1033
        %1035 = vrot.lane.b32.xlu0 %v898, 12
        %v1036 = vpop.permute.xlu0 %1035
        %1037 = vrot.lane.b32.xlu0 %v899, 12
        %v1038 = vpop.permute.xlu0 %1037
        %1039 = vrot.lane.b32.xlu0 %v900, 12
        %v1040 = vpop.permute.xlu0 %1039
        %1041 = vrot.lane.b32.xlu0 %v901, 12
        %v1042 = vpop.permute.xlu0 %1041
        %1043 = vrot.lane.b32.xlu0 %v902, 12
        %v1044 = vpop.permute.xlu0 %1043
        %1045 = vrot.lane.b32.xlu0 %v903, 12
        %v1046 = vpop.permute.xlu0 %1045
        %1047 = vrot.lane.b32.xlu0 %v904, 12
        %v1048 = vpop.permute.xlu0 %1047
        %1049 = vrot.lane.b32.xlu0 %v905, 12
        %v1050 = vpop.permute.xlu0 %1049
        %1051 = vrot.lane.b32.xlu0 %v906, 12
        %v1052 = vpop.permute.xlu0 %1051
        %1053 = vrot.lane.b32.xlu0 %v907, 12
        %v1054 = vpop.permute.xlu0 %1053
        %1055 = vrot.lane.b32.xlu0 %v908, 12
        %v1056 = vpop.permute.xlu0 %1055
        %1057 = vrot.lane.b32.xlu0 %v909, 12
        %v1058 = vpop.permute.xlu0 %1057
        %1059 = vrot.lane.b32.xlu0 %v910, 12
        %v1060 = vpop.permute.xlu0 %1059
        %1061 = vrot.lane.b32.xlu0 %v911, 12
        %v1062 = vpop.permute.xlu0 %1061
        %1063 = vrot.lane.b32.xlu0 %v912, 12
        %v1064 = vpop.permute.xlu0 %1063
        %1065 = vrot.lane.b32.xlu0 %v913, 12
        %v1066 = vpop.permute.xlu0 %1065
        %vm1118 = vcmask 130144
        %1119 = vst.msk [vmem:[#allocation2] sm:$0xff] %vm1118, %v966
        %1120 = vst.msk [vmem:[#allocation2 + $0x8] sm:$0xff] %vm1118, %v968
        %vm1121 = vcmask 122976
        %1122 = vst.msk [vmem:[#allocation2 + $0x10] sm:$0x1] %vm1121, %v970
        %1123 = vst.msk [vmem:[#allocation2 + $0x18] sm:$0xff] %vm1118, %v972
        %1124 = vst.msk [vmem:[#allocation2 + $0x20] sm:$0xff] %vm1118, %v974
        %1125 = vst.msk [vmem:[#allocation2 + $0x28] sm:$0x1] %vm1121, %v976
        %1126 = vst.msk [vmem:[#allocation2 + $0x30] sm:$0xff] %vm1118, %v978
        %1127 = vst.msk [vmem:[#allocation2 + $0x38] sm:$0xff] %vm1118, %v980
        %1128 = vst.msk [vmem:[#allocation2 + $0x40] sm:$0x1] %vm1121, %v982
        %1129 = vst.msk [vmem:[#allocation2 + $0x48] sm:$0xff] %vm1118, %v984
        %1130 = vst.msk [vmem:[#allocation2 + $0x50] sm:$0xff] %vm1118, %v986
        %1131 = vst.msk [vmem:[#allocation2 + $0x58] sm:$0x1] %vm1121, %v988
        %1132 = vst.msk [vmem:[#allocation2 + $0x60] sm:$0xff] %vm1118, %v990
        %1133 = vst.msk [vmem:[#allocation2 + $0x68] sm:$0xff] %vm1118, %v992
        %1134 = vst.msk [vmem:[#allocation2 + $0x70] sm:$0x1] %vm1121, %v994
        %1135 = vst.msk [vmem:[#allocation2 + $0x78] sm:$0xff] %vm1118, %v996
        %1136 = vst.msk [vmem:[#allocation2 + $0x80] sm:$0xff] %vm1118, %v998
        %1137 = vst.msk [vmem:[#allocation2 + $0x88] sm:$0x1] %vm1121, %v1000
        %1138 = vst.msk [vmem:[#allocation2 + $0x90] sm:$0xff] %vm1118, %v1002
        %1139 = vst.msk [vmem:[#allocation2 + $0x98] sm:$0xff] %vm1118, %v1004
        %1140 = vst.msk [vmem:[#allocation2 + $0xa0] sm:$0x1] %vm1121, %v1006
        %1141 = vst.msk [vmem:[#allocation2 + $0xa8] sm:$0xff] %vm1118, %v1008
        %1142 = vst.msk [vmem:[#allocation2 + $0xb0] sm:$0xff] %vm1118, %v1010
        %1143 = vst.msk [vmem:[#allocation2 + $0xb8] sm:$0x1] %vm1121, %v1012
        %1144 = vst.msk [vmem:[#allocation2 + $0xc0] sm:$0xff] %vm1118, %v1014
        %1145 = vst.msk [vmem:[#allocation2 + $0xc8] sm:$0xff] %vm1118, %v1016
        %1146 = vst.msk [vmem:[#allocation2 + $0xd0] sm:$0x1] %vm1121, %v1018
        %1147 = vst.msk [vmem:[#allocation2 + $0xd8] sm:$0xff] %vm1118, %v1020
        %1148 = vst.msk [vmem:[#allocation2 + $0xe0] sm:$0xff] %vm1118, %v1022
        %1149 = vst.msk [vmem:[#allocation2 + $0xe8] sm:$0x1] %vm1121, %v1024
        %1150 = vst.msk [vmem:[#allocation2 + $0xf0] sm:$0xff] %vm1118, %v1026
        %1151 = vst.msk [vmem:[#allocation2 + $0xf8] sm:$0xff] %vm1118, %v1028
        %1152 = vst.msk [vmem:[#allocation2 + $0x100] sm:$0x1] %vm1121, %v1030
        %1153 = vst.msk [vmem:[#allocation2 + $0x108] sm:$0xff] %vm1118, %v1032
        %1154 = vst.msk [vmem:[#allocation2 + $0x110] sm:$0xff] %vm1118, %v1034
        %1155 = vst.msk [vmem:[#allocation2 + $0x118] sm:$0x1] %vm1121, %v1036
        %1156 = vst.msk [vmem:[#allocation2 + $0x120] sm:$0xff] %vm1118, %v1038
        %1157 = vst.msk [vmem:[#allocation2 + $0x128] sm:$0xff] %vm1118, %v1040
        %1158 = vst.msk [vmem:[#allocation2 + $0x130] sm:$0x1] %vm1121, %v1042
        %1159 = vst.msk [vmem:[#allocation2 + $0x138] sm:$0xff] %vm1118, %v1044
        %1160 = vst.msk [vmem:[#allocation2 + $0x140] sm:$0xff] %vm1118, %v1046
        %1161 = vst.msk [vmem:[#allocation2 + $0x148] sm:$0x1] %vm1121, %v1048
        %1162 = vst.msk [vmem:[#allocation2 + $0x150] sm:$0xff] %vm1118, %v1050
        %1163 = vst.msk [vmem:[#allocation2 + $0x158] sm:$0xff] %vm1118, %v1052
        %1164 = vst.msk [vmem:[#allocation2 + $0x160] sm:$0x1] %vm1121, %v1054
        %1165 = vst.msk [vmem:[#allocation2 + $0x168] sm:$0xff] %vm1118, %v1056
        %1166 = vst.msk [vmem:[#allocation2 + $0x170] sm:$0xff] %vm1118, %v1058
        %1167 = vst.msk [vmem:[#allocation2 + $0x178] sm:$0x1] %vm1121, %v1060
        %1168 = vst.msk [vmem:[#allocation2 + $0x180] sm:$0xff] %vm1118, %v1062
        %1169 = vst.msk [vmem:[#allocation2 + $0x188] sm:$0xff] %vm1118, %v1064
        %1170 = vst.msk [vmem:[#allocation2 + $0x190] sm:$0x1] %vm1121, %v1066
        %v1171 = vld [vmem:[#allocation2] sm:$0xff]
        %v1172 = vld [vmem:[#allocation2 + $0x8] sm:$0xff]
        %v1173 = vld [vmem:[#allocation2 + $0x18] sm:$0xff]
        %v1174 = vld [vmem:[#allocation2 + $0x20] sm:$0xff]
        %v1175 = vld [vmem:[#allocation2 + $0x30] sm:$0xff]
        %v1176 = vld [vmem:[#allocation2 + $0x38] sm:$0xff]
        %v1177 = vld [vmem:[#allocation2 + $0x48] sm:$0xff]
        %v1178 = vld [vmem:[#allocation2 + $0x50] sm:$0xff]
        %v1179 = vld [vmem:[#allocation2 + $0x60] sm:$0xff]
        %v1180 = vld [vmem:[#allocation2 + $0x68] sm:$0xff]
        %v1181 = vld [vmem:[#allocation2 + $0x78] sm:$0xff]
        %v1182 = vld [vmem:[#allocation2 + $0x80] sm:$0xff]
        %v1183 = vld [vmem:[#allocation2 + $0x90] sm:$0xff]
        %v1184 = vld [vmem:[#allocation2 + $0x98] sm:$0xff]
        %v1185 = vld [vmem:[#allocation2 + $0xa8] sm:$0xff]
        %v1186 = vld [vmem:[#allocation2 + $0xb0] sm:$0xff]
        %v1187 = vld [vmem:[#allocation2 + $0xc0] sm:$0xff]
        %v1188 = vld [vmem:[#allocation2 + $0xc8] sm:$0xff]
        %v1189 = vld [vmem:[#allocation2 + $0xd8] sm:$0xff]
        %v1190 = vld [vmem:[#allocation2 + $0xe0] sm:$0xff]
        %v1191 = vld [vmem:[#allocation2 + $0xf0] sm:$0xff]
        %v1192 = vld [vmem:[#allocation2 + $0xf8] sm:$0xff]
        %v1193 = vld [vmem:[#allocation2 + $0x108] sm:$0xff]
        %v1194 = vld [vmem:[#allocation2 + $0x110] sm:$0xff]
        %v1195 = vld [vmem:[#allocation2 + $0x120] sm:$0xff]
        %v1196 = vld [vmem:[#allocation2 + $0x128] sm:$0xff]
        %v1197 = vld [vmem:[#allocation2 + $0x138] sm:$0xff]
        %v1198 = vld [vmem:[#allocation2 + $0x140] sm:$0xff]
        %v1199 = vld [vmem:[#allocation2 + $0x150] sm:$0xff]
        %v1200 = vld [vmem:[#allocation2 + $0x158] sm:$0xff]
        %v1201 = vld [vmem:[#allocation2 + $0x168] sm:$0xff]
        %v1202 = vld [vmem:[#allocation2 + $0x170] sm:$0xff]
        %v1203 = vld [vmem:[%s1] sm:$0xff]
        %v1204 = vld [vmem:[%s1 + $0x8] sm:$0xff]
        %vm1205 = vcmask 130048
        %v1207 = vsel %vm1205, %v1171, 0
        %v1210 = vsel %vm1205, %v1172, 0
        %v1213 = vsel %vm1205, %v1173, 0
        %v1216 = vsel %vm1205, %v1174, 0
        %v1219 = vsel %vm1205, %v1175, 0
        %v1222 = vsel %vm1205, %v1176, 0
        %v1225 = vsel %vm1205, %v1177, 0
        %v1228 = vsel %vm1205, %v1178, 0
        %v1231 = vsel %vm1205, %v1179, 0
        %v1234 = vsel %vm1205, %v1180, 0
        %v1237 = vsel %vm1205, %v1181, 0
        %v1240 = vsel %vm1205, %v1182, 0
        %v1243 = vsel %vm1205, %v1183, 0
        %v1246 = vsel %vm1205, %v1184, 0
        %v1249 = vsel %vm1205, %v1185, 0
        %v1252 = vsel %vm1205, %v1186, 0
        %v1255 = vsel %vm1205, %v1187, 0
        %v1258 = vsel %vm1205, %v1188, 0
        %v1261 = vsel %vm1205, %v1189, 0
        %v1264 = vsel %vm1205, %v1190, 0
        %v1267 = vsel %vm1205, %v1191, 0
        %v1270 = vsel %vm1205, %v1192, 0
        %v1273 = vsel %vm1205, %v1193, 0
        %v1276 = vsel %vm1205, %v1194, 0
        %v1279 = vsel %vm1205, %v1195, 0
        %v1282 = vsel %vm1205, %v1196, 0
        %v1285 = vsel %vm1205, %v1197, 0
        %v1288 = vsel %vm1205, %v1198, 0
        %v1291 = vsel %vm1205, %v1199, 0
        %v1294 = vsel %vm1205, %v1200, 0
        %v1297 = vsel %vm1205, %v1201, 0
        %v1300 = vsel %vm1205, %v1202, 0
        %1302 = vmatpush.msra.mxu0 0.0
        %1303 = vmatpush.msra.mxu0 0.0
        %1304 = vmatpush.msra.mxu0 0.0
        %1305 = vmatpush.msra.mxu0 0.0
        %1306 = vmatpush.msra.mxu0 0.0
        %1307 = vmatpush.msra.mxu0 0.0
        %1308 = vmatpush.msra.mxu0 0.0
        %1309 = vmatpush.msra.mxu0 0.0
        %1310 = vmatpush.msra.mxu0 0.0
        %1311 = vmatpush.msra.mxu0 0.0
        %1312 = vmatpush.msra.mxu0 0.0
        %1313 = vmatpush.msra.mxu0 0.0
        %1314 = vmatpush.msra.mxu0 0.0
        %1315 = vmatpush.msra.mxu0 0.0
        %1316 = vmatpush.msra.mxu0 %v1204
        %1317 = vmatpush.msra.mxu0 %v1203
        %1318 = vmatmul.f32.gmra.mxu0 %v1207
        %v1319 = vpop.f32.mrf.mxu0
        %v1320 = vadd.f32 0.0, %v1319
        %1321 = vmatmul.f32.gmra.mxu0 %v1210
        %v1322 = vpop.f32.mrf.mxu0
        %v1323 = vadd.f32 0.0, %v1322
        %1324 = vmatmul.f32.gmra.mxu0 %v1213
        %v1325 = vpop.f32.mrf.mxu0
        %v1326 = vadd.f32 0.0, %v1325
        %1327 = vmatmul.f32.gmra.mxu0 %v1216
        %v1328 = vpop.f32.mrf.mxu0
        %v1329 = vadd.f32 0.0, %v1328
        %1330 = vmatmul.f32.gmra.mxu0 %v1219
        %v1331 = vpop.f32.mrf.mxu0
        %v1332 = vadd.f32 0.0, %v1331
        %1333 = vmatmul.f32.gmra.mxu0 %v1222
        %v1334 = vpop.f32.mrf.mxu0
        %v1335 = vadd.f32 0.0, %v1334
        %1336 = vmatmul.f32.gmra.mxu0 %v1225
        %v1337 = vpop.f32.mrf.mxu0
        %v1338 = vadd.f32 0.0, %v1337
        %1339 = vmatmul.f32.gmra.mxu0 %v1228
        %v1340 = vpop.f32.mrf.mxu0
        %v1341 = vadd.f32 0.0, %v1340
        %1342 = vmatmul.f32.gmra.mxu0 %v1231
        %v1343 = vpop.f32.mrf.mxu0
        %v1344 = vadd.f32 0.0, %v1343
        %1345 = vmatmul.f32.gmra.mxu0 %v1234
        %v1346 = vpop.f32.mrf.mxu0
        %v1347 = vadd.f32 0.0, %v1346
        %1348 = vmatmul.f32.gmra.mxu0 %v1237
        %v1349 = vpop.f32.mrf.mxu0
        %v1350 = vadd.f32 0.0, %v1349
        %1351 = vmatmul.f32.gmra.mxu0 %v1240
        %v1352 = vpop.f32.mrf.mxu0
        %v1353 = vadd.f32 0.0, %v1352
        %1354 = vmatmul.f32.gmra.mxu0 %v1243
        %v1355 = vpop.f32.mrf.mxu0
        %v1356 = vadd.f32 0.0, %v1355
        %1357 = vmatmul.f32.gmra.mxu0 %v1246
        %v1358 = vpop.f32.mrf.mxu0
        %v1359 = vadd.f32 0.0, %v1358
        %1360 = vmatmul.f32.gmra.mxu0 %v1249
        %v1361 = vpop.f32.mrf.mxu0
        %v1362 = vadd.f32 0.0, %v1361
        %1363 = vmatmul.f32.gmra.mxu0 %v1252
        %v1364 = vpop.f32.mrf.mxu0
        %v1365 = vadd.f32 0.0, %v1364
        %1366 = vmatmul.f32.gmra.mxu0 %v1255
        %v1367 = vpop.f32.mrf.mxu0
        %v1368 = vadd.f32 0.0, %v1367
        %1369 = vmatmul.f32.gmra.mxu0 %v1258
        %v1370 = vpop.f32.mrf.mxu0
        %v1371 = vadd.f32 0.0, %v1370
        %1372 = vmatmul.f32.gmra.mxu0 %v1261
        %v1373 = vpop.f32.mrf.mxu0
        %v1374 = vadd.f32 0.0, %v1373
        %1375 = vmatmul.f32.gmra.mxu0 %v1264
        %v1376 = vpop.f32.mrf.mxu0
        %v1377 = vadd.f32 0.0, %v1376
        %1378 = vmatmul.f32.gmra.mxu0 %v1267
        %v1379 = vpop.f32.mrf.mxu0
        %v1380 = vadd.f32 0.0, %v1379
        %1381 = vmatmul.f32.gmra.mxu0 %v1270
        %v1382 = vpop.f32.mrf.mxu0
        %v1383 = vadd.f32 0.0, %v1382
        %1384 = vmatmul.f32.gmra.mxu0 %v1273
        %v1385 = vpop.f32.mrf.mxu0
        %v1386 = vadd.f32 0.0, %v1385
        %1387 = vmatmul.f32.gmra.mxu0 %v1276
        %v1388 = vpop.f32.mrf.mxu0
        %v1389 = vadd.f32 0.0, %v1388
        %1390 = vmatmul.f32.gmra.mxu0 %v1279
        %v1391 = vpop.f32.mrf.mxu0
        %v1392 = vadd.f32 0.0, %v1391
        %1393 = vmatmul.f32.gmra.mxu0 %v1282
        %v1394 = vpop.f32.mrf.mxu0
        %v1395 = vadd.f32 0.0, %v1394
        %1396 = vmatmul.f32.gmra.mxu0 %v1285
        %v1397 = vpop.f32.mrf.mxu0
        %v1398 = vadd.f32 0.0, %v1397
        %1399 = vmatmul.f32.gmra.mxu0 %v1288
        %v1400 = vpop.f32.mrf.mxu0
        %v1401 = vadd.f32 0.0, %v1400
        %1402 = vmatmul.f32.gmra.mxu0 %v1291
        %v1403 = vpop.f32.mrf.mxu0
        %v1404 = vadd.f32 0.0, %v1403
        %1405 = vmatmul.f32.gmra.mxu0 %v1294
        %v1406 = vpop.f32.mrf.mxu0
        %v1407 = vadd.f32 0.0, %v1406
        %1408 = vmatmul.f32.gmra.mxu0 %v1297
        %v1409 = vpop.f32.mrf.mxu0
        %v1410 = vadd.f32 0.0, %v1409
        %1411 = vmatmul.f32.gmra.mxu0 %v1300
        %v1412 = vpop.f32.mrf.mxu0
        %v1413 = vadd.f32 0.0, %v1412
        %1414 = vdwg.mxu0
        %vm1415 = vcmask 64512
        %v1416 = vsel %vm1415, %v1320, 0.0
        %v1417 = vsel %vm1415, %v1323, 0.0
        %v1418 = vadd.f32 %v1416, %v1417
        %v1419 = vsel %vm1415, %v1326, 0.0
        %v1420 = vadd.f32 %v1418, %v1419
        %v1421 = vsel %vm1415, %v1329, 0.0
        %v1422 = vadd.f32 %v1420, %v1421
        %v1423 = vsel %vm1415, %v1332, 0.0
        %v1424 = vadd.f32 %v1422, %v1423
        %v1425 = vsel %vm1415, %v1335, 0.0
        %v1426 = vadd.f32 %v1424, %v1425
        %v1427 = vsel %vm1415, %v1338, 0.0
        %v1428 = vadd.f32 %v1426, %v1427
        %v1429 = vsel %vm1415, %v1341, 0.0
        %v1430 = vadd.f32 %v1428, %v1429
        %v1431 = vsel %vm1415, %v1344, 0.0
        %v1432 = vadd.f32 %v1430, %v1431
        %v1433 = vsel %vm1415, %v1347, 0.0
        %v1434 = vadd.f32 %v1432, %v1433
        %v1435 = vsel %vm1415, %v1350, 0.0
        %v1436 = vadd.f32 %v1434, %v1435
        %v1437 = vsel %vm1415, %v1353, 0.0
        %v1438 = vadd.f32 %v1436, %v1437
        %v1439 = vsel %vm1415, %v1356, 0.0
        %v1440 = vadd.f32 %v1438, %v1439
        %v1441 = vsel %vm1415, %v1359, 0.0
        %v1442 = vadd.f32 %v1440, %v1441
        %v1443 = vsel %vm1415, %v1362, 0.0
        %v1444 = vadd.f32 %v1442, %v1443
        %v1445 = vsel %vm1415, %v1365, 0.0
        %v1446 = vadd.f32 %v1444, %v1445
        %v1447 = vsel %vm1415, %v1368, 0.0
        %v1448 = vadd.f32 %v1446, %v1447
        %v1449 = vsel %vm1415, %v1371, 0.0
        %v1450 = vadd.f32 %v1448, %v1449
        %v1451 = vsel %vm1415, %v1374, 0.0
        %v1452 = vadd.f32 %v1450, %v1451
        %v1453 = vsel %vm1415, %v1377, 0.0
        %v1454 = vadd.f32 %v1452, %v1453
        %v1455 = vsel %vm1415, %v1380, 0.0
        %v1456 = vadd.f32 %v1454, %v1455
        %v1457 = vsel %vm1415, %v1383, 0.0
        %v1458 = vadd.f32 %v1456, %v1457
        %v1459 = vsel %vm1415, %v1386, 0.0
        %v1460 = vadd.f32 %v1458, %v1459
        %v1461 = vsel %vm1415, %v1389, 0.0
        %v1462 = vadd.f32 %v1460, %v1461
        %v1463 = vsel %vm1415, %v1392, 0.0
        %v1464 = vadd.f32 %v1462, %v1463
        %v1465 = vsel %vm1415, %v1395, 0.0
        %v1466 = vadd.f32 %v1464, %v1465
        %v1467 = vsel %vm1415, %v1398, 0.0
        %v1468 = vadd.f32 %v1466, %v1467
        %v1469 = vsel %vm1415, %v1401, 0.0
        %v1470 = vadd.f32 %v1468, %v1469
        %v1471 = vsel %vm1415, %v1404, 0.0
        %v1472 = vadd.f32 %v1470, %v1471
        %v1473 = vsel %vm1415, %v1407, 0.0
        %v1474 = vadd.f32 %v1472, %v1473
        %v1475 = vsel %vm1415, %v1410, 0.0
        %v1476 = vadd.f32 %v1474, %v1475
        %v1477 = vsel %vm1415, %v1413, 0.0
        %v1478 = vadd.f32 %v1476, %v1477
        %v1479 = vrot.slane %v1478, 4
        %v1480 = vadd.f32 %v1478, %v1479
        %v1481 = vrot.slane %v1480, 2
        %v1482 = vadd.f32 %v1480, %v1481
        %v1483 = vrot.slane %v1482, 1
        %v1484 = vadd.f32 %v1482, %v1483
        %v1485 = vadd.f32 %v1484, 0.0
        %v1486 = vmul.f32 %v1320, %v1320
        %v1487 = vmul.f32 %v1323, %v1323
        %v1488 = vmul.f32 %v1326, %v1326
        %v1489 = vmul.f32 %v1329, %v1329
        %v1490 = vmul.f32 %v1332, %v1332
        %v1491 = vmul.f32 %v1335, %v1335
        %v1492 = vmul.f32 %v1338, %v1338
        %v1493 = vmul.f32 %v1341, %v1341
        %v1494 = vmul.f32 %v1344, %v1344
        %v1495 = vmul.f32 %v1347, %v1347
        %v1496 = vmul.f32 %v1350, %v1350
        %v1497 = vmul.f32 %v1353, %v1353
        %v1498 = vmul.f32 %v1356, %v1356
        %v1499 = vmul.f32 %v1359, %v1359
        %v1500 = vmul.f32 %v1362, %v1362
        %v1501 = vmul.f32 %v1365, %v1365
        %v1502 = vmul.f32 %v1368, %v1368
        %v1503 = vmul.f32 %v1371, %v1371
        %v1504 = vmul.f32 %v1374, %v1374
        %v1505 = vmul.f32 %v1377, %v1377
        %v1506 = vmul.f32 %v1380, %v1380
        %v1507 = vmul.f32 %v1383, %v1383
        %v1508 = vmul.f32 %v1386, %v1386
        %v1509 = vmul.f32 %v1389, %v1389
        %v1510 = vmul.f32 %v1392, %v1392
        %v1511 = vmul.f32 %v1395, %v1395
        %v1512 = vmul.f32 %v1398, %v1398
        %v1513 = vmul.f32 %v1401, %v1401
        %v1514 = vmul.f32 %v1404, %v1404
        %v1515 = vmul.f32 %v1407, %v1407
        %v1516 = vmul.f32 %v1410, %v1410
        %v1517 = vmul.f32 %v1413, %v1413
        %v1518 = vsel %vm1415, %v1486, 0.0
        %v1519 = vsel %vm1415, %v1487, 0.0
        %v1520 = vadd.f32 %v1518, %v1519
        %v1521 = vsel %vm1415, %v1488, 0.0
        %v1522 = vadd.f32 %v1520, %v1521
        %v1523 = vsel %vm1415, %v1489, 0.0
        %v1524 = vadd.f32 %v1522, %v1523
        %v1525 = vsel %vm1415, %v1490, 0.0
        %v1526 = vadd.f32 %v1524, %v1525
        %v1527 = vsel %vm1415, %v1491, 0.0
        %v1528 = vadd.f32 %v1526, %v1527
        %v1529 = vsel %vm1415, %v1492, 0.0
        %v1530 = vadd.f32 %v1528, %v1529
        %v1531 = vsel %vm1415, %v1493, 0.0
        %v1532 = vadd.f32 %v1530, %v1531
        %v1533 = vsel %vm1415, %v1494, 0.0
        %v1534 = vadd.f32 %v1532, %v1533
        %v1535 = vsel %vm1415, %v1495, 0.0
        %v1536 = vadd.f32 %v1534, %v1535
        %v1537 = vsel %vm1415, %v1496, 0.0
        %v1538 = vadd.f32 %v1536, %v1537
        %v1539 = vsel %vm1415, %v1497, 0.0
        %v1540 = vadd.f32 %v1538, %v1539
        %v1541 = vsel %vm1415, %v1498, 0.0
        %v1542 = vadd.f32 %v1540, %v1541
        %v1543 = vsel %vm1415, %v1499, 0.0
        %v1544 = vadd.f32 %v1542, %v1543
        %v1545 = vsel %vm1415, %v1500, 0.0
        %v1546 = vadd.f32 %v1544, %v1545
        %v1547 = vsel %vm1415, %v1501, 0.0
        %v1548 = vadd.f32 %v1546, %v1547
        %v1549 = vsel %vm1415, %v1502, 0.0
        %v1550 = vadd.f32 %v1548, %v1549
        %v1551 = vsel %vm1415, %v1503, 0.0
        %v1552 = vadd.f32 %v1550, %v1551
        %v1553 = vsel %vm1415, %v1504, 0.0
        %v1554 = vadd.f32 %v1552, %v1553
        %v1555 = vsel %vm1415, %v1505, 0.0
        %v1556 = vadd.f32 %v1554, %v1555
        %v1557 = vsel %vm1415, %v1506, 0.0
        %v1558 = vadd.f32 %v1556, %v1557
        %v1559 = vsel %vm1415, %v1507, 0.0
        %v1560 = vadd.f32 %v1558, %v1559
        %v1561 = vsel %vm1415, %v1508, 0.0
        %v1562 = vadd.f32 %v1560, %v1561
        %v1563 = vsel %vm1415, %v1509, 0.0
        %v1564 = vadd.f32 %v1562, %v1563
        %v1565 = vsel %vm1415, %v1510, 0.0
        %v1566 = vadd.f32 %v1564, %v1565
        %v1567 = vsel %vm1415, %v1511, 0.0
        %v1568 = vadd.f32 %v1566, %v1567
        %v1569 = vsel %vm1415, %v1512, 0.0
        %v1570 = vadd.f32 %v1568, %v1569
        %v1571 = vsel %vm1415, %v1513, 0.0
        %v1572 = vadd.f32 %v1570, %v1571
        %v1573 = vsel %vm1415, %v1514, 0.0
        %v1574 = vadd.f32 %v1572, %v1573
        %v1575 = vsel %vm1415, %v1515, 0.0
        %v1576 = vadd.f32 %v1574, %v1575
        %v1577 = vsel %vm1415, %v1516, 0.0
        %v1578 = vadd.f32 %v1576, %v1577
        %v1579 = vsel %vm1415, %v1517, 0.0
        %v1580 = vadd.f32 %v1578, %v1579
        %v1581 = vrot.slane %v1580, 4
        %v1582 = vadd.f32 %v1580, %v1581
        %v1583 = vrot.slane %v1582, 2
        %v1584 = vadd.f32 %v1582, %v1583
        %v1585 = vrot.slane %v1584, 1
        %v1586 = vadd.f32 %v1584, %v1585
        %v1587 = vadd.f32 %v1586, 0.0
        %1588 = vst.msk [vmem:[#allocation3] sm:$0xff] %vm1415, %v1320
        %1589 = vst.msk [vmem:[#allocation3 + $0x8] sm:$0xff] %vm1415, %v1323
        %1590 = vst.msk [vmem:[#allocation3 + $0x10] sm:$0xff] %vm1415, %v1326
        %1591 = vst.msk [vmem:[#allocation3 + $0x18] sm:$0xff] %vm1415, %v1329
        %1592 = vst.msk [vmem:[#allocation3 + $0x20] sm:$0xff] %vm1415, %v1332
        %1593 = vst.msk [vmem:[#allocation3 + $0x28] sm:$0xff] %vm1415, %v1335
        %1594 = vst.msk [vmem:[#allocation3 + $0x30] sm:$0xff] %vm1415, %v1338
        %1595 = vst.msk [vmem:[#allocation3 + $0x38] sm:$0xff] %vm1415, %v1341
        %1596 = vst.msk [vmem:[#allocation3 + $0x40] sm:$0xff] %vm1415, %v1344
        %1597 = vst.msk [vmem:[#allocation3 + $0x48] sm:$0xff] %vm1415, %v1347
        %1598 = vst.msk [vmem:[#allocation3 + $0x50] sm:$0xff] %vm1415, %v1350
        %1599 = vst.msk [vmem:[#allocation3 + $0x58] sm:$0xff] %vm1415, %v1353
        %1600 = vst.msk [vmem:[#allocation3 + $0x60] sm:$0xff] %vm1415, %v1356
        %1601 = vst.msk [vmem:[#allocation3 + $0x68] sm:$0xff] %vm1415, %v1359
        %1602 = vst.msk [vmem:[#allocation3 + $0x70] sm:$0xff] %vm1415, %v1362
        %1603 = vst.msk [vmem:[#allocation3 + $0x78] sm:$0xff] %vm1415, %v1365
        %1604 = vst.msk [vmem:[#allocation3 + $0x80] sm:$0xff] %vm1415, %v1368
        %1605 = vst.msk [vmem:[#allocation3 + $0x88] sm:$0xff] %vm1415, %v1371
        %1606 = vst.msk [vmem:[#allocation3 + $0x90] sm:$0xff] %vm1415, %v1374
        %1607 = vst.msk [vmem:[#allocation3 + $0x98] sm:$0xff] %vm1415, %v1377
        %1608 = vst.msk [vmem:[#allocation3 + $0xa0] sm:$0xff] %vm1415, %v1380
        %1609 = vst.msk [vmem:[#allocation3 + $0xa8] sm:$0xff] %vm1415, %v1383
        %1610 = vst.msk [vmem:[#allocation3 + $0xb0] sm:$0xff] %vm1415, %v1386
        %1611 = vst.msk [vmem:[#allocation3 + $0xb8] sm:$0xff] %vm1415, %v1389
        %1612 = vst.msk [vmem:[#allocation3 + $0xc0] sm:$0xff] %vm1415, %v1392
        %1613 = vst.msk [vmem:[#allocation3 + $0xc8] sm:$0xff] %vm1415, %v1395
        %1614 = vst.msk [vmem:[#allocation3 + $0xd0] sm:$0xff] %vm1415, %v1398
        %1615 = vst.msk [vmem:[#allocation3 + $0xd8] sm:$0xff] %vm1415, %v1401
        %1616 = vst.msk [vmem:[#allocation3 + $0xe0] sm:$0xff] %vm1415, %v1404
        %1617 = vst.msk [vmem:[#allocation3 + $0xe8] sm:$0xff] %vm1415, %v1407
        %1618 = vst.msk [vmem:[#allocation3 + $0xf0] sm:$0xff] %vm1415, %v1410
        %1619 = vst.msk [vmem:[#allocation3 + $0xf8] sm:$0xff] %vm1415, %v1413
        %v1620 = vld [vmem:[#allocation2 + $0x1] sm:$0xff]
        %v1621 = vld [vmem:[#allocation2 + $0x9] sm:$0xff]
        %v1622 = vld [vmem:[#allocation2 + $0x19] sm:$0xff]
        %v1623 = vld [vmem:[#allocation2 + $0x21] sm:$0xff]
        %v1624 = vld [vmem:[#allocation2 + $0x31] sm:$0xff]
        %v1625 = vld [vmem:[#allocation2 + $0x39] sm:$0xff]
        %v1626 = vld [vmem:[#allocation2 + $0x49] sm:$0xff]
        %v1627 = vld [vmem:[#allocation2 + $0x51] sm:$0xff]
        %v1628 = vld [vmem:[#allocation2 + $0x61] sm:$0xff]
        %v1629 = vld [vmem:[#allocation2 + $0x69] sm:$0xff]
        %v1630 = vld [vmem:[#allocation2 + $0x79] sm:$0xff]
        %v1631 = vld [vmem:[#allocation2 + $0x81] sm:$0xff]
        %v1632 = vld [vmem:[#allocation2 + $0x91] sm:$0xff]
        %v1633 = vld [vmem:[#allocation2 + $0x99] sm:$0xff]
        %v1634 = vld [vmem:[#allocation2 + $0xa9] sm:$0xff]
        %v1635 = vld [vmem:[#allocation2 + $0xb1] sm:$0xff]
        %v1636 = vld [vmem:[#allocation2 + $0xc1] sm:$0xff]
        %v1637 = vld [vmem:[#allocation2 + $0xc9] sm:$0xff]
        %v1638 = vld [vmem:[#allocation2 + $0xd9] sm:$0xff]
        %v1639 = vld [vmem:[#allocation2 + $0xe1] sm:$0xff]
        %v1640 = vld [vmem:[#allocation2 + $0xf1] sm:$0xff]
        %v1641 = vld [vmem:[#allocation2 + $0xf9] sm:$0xff]
        %v1642 = vld [vmem:[#allocation2 + $0x109] sm:$0xff]
        %v1643 = vld [vmem:[#allocation2 + $0x111] sm:$0xff]
        %v1644 = vld [vmem:[#allocation2 + $0x121] sm:$0xff]
        %v1645 = vld [vmem:[#allocation2 + $0x129] sm:$0xff]
        %v1646 = vld [vmem:[#allocation2 + $0x139] sm:$0xff]
        %v1647 = vld [vmem:[#allocation2 + $0x141] sm:$0xff]
        %v1648 = vld [vmem:[#allocation2 + $0x151] sm:$0xff]
        %v1649 = vld [vmem:[#allocation2 + $0x159] sm:$0xff]
        %v1650 = vld [vmem:[#allocation2 + $0x169] sm:$0xff]
        %v1651 = vld [vmem:[#allocation2 + $0x171] sm:$0xff]
        %s1652 = scalar_lea.vmem %s1, 16
        %v1653 = vld [vmem:[%s1652] sm:$0xff]
        %v1654 = vld [vmem:[%s1652 + $0x8] sm:$0xff]
        %v1656 = vsel %vm1205, %v1620, 0
        %v1659 = vsel %vm1205, %v1621, 0
        %v1662 = vsel %vm1205, %v1622, 0
        %v1665 = vsel %vm1205, %v1623, 0
        %v1668 = vsel %vm1205, %v1624, 0
        %v1671 = vsel %vm1205, %v1625, 0
        %v1674 = vsel %vm1205, %v1626, 0
        %v1677 = vsel %vm1205, %v1627, 0
        %v1680 = vsel %vm1205, %v1628, 0
        %v1683 = vsel %vm1205, %v1629, 0
        %v1686 = vsel %vm1205, %v1630, 0
        %v1689 = vsel %vm1205, %v1631, 0
        %v1692 = vsel %vm1205, %v1632, 0
        %v1695 = vsel %vm1205, %v1633, 0
        %v1698 = vsel %vm1205, %v1634, 0
        %v1701 = vsel %vm1205, %v1635, 0
        %v1704 = vsel %vm1205, %v1636, 0
        %v1707 = vsel %vm1205, %v1637, 0
        %v1710 = vsel %vm1205, %v1638, 0
        %v1713 = vsel %vm1205, %v1639, 0
        %v1716 = vsel %vm1205, %v1640, 0
        %v1719 = vsel %vm1205, %v1641, 0
        %v1722 = vsel %vm1205, %v1642, 0
        %v1725 = vsel %vm1205, %v1643, 0
        %v1728 = vsel %vm1205, %v1644, 0
        %v1731 = vsel %vm1205, %v1645, 0
        %v1734 = vsel %vm1205, %v1646, 0
        %v1737 = vsel %vm1205, %v1647, 0
        %v1740 = vsel %vm1205, %v1648, 0
        %v1743 = vsel %vm1205, %v1649, 0
        %v1746 = vsel %vm1205, %v1650, 0
        %v1749 = vsel %vm1205, %v1651, 0
        %1751 = vmatpush.msra.mxu0 0.0
        %1752 = vmatpush.msra.mxu0 0.0
        %1753 = vmatpush.msra.mxu0 0.0
        %1754 = vmatpush.msra.mxu0 0.0
        %1755 = vmatpush.msra.mxu0 0.0
        %1756 = vmatpush.msra.mxu0 0.0
        %1757 = vmatpush.msra.mxu0 0.0
        %1758 = vmatpush.msra.mxu0 0.0
        %1759 = vmatpush.msra.mxu0 0.0
        %1760 = vmatpush.msra.mxu0 0.0
        %1761 = vmatpush.msra.mxu0 0.0
        %1762 = vmatpush.msra.mxu0 0.0
        %1763 = vmatpush.msra.mxu0 0.0
        %1764 = vmatpush.msra.mxu0 0.0
        %1765 = vmatpush.msra.mxu0 %v1654
        %1766 = vmatpush.msra.mxu0 %v1653
        %1767 = vmatmul.f32.gmra.mxu0 %v1656
        %v1768 = vpop.f32.mrf.mxu0
        %v1769 = vadd.f32 0.0, %v1768
        %1770 = vmatmul.f32.gmra.mxu0 %v1659
        %v1771 = vpop.f32.mrf.mxu0
        %v1772 = vadd.f32 0.0, %v1771
        %1773 = vmatmul.f32.gmra.mxu0 %v1662
        %v1774 = vpop.f32.mrf.mxu0
        %v1775 = vadd.f32 0.0, %v1774
        %1776 = vmatmul.f32.gmra.mxu0 %v1665
        %v1777 = vpop.f32.mrf.mxu0
        %v1778 = vadd.f32 0.0, %v1777
        %1779 = vmatmul.f32.gmra.mxu0 %v1668
        %v1780 = vpop.f32.mrf.mxu0
        %v1781 = vadd.f32 0.0, %v1780
        %1782 = vmatmul.f32.gmra.mxu0 %v1671
        %v1783 = vpop.f32.mrf.mxu0
        %v1784 = vadd.f32 0.0, %v1783
        %1785 = vmatmul.f32.gmra.mxu0 %v1674
        %v1786 = vpop.f32.mrf.mxu0
        %v1787 = vadd.f32 0.0, %v1786
        %1788 = vmatmul.f32.gmra.mxu0 %v1677
        %v1789 = vpop.f32.mrf.mxu0
        %v1790 = vadd.f32 0.0, %v1789
        %1791 = vmatmul.f32.gmra.mxu0 %v1680
        %v1792 = vpop.f32.mrf.mxu0
        %v1793 = vadd.f32 0.0, %v1792
        %1794 = vmatmul.f32.gmra.mxu0 %v1683
        %v1795 = vpop.f32.mrf.mxu0
        %v1796 = vadd.f32 0.0, %v1795
        %1797 = vmatmul.f32.gmra.mxu0 %v1686
        %v1798 = vpop.f32.mrf.mxu0
        %v1799 = vadd.f32 0.0, %v1798
        %1800 = vmatmul.f32.gmra.mxu0 %v1689
        %v1801 = vpop.f32.mrf.mxu0
        %v1802 = vadd.f32 0.0, %v1801
        %1803 = vmatmul.f32.gmra.mxu0 %v1692
        %v1804 = vpop.f32.mrf.mxu0
        %v1805 = vadd.f32 0.0, %v1804
        %1806 = vmatmul.f32.gmra.mxu0 %v1695
        %v1807 = vpop.f32.mrf.mxu0
        %v1808 = vadd.f32 0.0, %v1807
        %1809 = vmatmul.f32.gmra.mxu0 %v1698
        %v1810 = vpop.f32.mrf.mxu0
        %v1811 = vadd.f32 0.0, %v1810
        %1812 = vmatmul.f32.gmra.mxu0 %v1701
        %v1813 = vpop.f32.mrf.mxu0
        %v1814 = vadd.f32 0.0, %v1813
        %1815 = vmatmul.f32.gmra.mxu0 %v1704
        %v1816 = vpop.f32.mrf.mxu0
        %v1817 = vadd.f32 0.0, %v1816
        %1818 = vmatmul.f32.gmra.mxu0 %v1707
        %v1819 = vpop.f32.mrf.mxu0
        %v1820 = vadd.f32 0.0, %v1819
        %1821 = vmatmul.f32.gmra.mxu0 %v1710
        %v1822 = vpop.f32.mrf.mxu0
        %v1823 = vadd.f32 0.0, %v1822
        %1824 = vmatmul.f32.gmra.mxu0 %v1713
        %v1825 = vpop.f32.mrf.mxu0
        %v1826 = vadd.f32 0.0, %v1825
        %1827 = vmatmul.f32.gmra.mxu0 %v1716
        %v1828 = vpop.f32.mrf.mxu0
        %v1829 = vadd.f32 0.0, %v1828
        %1830 = vmatmul.f32.gmra.mxu0 %v1719
        %v1831 = vpop.f32.mrf.mxu0
        %v1832 = vadd.f32 0.0, %v1831
        %1833 = vmatmul.f32.gmra.mxu0 %v1722
        %v1834 = vpop.f32.mrf.mxu0
        %v1835 = vadd.f32 0.0, %v1834
        %1836 = vmatmul.f32.gmra.mxu0 %v1725
        %v1837 = vpop.f32.mrf.mxu0
        %v1838 = vadd.f32 0.0, %v1837
        %1839 = vmatmul.f32.gmra.mxu0 %v1728
        %v1840 = vpop.f32.mrf.mxu0
        %v1841 = vadd.f32 0.0, %v1840
        %1842 = vmatmul.f32.gmra.mxu0 %v1731
        %v1843 = vpop.f32.mrf.mxu0
        %v1844 = vadd.f32 0.0, %v1843
        %1845 = vmatmul.f32.gmra.mxu0 %v1734
        %v1846 = vpop.f32.mrf.mxu0
        %v1847 = vadd.f32 0.0, %v1846
        %1848 = vmatmul.f32.gmra.mxu0 %v1737
        %v1849 = vpop.f32.mrf.mxu0
        %v1850 = vadd.f32 0.0, %v1849
        %1851 = vmatmul.f32.gmra.mxu0 %v1740
        %v1852 = vpop.f32.mrf.mxu0
        %v1853 = vadd.f32 0.0, %v1852
        %1854 = vmatmul.f32.gmra.mxu0 %v1743
        %v1855 = vpop.f32.mrf.mxu0
        %v1856 = vadd.f32 0.0, %v1855
        %1857 = vmatmul.f32.gmra.mxu0 %v1746
        %v1858 = vpop.f32.mrf.mxu0
        %v1859 = vadd.f32 0.0, %v1858
        %1860 = vmatmul.f32.gmra.mxu0 %v1749
        %v1861 = vpop.f32.mrf.mxu0
        %v1862 = vadd.f32 0.0, %v1861
        %1863 = vdwg.mxu0
        %v1864 = vsel %vm1415, %v1769, 0.0
        %v1865 = vsel %vm1415, %v1772, 0.0
        %v1866 = vadd.f32 %v1864, %v1865
        %v1867 = vsel %vm1415, %v1775, 0.0
        %v1868 = vadd.f32 %v1866, %v1867
        %v1869 = vsel %vm1415, %v1778, 0.0
        %v1870 = vadd.f32 %v1868, %v1869
        %v1871 = vsel %vm1415, %v1781, 0.0
        %v1872 = vadd.f32 %v1870, %v1871
        %v1873 = vsel %vm1415, %v1784, 0.0
        %v1874 = vadd.f32 %v1872, %v1873
        %v1875 = vsel %vm1415, %v1787, 0.0
        %v1876 = vadd.f32 %v1874, %v1875
        %v1877 = vsel %vm1415, %v1790, 0.0
        %v1878 = vadd.f32 %v1876, %v1877
        %v1879 = vsel %vm1415, %v1793, 0.0
        %v1880 = vadd.f32 %v1878, %v1879
        %v1881 = vsel %vm1415, %v1796, 0.0
        %v1882 = vadd.f32 %v1880, %v1881
        %v1883 = vsel %vm1415, %v1799, 0.0
        %v1884 = vadd.f32 %v1882, %v1883
        %v1885 = vsel %vm1415, %v1802, 0.0
        %v1886 = vadd.f32 %v1884, %v1885
        %v1887 = vsel %vm1415, %v1805, 0.0
        %v1888 = vadd.f32 %v1886, %v1887
        %v1889 = vsel %vm1415, %v1808, 0.0
        %v1890 = vadd.f32 %v1888, %v1889
        %v1891 = vsel %vm1415, %v1811, 0.0
        %v1892 = vadd.f32 %v1890, %v1891
        %v1893 = vsel %vm1415, %v1814, 0.0
        %v1894 = vadd.f32 %v1892, %v1893
        %v1895 = vsel %vm1415, %v1817, 0.0
        %v1896 = vadd.f32 %v1894, %v1895
        %v1897 = vsel %vm1415, %v1820, 0.0
        %v1898 = vadd.f32 %v1896, %v1897
        %v1899 = vsel %vm1415, %v1823, 0.0
        %v1900 = vadd.f32 %v1898, %v1899
        %v1901 = vsel %vm1415, %v1826, 0.0
        %v1902 = vadd.f32 %v1900, %v1901
        %v1903 = vsel %vm1415, %v1829, 0.0
        %v1904 = vadd.f32 %v1902, %v1903
        %v1905 = vsel %vm1415, %v1832, 0.0
        %v1906 = vadd.f32 %v1904, %v1905
        %v1907 = vsel %vm1415, %v1835, 0.0
        %v1908 = vadd.f32 %v1906, %v1907
        %v1909 = vsel %vm1415, %v1838, 0.0
        %v1910 = vadd.f32 %v1908, %v1909
        %v1911 = vsel %vm1415, %v1841, 0.0
        %v1912 = vadd.f32 %v1910, %v1911
        %v1913 = vsel %vm1415, %v1844, 0.0
        %v1914 = vadd.f32 %v1912, %v1913
        %v1915 = vsel %vm1415, %v1847, 0.0
        %v1916 = vadd.f32 %v1914, %v1915
        %v1917 = vsel %vm1415, %v1850, 0.0
        %v1918 = vadd.f32 %v1916, %v1917
        %v1919 = vsel %vm1415, %v1853, 0.0
        %v1920 = vadd.f32 %v1918, %v1919
        %v1921 = vsel %vm1415, %v1856, 0.0
        %v1922 = vadd.f32 %v1920, %v1921
        %v1923 = vsel %vm1415, %v1859, 0.0
        %v1924 = vadd.f32 %v1922, %v1923
        %v1925 = vsel %vm1415, %v1862, 0.0
        %v1926 = vadd.f32 %v1924, %v1925
        %v1927 = vrot.slane %v1926, 4
        %v1928 = vadd.f32 %v1926, %v1927
        %v1929 = vrot.slane %v1928, 2
        %v1930 = vadd.f32 %v1928, %v1929
        %v1931 = vrot.slane %v1930, 1
        %v1932 = vadd.f32 %v1930, %v1931
        %v1933 = vadd.f32 %v1485, %v1932
        %v1934 = vmul.f32 %v1769, %v1769
        %v1935 = vmul.f32 %v1772, %v1772
        %v1936 = vmul.f32 %v1775, %v1775
        %v1937 = vmul.f32 %v1778, %v1778
        %v1938 = vmul.f32 %v1781, %v1781
        %v1939 = vmul.f32 %v1784, %v1784
        %v1940 = vmul.f32 %v1787, %v1787
        %v1941 = vmul.f32 %v1790, %v1790
        %v1942 = vmul.f32 %v1793, %v1793
        %v1943 = vmul.f32 %v1796, %v1796
        %v1944 = vmul.f32 %v1799, %v1799
        %v1945 = vmul.f32 %v1802, %v1802
        %v1946 = vmul.f32 %v1805, %v1805
        %v1947 = vmul.f32 %v1808, %v1808
        %v1948 = vmul.f32 %v1811, %v1811
        %v1949 = vmul.f32 %v1814, %v1814
        %v1950 = vmul.f32 %v1817, %v1817
        %v1951 = vmul.f32 %v1820, %v1820
        %v1952 = vmul.f32 %v1823, %v1823
        %v1953 = vmul.f32 %v1826, %v1826
        %v1954 = vmul.f32 %v1829, %v1829
        %v1955 = vmul.f32 %v1832, %v1832
        %v1956 = vmul.f32 %v1835, %v1835
        %v1957 = vmul.f32 %v1838, %v1838
        %v1958 = vmul.f32 %v1841, %v1841
        %v1959 = vmul.f32 %v1844, %v1844
        %v1960 = vmul.f32 %v1847, %v1847
        %v1961 = vmul.f32 %v1850, %v1850
        %v1962 = vmul.f32 %v1853, %v1853
        %v1963 = vmul.f32 %v1856, %v1856
        %v1964 = vmul.f32 %v1859, %v1859
        %v1965 = vmul.f32 %v1862, %v1862
        %v1966 = vsel %vm1415, %v1934, 0.0
        %v1967 = vsel %vm1415, %v1935, 0.0
        %v1968 = vadd.f32 %v1966, %v1967
        %v1969 = vsel %vm1415, %v1936, 0.0
        %v1970 = vadd.f32 %v1968, %v1969
        %v1971 = vsel %vm1415, %v1937, 0.0
        %v1972 = vadd.f32 %v1970, %v1971
        %v1973 = vsel %vm1415, %v1938, 0.0
        %v1974 = vadd.f32 %v1972, %v1973
        %v1975 = vsel %vm1415, %v1939, 0.0
        %v1976 = vadd.f32 %v1974, %v1975
        %v1977 = vsel %vm1415, %v1940, 0.0
        %v1978 = vadd.f32 %v1976, %v1977
        %v1979 = vsel %vm1415, %v1941, 0.0
        %v1980 = vadd.f32 %v1978, %v1979
        %v1981 = vsel %vm1415, %v1942, 0.0
        %v1982 = vadd.f32 %v1980, %v1981
        %v1983 = vsel %vm1415, %v1943, 0.0
        %v1984 = vadd.f32 %v1982, %v1983
        %v1985 = vsel %vm1415, %v1944, 0.0
        %v1986 = vadd.f32 %v1984, %v1985
        %v1987 = vsel %vm1415, %v1945, 0.0
        %v1988 = vadd.f32 %v1986, %v1987
        %v1989 = vsel %vm1415, %v1946, 0.0
        %v1990 = vadd.f32 %v1988, %v1989
        %v1991 = vsel %vm1415, %v1947, 0.0
        %v1992 = vadd.f32 %v1990, %v1991
        %v1993 = vsel %vm1415, %v1948, 0.0
        %v1994 = vadd.f32 %v1992, %v1993
        %v1995 = vsel %vm1415, %v1949, 0.0
        %v1996 = vadd.f32 %v1994, %v1995
        %v1997 = vsel %vm1415, %v1950, 0.0
        %v1998 = vadd.f32 %v1996, %v1997
        %v1999 = vsel %vm1415, %v1951, 0.0
        %v2000 = vadd.f32 %v1998, %v1999
        %v2001 = vsel %vm1415, %v1952, 0.0
        %v2002 = vadd.f32 %v2000, %v2001
        %v2003 = vsel %vm1415, %v1953, 0.0
        %v2004 = vadd.f32 %v2002, %v2003
        %v2005 = vsel %vm1415, %v1954, 0.0
        %v2006 = vadd.f32 %v2004, %v2005
        %v2007 = vsel %vm1415, %v1955, 0.0
        %v2008 = vadd.f32 %v2006, %v2007
        %v2009 = vsel %vm1415, %v1956, 0.0
        %v2010 = vadd.f32 %v2008, %v2009
        %v2011 = vsel %vm1415, %v1957, 0.0
        %v2012 = vadd.f32 %v2010, %v2011
        %v2013 = vsel %vm1415, %v1958, 0.0
        %v2014 = vadd.f32 %v2012, %v2013
        %v2015 = vsel %vm1415, %v1959, 0.0
        %v2016 = vadd.f32 %v2014, %v2015
        %v2017 = vsel %vm1415, %v1960, 0.0
        %v2018 = vadd.f32 %v2016, %v2017
        %v2019 = vsel %vm1415, %v1961, 0.0
        %v2020 = vadd.f32 %v2018, %v2019
        %v2021 = vsel %vm1415, %v1962, 0.0
        %v2022 = vadd.f32 %v2020, %v2021
        %v2023 = vsel %vm1415, %v1963, 0.0
        %v2024 = vadd.f32 %v2022, %v2023
        %v2025 = vsel %vm1415, %v1964, 0.0
        %v2026 = vadd.f32 %v2024, %v2025
        %v2027 = vsel %vm1415, %v1965, 0.0
        %v2028 = vadd.f32 %v2026, %v2027
        %v2029 = vrot.slane %v2028, 4
        %v2030 = vadd.f32 %v2028, %v2029
        %v2031 = vrot.slane %v2030, 2
        %v2032 = vadd.f32 %v2030, %v2031
        %v2033 = vrot.slane %v2032, 1
        %v2034 = vadd.f32 %v2032, %v2033
        %v2035 = vadd.f32 %v1587, %v2034
        %s2036 = scalar_lea.vmem [#allocation3], 256
        %2037 = vst.msk [vmem:[%s2036] sm:$0xff] %vm1415, %v1769
        %2038 = vst.msk [vmem:[%s2036 + $0x8] sm:$0xff] %vm1415, %v1772
        %2039 = vst.msk [vmem:[%s2036 + $0x10] sm:$0xff] %vm1415, %v1775
        %2040 = vst.msk [vmem:[%s2036 + $0x18] sm:$0xff] %vm1415, %v1778
        %2041 = vst.msk [vmem:[%s2036 + $0x20] sm:$0xff] %vm1415, %v1781
        %2042 = vst.msk [vmem:[%s2036 + $0x28] sm:$0xff] %vm1415, %v1784
        %2043 = vst.msk [vmem:[%s2036 + $0x30] sm:$0xff] %vm1415, %v1787
        %2044 = vst.msk [vmem:[%s2036 + $0x38] sm:$0xff] %vm1415, %v1790
        %2045 = vst.msk [vmem:[%s2036 + $0x40] sm:$0xff] %vm1415, %v1793
        %2046 = vst.msk [vmem:[%s2036 + $0x48] sm:$0xff] %vm1415, %v1796
        %2047 = vst.msk [vmem:[%s2036 + $0x50] sm:$0xff] %vm1415, %v1799
        %2048 = vst.msk [vmem:[%s2036 + $0x58] sm:$0xff] %vm1415, %v1802
        %2049 = vst.msk [vmem:[%s2036 + $0x60] sm:$0xff] %vm1415, %v1805
        %2050 = vst.msk [vmem:[%s2036 + $0x68] sm:$0xff] %vm1415, %v1808
        %2051 = vst.msk [vmem:[%s2036 + $0x70] sm:$0xff] %vm1415, %v1811
        %2052 = vst.msk [vmem:[%s2036 + $0x78] sm:$0xff] %vm1415, %v1814
        %2053 = vst.msk [vmem:[%s2036 + $0x80] sm:$0xff] %vm1415, %v1817
        %2054 = vst.msk [vmem:[%s2036 + $0x88] sm:$0xff] %vm1415, %v1820
        %2055 = vst.msk [vmem:[%s2036 + $0x90] sm:$0xff] %vm1415, %v1823
        %2056 = vst.msk [vmem:[%s2036 + $0x98] sm:$0xff] %vm1415, %v1826
        %2057 = vst.msk [vmem:[%s2036 + $0xa0] sm:$0xff] %vm1415, %v1829
        %2058 = vst.msk [vmem:[%s2036 + $0xa8] sm:$0xff] %vm1415, %v1832
        %2059 = vst.msk [vmem:[%s2036 + $0xb0] sm:$0xff] %vm1415, %v1835
        %2060 = vst.msk [vmem:[%s2036 + $0xb8] sm:$0xff] %vm1415, %v1838
        %2061 = vst.msk [vmem:[%s2036 + $0xc0] sm:$0xff] %vm1415, %v1841
        %2062 = vst.msk [vmem:[%s2036 + $0xc8] sm:$0xff] %vm1415, %v1844
        %2063 = vst.msk [vmem:[%s2036 + $0xd0] sm:$0xff] %vm1415, %v1847
        %2064 = vst.msk [vmem:[%s2036 + $0xd8] sm:$0xff] %vm1415, %v1850
        %2065 = vst.msk [vmem:[%s2036 + $0xe0] sm:$0xff] %vm1415, %v1853
        %2066 = vst.msk [vmem:[%s2036 + $0xe8] sm:$0xff] %vm1415, %v1856
        %2067 = vst.msk [vmem:[%s2036 + $0xf0] sm:$0xff] %vm1415, %v1859
        %2068 = vst.msk [vmem:[%s2036 + $0xf8] sm:$0xff] %vm1415, %v1862
        %s2069 = scalar_lea.vmem [#allocation2], 24
        %v2070 = vld [vmem:[%s2069] sm:$0xff]
        %v2071 = vld [vmem:[%s2069 + $0x8] sm:$0xff]
        %v2072 = vld [vmem:[%s2069 + $0x18] sm:$0xff]
        %v2073 = vld [vmem:[%s2069 + $0x20] sm:$0xff]
        %v2074 = vld [vmem:[%s2069 + $0x30] sm:$0xff]
        %v2075 = vld [vmem:[%s2069 + $0x38] sm:$0xff]
        %v2076 = vld [vmem:[%s2069 + $0x48] sm:$0xff]
        %v2077 = vld [vmem:[%s2069 + $0x50] sm:$0xff]
        %v2078 = vld [vmem:[%s2069 + $0x60] sm:$0xff]
        %v2079 = vld [vmem:[%s2069 + $0x68] sm:$0xff]
        %v2080 = vld [vmem:[%s2069 + $0x78] sm:$0xff]
        %v2081 = vld [vmem:[%s2069 + $0x80] sm:$0xff]
        %v2082 = vld [vmem:[%s2069 + $0x90] sm:$0xff]
        %v2083 = vld [vmem:[%s2069 + $0x98] sm:$0xff]
        %v2084 = vld [vmem:[%s2069 + $0xa8] sm:$0xff]
        %v2085 = vld [vmem:[%s2069 + $0xb0] sm:$0xff]
        %v2086 = vld [vmem:[%s2069 + $0xc0] sm:$0xff]
        %v2087 = vld [vmem:[%s2069 + $0xc8] sm:$0xff]
        %v2088 = vld [vmem:[%s2069 + $0xd8] sm:$0xff]
        %v2089 = vld [vmem:[%s2069 + $0xe0] sm:$0xff]
        %v2090 = vld [vmem:[%s2069 + $0xf0] sm:$0xff]
        %v2091 = vld [vmem:[%s2069 + $0xf8] sm:$0xff]
        %v2092 = vld [vmem:[%s2069 + $0x108] sm:$0xff]
        %v2093 = vld [vmem:[%s2069 + $0x110] sm:$0xff]
        %v2094 = vld [vmem:[%s2069 + $0x120] sm:$0xff]
        %v2095 = vld [vmem:[%s2069 + $0x128] sm:$0xff]
        %v2096 = vld [vmem:[%s2069 + $0x138] sm:$0xff]
        %v2097 = vld [vmem:[%s2069 + $0x140] sm:$0xff]
        %v2098 = vld [vmem:[%s2069 + $0x150] sm:$0xff]
        %v2099 = vld [vmem:[%s2069 + $0x158] sm:$0xff]
        %v2100 = vld [vmem:[%s2069 + $0x168] sm:$0xff]
        %v2101 = vld [vmem:[%s2069 + $0x170] sm:$0xff]
        %s2102 = scalar_lea.vmem %s1, 32
        %v2103 = vld [vmem:[%s2102] sm:$0xff]
        %v2104 = vld [vmem:[%s2102 + $0x8] sm:$0xff]
        %v2106 = vsel %vm1205, %v2070, 0
        %v2109 = vsel %vm1205, %v2071, 0
        %v2112 = vsel %vm1205, %v2072, 0
        %v2115 = vsel %vm1205, %v2073, 0
        %v2118 = vsel %vm1205, %v2074, 0
        %v2121 = vsel %vm1205, %v2075, 0
        %v2124 = vsel %vm1205, %v2076, 0
        %v2127 = vsel %vm1205, %v2077, 0
        %v2130 = vsel %vm1205, %v2078, 0
        %v2133 = vsel %vm1205, %v2079, 0
        %v2136 = vsel %vm1205, %v2080, 0
        %v2139 = vsel %vm1205, %v2081, 0
        %v2142 = vsel %vm1205, %v2082, 0
        %v2145 = vsel %vm1205, %v2083, 0
        %v2148 = vsel %vm1205, %v2084, 0
        %v2151 = vsel %vm1205, %v2085, 0
        %v2154 = vsel %vm1205, %v2086, 0
        %v2157 = vsel %vm1205, %v2087, 0
        %v2160 = vsel %vm1205, %v2088, 0
        %v2163 = vsel %vm1205, %v2089, 0
        %v2166 = vsel %vm1205, %v2090, 0
        %v2169 = vsel %vm1205, %v2091, 0
        %v2172 = vsel %vm1205, %v2092, 0
        %v2175 = vsel %vm1205, %v2093, 0
        %v2178 = vsel %vm1205, %v2094, 0
        %v2181 = vsel %vm1205, %v2095, 0
        %v2184 = vsel %vm1205, %v2096, 0
        %v2187 = vsel %vm1205, %v2097, 0
        %v2190 = vsel %vm1205, %v2098, 0
        %v2193 = vsel %vm1205, %v2099, 0
        %v2196 = vsel %vm1205, %v2100, 0
        %v2199 = vsel %vm1205, %v2101, 0
        %2201 = vmatpush.msra.mxu0 0.0
        %2202 = vmatpush.msra.mxu0 0.0
        %2203 = vmatpush.msra.mxu0 0.0
        %2204 = vmatpush.msra.mxu0 0.0
        %2205 = vmatpush.msra.mxu0 0.0
        %2206 = vmatpush.msra.mxu0 0.0
        %2207 = vmatpush.msra.mxu0 0.0
        %2208 = vmatpush.msra.mxu0 0.0
        %2209 = vmatpush.msra.mxu0 0.0
        %2210 = vmatpush.msra.mxu0 0.0
        %2211 = vmatpush.msra.mxu0 0.0
        %2212 = vmatpush.msra.mxu0 0.0
        %2213 = vmatpush.msra.mxu0 0.0
        %2214 = vmatpush.msra.mxu0 0.0
        %2215 = vmatpush.msra.mxu0 %v2104
        %2216 = vmatpush.msra.mxu0 %v2103
        %2217 = vmatmul.f32.gmra.mxu0 %v2106
        %v2218 = vpop.f32.mrf.mxu0
        %v2219 = vadd.f32 0.0, %v2218
        %2220 = vmatmul.f32.gmra.mxu0 %v2109
        %v2221 = vpop.f32.mrf.mxu0
        %v2222 = vadd.f32 0.0, %v2221
        %2223 = vmatmul.f32.gmra.mxu0 %v2112
        %v2224 = vpop.f32.mrf.mxu0
        %v2225 = vadd.f32 0.0, %v2224
        %2226 = vmatmul.f32.gmra.mxu0 %v2115
        %v2227 = vpop.f32.mrf.mxu0
        %v2228 = vadd.f32 0.0, %v2227
        %2229 = vmatmul.f32.gmra.mxu0 %v2118
        %v2230 = vpop.f32.mrf.mxu0
        %v2231 = vadd.f32 0.0, %v2230
        %2232 = vmatmul.f32.gmra.mxu0 %v2121
        %v2233 = vpop.f32.mrf.mxu0
        %v2234 = vadd.f32 0.0, %v2233
        %2235 = vmatmul.f32.gmra.mxu0 %v2124
        %v2236 = vpop.f32.mrf.mxu0
        %v2237 = vadd.f32 0.0, %v2236
        %2238 = vmatmul.f32.gmra.mxu0 %v2127
        %v2239 = vpop.f32.mrf.mxu0
        %v2240 = vadd.f32 0.0, %v2239
        %2241 = vmatmul.f32.gmra.mxu0 %v2130
        %v2242 = vpop.f32.mrf.mxu0
        %v2243 = vadd.f32 0.0, %v2242
        %2244 = vmatmul.f32.gmra.mxu0 %v2133
        %v2245 = vpop.f32.mrf.mxu0
        %v2246 = vadd.f32 0.0, %v2245
        %2247 = vmatmul.f32.gmra.mxu0 %v2136
        %v2248 = vpop.f32.mrf.mxu0
        %v2249 = vadd.f32 0.0, %v2248
        %2250 = vmatmul.f32.gmra.mxu0 %v2139
        %v2251 = vpop.f32.mrf.mxu0
        %v2252 = vadd.f32 0.0, %v2251
        %2253 = vmatmul.f32.gmra.mxu0 %v2142
        %v2254 = vpop.f32.mrf.mxu0
        %v2255 = vadd.f32 0.0, %v2254
        %2256 = vmatmul.f32.gmra.mxu0 %v2145
        %v2257 = vpop.f32.mrf.mxu0
        %v2258 = vadd.f32 0.0, %v2257
        %2259 = vmatmul.f32.gmra.mxu0 %v2148
        %v2260 = vpop.f32.mrf.mxu0
        %v2261 = vadd.f32 0.0, %v2260
        %2262 = vmatmul.f32.gmra.mxu0 %v2151
        %v2263 = vpop.f32.mrf.mxu0
        %v2264 = vadd.f32 0.0, %v2263
        %2265 = vmatmul.f32.gmra.mxu0 %v2154
        %v2266 = vpop.f32.mrf.mxu0
        %v2267 = vadd.f32 0.0, %v2266
        %2268 = vmatmul.f32.gmra.mxu0 %v2157
        %v2269 = vpop.f32.mrf.mxu0
        %v2270 = vadd.f32 0.0, %v2269
        %2271 = vmatmul.f32.gmra.mxu0 %v2160
        %v2272 = vpop.f32.mrf.mxu0
        %v2273 = vadd.f32 0.0, %v2272
        %2274 = vmatmul.f32.gmra.mxu0 %v2163
        %v2275 = vpop.f32.mrf.mxu0
        %v2276 = vadd.f32 0.0, %v2275
        %2277 = vmatmul.f32.gmra.mxu0 %v2166
        %v2278 = vpop.f32.mrf.mxu0
        %v2279 = vadd.f32 0.0, %v2278
        %2280 = vmatmul.f32.gmra.mxu0 %v2169
        %v2281 = vpop.f32.mrf.mxu0
        %v2282 = vadd.f32 0.0, %v2281
        %2283 = vmatmul.f32.gmra.mxu0 %v2172
        %v2284 = vpop.f32.mrf.mxu0
        %v2285 = vadd.f32 0.0, %v2284
        %2286 = vmatmul.f32.gmra.mxu0 %v2175
        %v2287 = vpop.f32.mrf.mxu0
        %v2288 = vadd.f32 0.0, %v2287
        %2289 = vmatmul.f32.gmra.mxu0 %v2178
        %v2290 = vpop.f32.mrf.mxu0
        %v2291 = vadd.f32 0.0, %v2290
        %2292 = vmatmul.f32.gmra.mxu0 %v2181
        %v2293 = vpop.f32.mrf.mxu0
        %v2294 = vadd.f32 0.0, %v2293
        %2295 = vmatmul.f32.gmra.mxu0 %v2184
        %v2296 = vpop.f32.mrf.mxu0
        %v2297 = vadd.f32 0.0, %v2296
        %2298 = vmatmul.f32.gmra.mxu0 %v2187
        %v2299 = vpop.f32.mrf.mxu0
        %v2300 = vadd.f32 0.0, %v2299
        %2301 = vmatmul.f32.gmra.mxu0 %v2190
        %v2302 = vpop.f32.mrf.mxu0
        %v2303 = vadd.f32 0.0, %v2302
        %2304 = vmatmul.f32.gmra.mxu0 %v2193
        %v2305 = vpop.f32.mrf.mxu0
        %v2306 = vadd.f32 0.0, %v2305
        %2307 = vmatmul.f32.gmra.mxu0 %v2196
        %v2308 = vpop.f32.mrf.mxu0
        %v2309 = vadd.f32 0.0, %v2308
        %2310 = vmatmul.f32.gmra.mxu0 %v2199
        %v2311 = vpop.f32.mrf.mxu0
        %v2312 = vadd.f32 0.0, %v2311
        %2313 = vdwg.mxu0
        %v2314 = vsel %vm1415, %v2219, 0.0
        %v2315 = vsel %vm1415, %v2222, 0.0
        %v2316 = vadd.f32 %v2314, %v2315
        %v2317 = vsel %vm1415, %v2225, 0.0
        %v2318 = vadd.f32 %v2316, %v2317
        %v2319 = vsel %vm1415, %v2228, 0.0
        %v2320 = vadd.f32 %v2318, %v2319
        %v2321 = vsel %vm1415, %v2231, 0.0
        %v2322 = vadd.f32 %v2320, %v2321
        %v2323 = vsel %vm1415, %v2234, 0.0
        %v2324 = vadd.f32 %v2322, %v2323
        %v2325 = vsel %vm1415, %v2237, 0.0
        %v2326 = vadd.f32 %v2324, %v2325
        %v2327 = vsel %vm1415, %v2240, 0.0
        %v2328 = vadd.f32 %v2326, %v2327
        %v2329 = vsel %vm1415, %v2243, 0.0
        %v2330 = vadd.f32 %v2328, %v2329
        %v2331 = vsel %vm1415, %v2246, 0.0
        %v2332 = vadd.f32 %v2330, %v2331
        %v2333 = vsel %vm1415, %v2249, 0.0
        %v2334 = vadd.f32 %v2332, %v2333
        %v2335 = vsel %vm1415, %v2252, 0.0
        %v2336 = vadd.f32 %v2334, %v2335
        %v2337 = vsel %vm1415, %v2255, 0.0
        %v2338 = vadd.f32 %v2336, %v2337
        %v2339 = vsel %vm1415, %v2258, 0.0
        %v2340 = vadd.f32 %v2338, %v2339
        %v2341 = vsel %vm1415, %v2261, 0.0
        %v2342 = vadd.f32 %v2340, %v2341
        %v2343 = vsel %vm1415, %v2264, 0.0
        %v2344 = vadd.f32 %v2342, %v2343
        %v2345 = vsel %vm1415, %v2267, 0.0
        %v2346 = vadd.f32 %v2344, %v2345
        %v2347 = vsel %vm1415, %v2270, 0.0
        %v2348 = vadd.f32 %v2346, %v2347
        %v2349 = vsel %vm1415, %v2273, 0.0
        %v2350 = vadd.f32 %v2348, %v2349
        %v2351 = vsel %vm1415, %v2276, 0.0
        %v2352 = vadd.f32 %v2350, %v2351
        %v2353 = vsel %vm1415, %v2279, 0.0
        %v2354 = vadd.f32 %v2352, %v2353
        %v2355 = vsel %vm1415, %v2282, 0.0
        %v2356 = vadd.f32 %v2354, %v2355
        %v2357 = vsel %vm1415, %v2285, 0.0
        %v2358 = vadd.f32 %v2356, %v2357
        %v2359 = vsel %vm1415, %v2288, 0.0
        %v2360 = vadd.f32 %v2358, %v2359
        %v2361 = vsel %vm1415, %v2291, 0.0
        %v2362 = vadd.f32 %v2360, %v2361
        %v2363 = vsel %vm1415, %v2294, 0.0
        %v2364 = vadd.f32 %v2362, %v2363
        %v2365 = vsel %vm1415, %v2297, 0.0
        %v2366 = vadd.f32 %v2364, %v2365
        %v2367 = vsel %vm1415, %v2300, 0.0
        %v2368 = vadd.f32 %v2366, %v2367
        %v2369 = vsel %vm1415, %v2303, 0.0
        %v2370 = vadd.f32 %v2368, %v2369
        %v2371 = vsel %vm1415, %v2306, 0.0
        %v2372 = vadd.f32 %v2370, %v2371
        %v2373 = vsel %vm1415, %v2309, 0.0
        %v2374 = vadd.f32 %v2372, %v2373
        %v2375 = vsel %vm1415, %v2312, 0.0
        %v2376 = vadd.f32 %v2374, %v2375
        %v2377 = vrot.slane %v2376, 4
        %v2378 = vadd.f32 %v2376, %v2377
        %v2379 = vrot.slane %v2378, 2
        %v2380 = vadd.f32 %v2378, %v2379
        %v2381 = vrot.slane %v2380, 1
        %v2382 = vadd.f32 %v2380, %v2381
        %v2383 = vadd.f32 %v1933, %v2382
        %v2384 = vmul.f32 %v2219, %v2219
        %v2385 = vmul.f32 %v2222, %v2222
        %v2386 = vmul.f32 %v2225, %v2225
        %v2387 = vmul.f32 %v2228, %v2228
        %v2388 = vmul.f32 %v2231, %v2231
        %v2389 = vmul.f32 %v2234, %v2234
        %v2390 = vmul.f32 %v2237, %v2237
        %v2391 = vmul.f32 %v2240, %v2240
        %v2392 = vmul.f32 %v2243, %v2243
        %v2393 = vmul.f32 %v2246, %v2246
        %v2394 = vmul.f32 %v2249, %v2249
        %v2395 = vmul.f32 %v2252, %v2252
        %v2396 = vmul.f32 %v2255, %v2255
        %v2397 = vmul.f32 %v2258, %v2258
        %v2398 = vmul.f32 %v2261, %v2261
        %v2399 = vmul.f32 %v2264, %v2264
        %v2400 = vmul.f32 %v2267, %v2267
        %v2401 = vmul.f32 %v2270, %v2270
        %v2402 = vmul.f32 %v2273, %v2273
        %v2403 = vmul.f32 %v2276, %v2276
        %v2404 = vmul.f32 %v2279, %v2279
        %v2405 = vmul.f32 %v2282, %v2282
        %v2406 = vmul.f32 %v2285, %v2285
        %v2407 = vmul.f32 %v2288, %v2288
        %v2408 = vmul.f32 %v2291, %v2291
        %v2409 = vmul.f32 %v2294, %v2294
        %v2410 = vmul.f32 %v2297, %v2297
        %v2411 = vmul.f32 %v2300, %v2300
        %v2412 = vmul.f32 %v2303, %v2303
        %v2413 = vmul.f32 %v2306, %v2306
        %v2414 = vmul.f32 %v2309, %v2309
        %v2415 = vmul.f32 %v2312, %v2312
        %v2416 = vsel %vm1415, %v2384, 0.0
        %v2417 = vsel %vm1415, %v2385, 0.0
        %v2418 = vadd.f32 %v2416, %v2417
        %v2419 = vsel %vm1415, %v2386, 0.0
        %v2420 = vadd.f32 %v2418, %v2419
        %v2421 = vsel %vm1415, %v2387, 0.0
        %v2422 = vadd.f32 %v2420, %v2421
        %v2423 = vsel %vm1415, %v2388, 0.0
        %v2424 = vadd.f32 %v2422, %v2423
        %v2425 = vsel %vm1415, %v2389, 0.0
        %v2426 = vadd.f32 %v2424, %v2425
        %v2427 = vsel %vm1415, %v2390, 0.0
        %v2428 = vadd.f32 %v2426, %v2427
        %v2429 = vsel %vm1415, %v2391, 0.0
        %v2430 = vadd.f32 %v2428, %v2429
        %v2431 = vsel %vm1415, %v2392, 0.0
        %v2432 = vadd.f32 %v2430, %v2431
        %v2433 = vsel %vm1415, %v2393, 0.0
        %v2434 = vadd.f32 %v2432, %v2433
        %v2435 = vsel %vm1415, %v2394, 0.0
        %v2436 = vadd.f32 %v2434, %v2435
        %v2437 = vsel %vm1415, %v2395, 0.0
        %v2438 = vadd.f32 %v2436, %v2437
        %v2439 = vsel %vm1415, %v2396, 0.0
        %v2440 = vadd.f32 %v2438, %v2439
        %v2441 = vsel %vm1415, %v2397, 0.0
        %v2442 = vadd.f32 %v2440, %v2441
        %v2443 = vsel %vm1415, %v2398, 0.0
        %v2444 = vadd.f32 %v2442, %v2443
        %v2445 = vsel %vm1415, %v2399, 0.0
        %v2446 = vadd.f32 %v2444, %v2445
        %v2447 = vsel %vm1415, %v2400, 0.0
        %v2448 = vadd.f32 %v2446, %v2447
        %v2449 = vsel %vm1415, %v2401, 0.0
        %v2450 = vadd.f32 %v2448, %v2449
        %v2451 = vsel %vm1415, %v2402, 0.0
        %v2452 = vadd.f32 %v2450, %v2451
        %v2453 = vsel %vm1415, %v2403, 0.0
        %v2454 = vadd.f32 %v2452, %v2453
        %v2455 = vsel %vm1415, %v2404, 0.0
        %v2456 = vadd.f32 %v2454, %v2455
        %v2457 = vsel %vm1415, %v2405, 0.0
        %v2458 = vadd.f32 %v2456, %v2457
        %v2459 = vsel %vm1415, %v2406, 0.0
        %v2460 = vadd.f32 %v2458, %v2459
        %v2461 = vsel %vm1415, %v2407, 0.0
        %v2462 = vadd.f32 %v2460, %v2461
        %v2463 = vsel %vm1415, %v2408, 0.0
        %v2464 = vadd.f32 %v2462, %v2463
        %v2465 = vsel %vm1415, %v2409, 0.0
        %v2466 = vadd.f32 %v2464, %v2465
        %v2467 = vsel %vm1415, %v2410, 0.0
        %v2468 = vadd.f32 %v2466, %v2467
        %v2469 = vsel %vm1415, %v2411, 0.0
        %v2470 = vadd.f32 %v2468, %v2469
        %v2471 = vsel %vm1415, %v2412, 0.0
        %v2472 = vadd.f32 %v2470, %v2471
        %v2473 = vsel %vm1415, %v2413, 0.0
        %v2474 = vadd.f32 %v2472, %v2473
        %v2475 = vsel %vm1415, %v2414, 0.0
        %v2476 = vadd.f32 %v2474, %v2475
        %v2477 = vsel %vm1415, %v2415, 0.0
        %v2478 = vadd.f32 %v2476, %v2477
        %v2479 = vrot.slane %v2478, 4
        %v2480 = vadd.f32 %v2478, %v2479
        %v2481 = vrot.slane %v2480, 2
        %v2482 = vadd.f32 %v2480, %v2481
        %v2483 = vrot.slane %v2482, 1
        %v2484 = vadd.f32 %v2482, %v2483
        %v2485 = vadd.f32 %v2035, %v2484
        %s2486 = scalar_lea.vmem [#allocation3], 512
        %2487 = vst.msk [vmem:[%s2486] sm:$0xff] %vm1415, %v2219
        %2488 = vst.msk [vmem:[%s2486 + $0x8] sm:$0xff] %vm1415, %v2222
        %2489 = vst.msk [vmem:[%s2486 + $0x10] sm:$0xff] %vm1415, %v2225
        %2490 = vst.msk [vmem:[%s2486 + $0x18] sm:$0xff] %vm1415, %v2228
        %2491 = vst.msk [vmem:[%s2486 + $0x20] sm:$0xff] %vm1415, %v2231
        %2492 = vst.msk [vmem:[%s2486 + $0x28] sm:$0xff] %vm1415, %v2234
        %2493 = vst.msk [vmem:[%s2486 + $0x30] sm:$0xff] %vm1415, %v2237
        %2494 = vst.msk [vmem:[%s2486 + $0x38] sm:$0xff] %vm1415, %v2240
        %2495 = vst.msk [vmem:[%s2486 + $0x40] sm:$0xff] %vm1415, %v2243
        %2496 = vst.msk [vmem:[%s2486 + $0x48] sm:$0xff] %vm1415, %v2246
        %2497 = vst.msk [vmem:[%s2486 + $0x50] sm:$0xff] %vm1415, %v2249
        %2498 = vst.msk [vmem:[%s2486 + $0x58] sm:$0xff] %vm1415, %v2252
        %2499 = vst.msk [vmem:[%s2486 + $0x60] sm:$0xff] %vm1415, %v2255
        %2500 = vst.msk [vmem:[%s2486 + $0x68] sm:$0xff] %vm1415, %v2258
        %2501 = vst.msk [vmem:[%s2486 + $0x70] sm:$0xff] %vm1415, %v2261
        %2502 = vst.msk [vmem:[%s2486 + $0x78] sm:$0xff] %vm1415, %v2264
        %2503 = vst.msk [vmem:[%s2486 + $0x80] sm:$0xff] %vm1415, %v2267
        %2504 = vst.msk [vmem:[%s2486 + $0x88] sm:$0xff] %vm1415, %v2270
        %2505 = vst.msk [vmem:[%s2486 + $0x90] sm:$0xff] %vm1415, %v2273
        %2506 = vst.msk [vmem:[%s2486 + $0x98] sm:$0xff] %vm1415, %v2276
        %2507 = vst.msk [vmem:[%s2486 + $0xa0] sm:$0xff] %vm1415, %v2279
        %2508 = vst.msk [vmem:[%s2486 + $0xa8] sm:$0xff] %vm1415, %v2282
        %2509 = vst.msk [vmem:[%s2486 + $0xb0] sm:$0xff] %vm1415, %v2285
        %2510 = vst.msk [vmem:[%s2486 + $0xb8] sm:$0xff] %vm1415, %v2288
        %2511 = vst.msk [vmem:[%s2486 + $0xc0] sm:$0xff] %vm1415, %v2291
        %2512 = vst.msk [vmem:[%s2486 + $0xc8] sm:$0xff] %vm1415, %v2294
        %2513 = vst.msk [vmem:[%s2486 + $0xd0] sm:$0xff] %vm1415, %v2297
        %2514 = vst.msk [vmem:[%s2486 + $0xd8] sm:$0xff] %vm1415, %v2300
        %2515 = vst.msk [vmem:[%s2486 + $0xe0] sm:$0xff] %vm1415, %v2303
        %2516 = vst.msk [vmem:[%s2486 + $0xe8] sm:$0xff] %vm1415, %v2306
        %2517 = vst.msk [vmem:[%s2486 + $0xf0] sm:$0xff] %vm1415, %v2309
        %2518 = vst.msk [vmem:[%s2486 + $0xf8] sm:$0xff] %vm1415, %v2312
        %v2519 = vld [vmem:[%s2069 + $0x1] sm:$0xff]
        %v2520 = vld [vmem:[%s2069 + $0x9] sm:$0xff]
        %v2521 = vld [vmem:[%s2069 + $0x19] sm:$0xff]
        %v2522 = vld [vmem:[%s2069 + $0x21] sm:$0xff]
        %v2523 = vld [vmem:[%s2069 + $0x31] sm:$0xff]
        %v2524 = vld [vmem:[%s2069 + $0x39] sm:$0xff]
        %v2525 = vld [vmem:[%s2069 + $0x49] sm:$0xff]
        %v2526 = vld [vmem:[%s2069 + $0x51] sm:$0xff]
        %v2527 = vld [vmem:[%s2069 + $0x61] sm:$0xff]
        %v2528 = vld [vmem:[%s2069 + $0x69] sm:$0xff]
        %v2529 = vld [vmem:[%s2069 + $0x79] sm:$0xff]
        %v2530 = vld [vmem:[%s2069 + $0x81] sm:$0xff]
        %v2531 = vld [vmem:[%s2069 + $0x91] sm:$0xff]
        %v2532 = vld [vmem:[%s2069 + $0x99] sm:$0xff]
        %v2533 = vld [vmem:[%s2069 + $0xa9] sm:$0xff]
        %v2534 = vld [vmem:[%s2069 + $0xb1] sm:$0xff]
        %v2535 = vld [vmem:[%s2069 + $0xc1] sm:$0xff]
        %v2536 = vld [vmem:[%s2069 + $0xc9] sm:$0xff]
        %v2537 = vld [vmem:[%s2069 + $0xd9] sm:$0xff]
        %v2538 = vld [vmem:[%s2069 + $0xe1] sm:$0xff]
        %v2539 = vld [vmem:[%s2069 + $0xf1] sm:$0xff]
        %v2540 = vld [vmem:[%s2069 + $0xf9] sm:$0xff]
        %v2541 = vld [vmem:[%s2069 + $0x109] sm:$0xff]
        %v2542 = vld [vmem:[%s2069 + $0x111] sm:$0xff]
        %v2543 = vld [vmem:[%s2069 + $0x121] sm:$0xff]
        %v2544 = vld [vmem:[%s2069 + $0x129] sm:$0xff]
        %v2545 = vld [vmem:[%s2069 + $0x139] sm:$0xff]
        %v2546 = vld [vmem:[%s2069 + $0x141] sm:$0xff]
        %v2547 = vld [vmem:[%s2069 + $0x151] sm:$0xff]
        %v2548 = vld [vmem:[%s2069 + $0x159] sm:$0xff]
        %v2549 = vld [vmem:[%s2069 + $0x169] sm:$0xff]
        %v2550 = vld [vmem:[%s2069 + $0x171] sm:$0xff]
        %s2551 = scalar_lea.vmem %s1, 48
        %v2552 = vld [vmem:[%s2551] sm:$0xff]
        %v2553 = vld [vmem:[%s2551 + $0x8] sm:$0xff]
        %v2555 = vsel %vm1205, %v2519, 0
        %v2558 = vsel %vm1205, %v2520, 0
        %v2561 = vsel %vm1205, %v2521, 0
        %v2564 = vsel %vm1205, %v2522, 0
        %v2567 = vsel %vm1205, %v2523, 0
        %v2570 = vsel %vm1205, %v2524, 0
        %v2573 = vsel %vm1205, %v2525, 0
        %v2576 = vsel %vm1205, %v2526, 0
        %v2579 = vsel %vm1205, %v2527, 0
        %v2582 = vsel %vm1205, %v2528, 0
        %v2585 = vsel %vm1205, %v2529, 0
        %v2588 = vsel %vm1205, %v2530, 0
        %v2591 = vsel %vm1205, %v2531, 0
        %v2594 = vsel %vm1205, %v2532, 0
        %v2597 = vsel %vm1205, %v2533, 0
        %v2600 = vsel %vm1205, %v2534, 0
        %v2603 = vsel %vm1205, %v2535, 0
        %v2606 = vsel %vm1205, %v2536, 0
        %v2609 = vsel %vm1205, %v2537, 0
        %v2612 = vsel %vm1205, %v2538, 0
        %v2615 = vsel %vm1205, %v2539, 0
        %v2618 = vsel %vm1205, %v2540, 0
        %v2621 = vsel %vm1205, %v2541, 0
        %v2624 = vsel %vm1205, %v2542, 0
        %v2627 = vsel %vm1205, %v2543, 0
        %v2630 = vsel %vm1205, %v2544, 0
        %v2633 = vsel %vm1205, %v2545, 0
        %v2636 = vsel %vm1205, %v2546, 0
        %v2639 = vsel %vm1205, %v2547, 0
        %v2642 = vsel %vm1205, %v2548, 0
        %v2645 = vsel %vm1205, %v2549, 0
        %v2648 = vsel %vm1205, %v2550, 0
        %2650 = vmatpush.msra.mxu0 0.0
        %2651 = vmatpush.msra.mxu0 0.0
        %2652 = vmatpush.msra.mxu0 0.0
        %2653 = vmatpush.msra.mxu0 0.0
        %2654 = vmatpush.msra.mxu0 0.0
        %2655 = vmatpush.msra.mxu0 0.0
        %2656 = vmatpush.msra.mxu0 0.0
        %2657 = vmatpush.msra.mxu0 0.0
        %2658 = vmatpush.msra.mxu0 0.0
        %2659 = vmatpush.msra.mxu0 0.0
        %2660 = vmatpush.msra.mxu0 0.0
        %2661 = vmatpush.msra.mxu0 0.0
        %2662 = vmatpush.msra.mxu0 0.0
        %2663 = vmatpush.msra.mxu0 0.0
        %2664 = vmatpush.msra.mxu0 %v2553
        %2665 = vmatpush.msra.mxu0 %v2552
        %2666 = vmatmul.f32.gmra.mxu0 %v2555
        %v2667 = vpop.f32.mrf.mxu0
        %v2668 = vadd.f32 0.0, %v2667
        %2669 = vmatmul.f32.gmra.mxu0 %v2558
        %v2670 = vpop.f32.mrf.mxu0
        %v2671 = vadd.f32 0.0, %v2670
        %2672 = vmatmul.f32.gmra.mxu0 %v2561
        %v2673 = vpop.f32.mrf.mxu0
        %v2674 = vadd.f32 0.0, %v2673
        %2675 = vmatmul.f32.gmra.mxu0 %v2564
        %v2676 = vpop.f32.mrf.mxu0
        %v2677 = vadd.f32 0.0, %v2676
        %2678 = vmatmul.f32.gmra.mxu0 %v2567
        %v2679 = vpop.f32.mrf.mxu0
        %v2680 = vadd.f32 0.0, %v2679
        %2681 = vmatmul.f32.gmra.mxu0 %v2570
        %v2682 = vpop.f32.mrf.mxu0
        %v2683 = vadd.f32 0.0, %v2682
        %2684 = vmatmul.f32.gmra.mxu0 %v2573
        %v2685 = vpop.f32.mrf.mxu0
        %v2686 = vadd.f32 0.0, %v2685
        %2687 = vmatmul.f32.gmra.mxu0 %v2576
        %v2688 = vpop.f32.mrf.mxu0
        %v2689 = vadd.f32 0.0, %v2688
        %2690 = vmatmul.f32.gmra.mxu0 %v2579
        %v2691 = vpop.f32.mrf.mxu0
        %v2692 = vadd.f32 0.0, %v2691
        %2693 = vmatmul.f32.gmra.mxu0 %v2582
        %v2694 = vpop.f32.mrf.mxu0
        %v2695 = vadd.f32 0.0, %v2694
        %2696 = vmatmul.f32.gmra.mxu0 %v2585
        %v2697 = vpop.f32.mrf.mxu0
        %v2698 = vadd.f32 0.0, %v2697
        %2699 = vmatmul.f32.gmra.mxu0 %v2588
        %v2700 = vpop.f32.mrf.mxu0
        %v2701 = vadd.f32 0.0, %v2700
        %2702 = vmatmul.f32.gmra.mxu0 %v2591
        %v2703 = vpop.f32.mrf.mxu0
        %v2704 = vadd.f32 0.0, %v2703
        %2705 = vmatmul.f32.gmra.mxu0 %v2594
        %v2706 = vpop.f32.mrf.mxu0
        %v2707 = vadd.f32 0.0, %v2706
        %2708 = vmatmul.f32.gmra.mxu0 %v2597
        %v2709 = vpop.f32.mrf.mxu0
        %v2710 = vadd.f32 0.0, %v2709
        %2711 = vmatmul.f32.gmra.mxu0 %v2600
        %v2712 = vpop.f32.mrf.mxu0
        %v2713 = vadd.f32 0.0, %v2712
        %2714 = vmatmul.f32.gmra.mxu0 %v2603
        %v2715 = vpop.f32.mrf.mxu0
        %v2716 = vadd.f32 0.0, %v2715
        %2717 = vmatmul.f32.gmra.mxu0 %v2606
        %v2718 = vpop.f32.mrf.mxu0
        %v2719 = vadd.f32 0.0, %v2718
        %2720 = vmatmul.f32.gmra.mxu0 %v2609
        %v2721 = vpop.f32.mrf.mxu0
        %v2722 = vadd.f32 0.0, %v2721
        %2723 = vmatmul.f32.gmra.mxu0 %v2612
        %v2724 = vpop.f32.mrf.mxu0
        %v2725 = vadd.f32 0.0, %v2724
        %2726 = vmatmul.f32.gmra.mxu0 %v2615
        %v2727 = vpop.f32.mrf.mxu0
        %v2728 = vadd.f32 0.0, %v2727
        %2729 = vmatmul.f32.gmra.mxu0 %v2618
        %v2730 = vpop.f32.mrf.mxu0
        %v2731 = vadd.f32 0.0, %v2730
        %2732 = vmatmul.f32.gmra.mxu0 %v2621
        %v2733 = vpop.f32.mrf.mxu0
        %v2734 = vadd.f32 0.0, %v2733
        %2735 = vmatmul.f32.gmra.mxu0 %v2624
        %v2736 = vpop.f32.mrf.mxu0
        %v2737 = vadd.f32 0.0, %v2736
        %2738 = vmatmul.f32.gmra.mxu0 %v2627
        %v2739 = vpop.f32.mrf.mxu0
        %v2740 = vadd.f32 0.0, %v2739
        %2741 = vmatmul.f32.gmra.mxu0 %v2630
        %v2742 = vpop.f32.mrf.mxu0
        %v2743 = vadd.f32 0.0, %v2742
        %2744 = vmatmul.f32.gmra.mxu0 %v2633
        %v2745 = vpop.f32.mrf.mxu0
        %v2746 = vadd.f32 0.0, %v2745
        %2747 = vmatmul.f32.gmra.mxu0 %v2636
        %v2748 = vpop.f32.mrf.mxu0
        %v2749 = vadd.f32 0.0, %v2748
        %2750 = vmatmul.f32.gmra.mxu0 %v2639
        %v2751 = vpop.f32.mrf.mxu0
        %v2752 = vadd.f32 0.0, %v2751
        %2753 = vmatmul.f32.gmra.mxu0 %v2642
        %v2754 = vpop.f32.mrf.mxu0
        %v2755 = vadd.f32 0.0, %v2754
        %2756 = vmatmul.f32.gmra.mxu0 %v2645
        %v2757 = vpop.f32.mrf.mxu0
        %v2758 = vadd.f32 0.0, %v2757
        %2759 = vmatmul.f32.gmra.mxu0 %v2648
        %v2760 = vpop.f32.mrf.mxu0
        %v2761 = vadd.f32 0.0, %v2760
        %2762 = vdwg.mxu0
        %v2763 = vsel %vm1415, %v2668, 0.0
        %v2764 = vsel %vm1415, %v2671, 0.0
        %v2765 = vadd.f32 %v2763, %v2764
        %v2766 = vsel %vm1415, %v2674, 0.0
        %v2767 = vadd.f32 %v2765, %v2766
        %v2768 = vsel %vm1415, %v2677, 0.0
        %v2769 = vadd.f32 %v2767, %v2768
        %v2770 = vsel %vm1415, %v2680, 0.0
        %v2771 = vadd.f32 %v2769, %v2770
        %v2772 = vsel %vm1415, %v2683, 0.0
        %v2773 = vadd.f32 %v2771, %v2772
        %v2774 = vsel %vm1415, %v2686, 0.0
        %v2775 = vadd.f32 %v2773, %v2774
        %v2776 = vsel %vm1415, %v2689, 0.0
        %v2777 = vadd.f32 %v2775, %v2776
        %v2778 = vsel %vm1415, %v2692, 0.0
        %v2779 = vadd.f32 %v2777, %v2778
        %v2780 = vsel %vm1415, %v2695, 0.0
        %v2781 = vadd.f32 %v2779, %v2780
        %v2782 = vsel %vm1415, %v2698, 0.0
        %v2783 = vadd.f32 %v2781, %v2782
        %v2784 = vsel %vm1415, %v2701, 0.0
        %v2785 = vadd.f32 %v2783, %v2784
        %v2786 = vsel %vm1415, %v2704, 0.0
        %v2787 = vadd.f32 %v2785, %v2786
        %v2788 = vsel %vm1415, %v2707, 0.0
        %v2789 = vadd.f32 %v2787, %v2788
        %v2790 = vsel %vm1415, %v2710, 0.0
        %v2791 = vadd.f32 %v2789, %v2790
        %v2792 = vsel %vm1415, %v2713, 0.0
        %v2793 = vadd.f32 %v2791, %v2792
        %v2794 = vsel %vm1415, %v2716, 0.0
        %v2795 = vadd.f32 %v2793, %v2794
        %v2796 = vsel %vm1415, %v2719, 0.0
        %v2797 = vadd.f32 %v2795, %v2796
        %v2798 = vsel %vm1415, %v2722, 0.0
        %v2799 = vadd.f32 %v2797, %v2798
        %v2800 = vsel %vm1415, %v2725, 0.0
        %v2801 = vadd.f32 %v2799, %v2800
        %v2802 = vsel %vm1415, %v2728, 0.0
        %v2803 = vadd.f32 %v2801, %v2802
        %v2804 = vsel %vm1415, %v2731, 0.0
        %v2805 = vadd.f32 %v2803, %v2804
        %v2806 = vsel %vm1415, %v2734, 0.0
        %v2807 = vadd.f32 %v2805, %v2806
        %v2808 = vsel %vm1415, %v2737, 0.0
        %v2809 = vadd.f32 %v2807, %v2808
        %v2810 = vsel %vm1415, %v2740, 0.0
        %v2811 = vadd.f32 %v2809, %v2810
        %v2812 = vsel %vm1415, %v2743, 0.0
        %v2813 = vadd.f32 %v2811, %v2812
        %v2814 = vsel %vm1415, %v2746, 0.0
        %v2815 = vadd.f32 %v2813, %v2814
        %v2816 = vsel %vm1415, %v2749, 0.0
        %v2817 = vadd.f32 %v2815, %v2816
        %v2818 = vsel %vm1415, %v2752, 0.0
        %v2819 = vadd.f32 %v2817, %v2818
        %v2820 = vsel %vm1415, %v2755, 0.0
        %v2821 = vadd.f32 %v2819, %v2820
        %v2822 = vsel %vm1415, %v2758, 0.0
        %v2823 = vadd.f32 %v2821, %v2822
        %v2824 = vsel %vm1415, %v2761, 0.0
        %v2825 = vadd.f32 %v2823, %v2824
        %v2826 = vrot.slane %v2825, 4
        %v2827 = vadd.f32 %v2825, %v2826
        %v2828 = vrot.slane %v2827, 2
        %v2829 = vadd.f32 %v2827, %v2828
        %v2830 = vrot.slane %v2829, 1
        %v2831 = vadd.f32 %v2829, %v2830
        %v2832 = vadd.f32 %v2383, %v2831
        %v2833 = vmul.f32 %v2668, %v2668
        %v2834 = vmul.f32 %v2671, %v2671
        %v2835 = vmul.f32 %v2674, %v2674
        %v2836 = vmul.f32 %v2677, %v2677
        %v2837 = vmul.f32 %v2680, %v2680
        %v2838 = vmul.f32 %v2683, %v2683
        %v2839 = vmul.f32 %v2686, %v2686
        %v2840 = vmul.f32 %v2689, %v2689
        %v2841 = vmul.f32 %v2692, %v2692
        %v2842 = vmul.f32 %v2695, %v2695
        %v2843 = vmul.f32 %v2698, %v2698
        %v2844 = vmul.f32 %v2701, %v2701
        %v2845 = vmul.f32 %v2704, %v2704
        %v2846 = vmul.f32 %v2707, %v2707
        %v2847 = vmul.f32 %v2710, %v2710
        %v2848 = vmul.f32 %v2713, %v2713
        %v2849 = vmul.f32 %v2716, %v2716
        %v2850 = vmul.f32 %v2719, %v2719
        %v2851 = vmul.f32 %v2722, %v2722
        %v2852 = vmul.f32 %v2725, %v2725
        %v2853 = vmul.f32 %v2728, %v2728
        %v2854 = vmul.f32 %v2731, %v2731
        %v2855 = vmul.f32 %v2734, %v2734
        %v2856 = vmul.f32 %v2737, %v2737
        %v2857 = vmul.f32 %v2740, %v2740
        %v2858 = vmul.f32 %v2743, %v2743
        %v2859 = vmul.f32 %v2746, %v2746
        %v2860 = vmul.f32 %v2749, %v2749
        %v2861 = vmul.f32 %v2752, %v2752
        %v2862 = vmul.f32 %v2755, %v2755
        %v2863 = vmul.f32 %v2758, %v2758
        %v2864 = vmul.f32 %v2761, %v2761
        %v2865 = vsel %vm1415, %v2833, 0.0
        %v2866 = vsel %vm1415, %v2834, 0.0
        %v2867 = vadd.f32 %v2865, %v2866
        %v2868 = vsel %vm1415, %v2835, 0.0
        %v2869 = vadd.f32 %v2867, %v2868
        %v2870 = vsel %vm1415, %v2836, 0.0
        %v2871 = vadd.f32 %v2869, %v2870
        %v2872 = vsel %vm1415, %v2837, 0.0
        %v2873 = vadd.f32 %v2871, %v2872
        %v2874 = vsel %vm1415, %v2838, 0.0
        %v2875 = vadd.f32 %v2873, %v2874
        %v2876 = vsel %vm1415, %v2839, 0.0
        %v2877 = vadd.f32 %v2875, %v2876
        %v2878 = vsel %vm1415, %v2840, 0.0
        %v2879 = vadd.f32 %v2877, %v2878
        %v2880 = vsel %vm1415, %v2841, 0.0
        %v2881 = vadd.f32 %v2879, %v2880
        %v2882 = vsel %vm1415, %v2842, 0.0
        %v2883 = vadd.f32 %v2881, %v2882
        %v2884 = vsel %vm1415, %v2843, 0.0
        %v2885 = vadd.f32 %v2883, %v2884
        %v2886 = vsel %vm1415, %v2844, 0.0
        %v2887 = vadd.f32 %v2885, %v2886
        %v2888 = vsel %vm1415, %v2845, 0.0
        %v2889 = vadd.f32 %v2887, %v2888
        %v2890 = vsel %vm1415, %v2846, 0.0
        %v2891 = vadd.f32 %v2889, %v2890
        %v2892 = vsel %vm1415, %v2847, 0.0
        %v2893 = vadd.f32 %v2891, %v2892
        %v2894 = vsel %vm1415, %v2848, 0.0
        %v2895 = vadd.f32 %v2893, %v2894
        %v2896 = vsel %vm1415, %v2849, 0.0
        %v2897 = vadd.f32 %v2895, %v2896
        %v2898 = vsel %vm1415, %v2850, 0.0
        %v2899 = vadd.f32 %v2897, %v2898
        %v2900 = vsel %vm1415, %v2851, 0.0
        %v2901 = vadd.f32 %v2899, %v2900
        %v2902 = vsel %vm1415, %v2852, 0.0
        %v2903 = vadd.f32 %v2901, %v2902
        %v2904 = vsel %vm1415, %v2853, 0.0
        %v2905 = vadd.f32 %v2903, %v2904
        %v2906 = vsel %vm1415, %v2854, 0.0
        %v2907 = vadd.f32 %v2905, %v2906
        %v2908 = vsel %vm1415, %v2855, 0.0
        %v2909 = vadd.f32 %v2907, %v2908
        %v2910 = vsel %vm1415, %v2856, 0.0
        %v2911 = vadd.f32 %v2909, %v2910
        %v2912 = vsel %vm1415, %v2857, 0.0
        %v2913 = vadd.f32 %v2911, %v2912
        %v2914 = vsel %vm1415, %v2858, 0.0
        %v2915 = vadd.f32 %v2913, %v2914
        %v2916 = vsel %vm1415, %v2859, 0.0
        %v2917 = vadd.f32 %v2915, %v2916
        %v2918 = vsel %vm1415, %v2860, 0.0
        %v2919 = vadd.f32 %v2917, %v2918
        %v2920 = vsel %vm1415, %v2861, 0.0
        %v2921 = vadd.f32 %v2919, %v2920
        %v2922 = vsel %vm1415, %v2862, 0.0
        %v2923 = vadd.f32 %v2921, %v2922
        %v2924 = vsel %vm1415, %v2863, 0.0
        %v2925 = vadd.f32 %v2923, %v2924
        %v2926 = vsel %vm1415, %v2864, 0.0
        %v2927 = vadd.f32 %v2925, %v2926
        %v2928 = vrot.slane %v2927, 4
        %v2929 = vadd.f32 %v2927, %v2928
        %v2930 = vrot.slane %v2929, 2
        %v2931 = vadd.f32 %v2929, %v2930
        %v2932 = vrot.slane %v2931, 1
        %v2933 = vadd.f32 %v2931, %v2932
        %v2934 = vadd.f32 %v2485, %v2933
        %s2935 = scalar_lea.vmem [#allocation3], 768
        %2936 = vst.msk [vmem:[%s2935] sm:$0xff] %vm1415, %v2668
        %2937 = vst.msk [vmem:[%s2935 + $0x8] sm:$0xff] %vm1415, %v2671
        %2938 = vst.msk [vmem:[%s2935 + $0x10] sm:$0xff] %vm1415, %v2674
        %2939 = vst.msk [vmem:[%s2935 + $0x18] sm:$0xff] %vm1415, %v2677
        %2940 = vst.msk [vmem:[%s2935 + $0x20] sm:$0xff] %vm1415, %v2680
        %2941 = vst.msk [vmem:[%s2935 + $0x28] sm:$0xff] %vm1415, %v2683
        %2942 = vst.msk [vmem:[%s2935 + $0x30] sm:$0xff] %vm1415, %v2686
        %2943 = vst.msk [vmem:[%s2935 + $0x38] sm:$0xff] %vm1415, %v2689
        %2944 = vst.msk [vmem:[%s2935 + $0x40] sm:$0xff] %vm1415, %v2692
        %2945 = vst.msk [vmem:[%s2935 + $0x48] sm:$0xff] %vm1415, %v2695
        %2946 = vst.msk [vmem:[%s2935 + $0x50] sm:$0xff] %vm1415, %v2698
        %2947 = vst.msk [vmem:[%s2935 + $0x58] sm:$0xff] %vm1415, %v2701
        %2948 = vst.msk [vmem:[%s2935 + $0x60] sm:$0xff] %vm1415, %v2704
        %2949 = vst.msk [vmem:[%s2935 + $0x68] sm:$0xff] %vm1415, %v2707
        %2950 = vst.msk [vmem:[%s2935 + $0x70] sm:$0xff] %vm1415, %v2710
        %2951 = vst.msk [vmem:[%s2935 + $0x78] sm:$0xff] %vm1415, %v2713
        %2952 = vst.msk [vmem:[%s2935 + $0x80] sm:$0xff] %vm1415, %v2716
        %2953 = vst.msk [vmem:[%s2935 + $0x88] sm:$0xff] %vm1415, %v2719
        %2954 = vst.msk [vmem:[%s2935 + $0x90] sm:$0xff] %vm1415, %v2722
        %2955 = vst.msk [vmem:[%s2935 + $0x98] sm:$0xff] %vm1415, %v2725
        %2956 = vst.msk [vmem:[%s2935 + $0xa0] sm:$0xff] %vm1415, %v2728
        %2957 = vst.msk [vmem:[%s2935 + $0xa8] sm:$0xff] %vm1415, %v2731
        %2958 = vst.msk [vmem:[%s2935 + $0xb0] sm:$0xff] %vm1415, %v2734
        %2959 = vst.msk [vmem:[%s2935 + $0xb8] sm:$0xff] %vm1415, %v2737
        %2960 = vst.msk [vmem:[%s2935 + $0xc0] sm:$0xff] %vm1415, %v2740
        %2961 = vst.msk [vmem:[%s2935 + $0xc8] sm:$0xff] %vm1415, %v2743
        %2962 = vst.msk [vmem:[%s2935 + $0xd0] sm:$0xff] %vm1415, %v2746
        %2963 = vst.msk [vmem:[%s2935 + $0xd8] sm:$0xff] %vm1415, %v2749
        %2964 = vst.msk [vmem:[%s2935 + $0xe0] sm:$0xff] %vm1415, %v2752
        %2965 = vst.msk [vmem:[%s2935 + $0xe8] sm:$0xff] %vm1415, %v2755
        %2966 = vst.msk [vmem:[%s2935 + $0xf0] sm:$0xff] %vm1415, %v2758
        %2967 = vst.msk [vmem:[%s2935 + $0xf8] sm:$0xff] %vm1415, %v2761
        %v2968 = vmul.f32 %v2832, 0.0009765625
        %v2969 = vmul.f32 %v2934, 0.0009765625
        %v2970 = vmul.f32 %v2968, %v2968
        %v2971 = vsub.f32 %v2969, %v2970
        %v2972 = vmax.f32 %v2971, 0.0
        %v2973 = vadd.f32 %v2972, 1e-05
        %v2974 = vrsqrt.pop %v2973
        %v2975 = vmul.f32 %v2974, %v2973
        %v2976 = vmul.f32 %v2975, %v2974
        %v2977 = vmul.f32 0.5, %v2976
        %v2978 = vsub.f32 1.5, %v2977
        %v2979 = vmul.f32 %v2974, %v2978
        %vm2980 = vweird.f32 %v2973
        %vm2981 = vweird.f32 %v2974
        %vm2982 = vmor %vm2980, %vm2981
        %v2983 = vsel %vm2982, %v2974, %v2979
        %v2984 = vld [vmem:[#allocation3] sm:$0xff]
        %v2985 = vld [vmem:[#allocation3 + $0x8] sm:$0xff]
        %v2986 = vld [vmem:[#allocation3 + $0x10] sm:$0xff]
        %v2987 = vld [vmem:[#allocation3 + $0x18] sm:$0xff]
        %v2988 = vld [vmem:[#allocation3 + $0x20] sm:$0xff]
        %v2989 = vld [vmem:[#allocation3 + $0x28] sm:$0xff]
        %v2990 = vld [vmem:[#allocation3 + $0x30] sm:$0xff]
        %v2991 = vld [vmem:[#allocation3 + $0x38] sm:$0xff]
        %v2992 = vld [vmem:[#allocation3 + $0x40] sm:$0xff]
        %v2993 = vld [vmem:[#allocation3 + $0x48] sm:$0xff]
        %v2994 = vld [vmem:[#allocation3 + $0x50] sm:$0xff]
        %v2995 = vld [vmem:[#allocation3 + $0x58] sm:$0xff]
        %v2996 = vld [vmem:[#allocation3 + $0x60] sm:$0xff]
        %v2997 = vld [vmem:[#allocation3 + $0x68] sm:$0xff]
        %v2998 = vld [vmem:[#allocation3 + $0x70] sm:$0xff]
        %v2999 = vld [vmem:[#allocation3 + $0x78] sm:$0xff]
        %v3000 = vld [vmem:[#allocation3 + $0x80] sm:$0xff]
        %v3001 = vld [vmem:[#allocation3 + $0x88] sm:$0xff]
        %v3002 = vld [vmem:[#allocation3 + $0x90] sm:$0xff]
        %v3003 = vld [vmem:[#allocation3 + $0x98] sm:$0xff]
        %v3004 = vld [vmem:[#allocation3 + $0xa0] sm:$0xff]
        %v3005 = vld [vmem:[#allocation3 + $0xa8] sm:$0xff]
        %v3006 = vld [vmem:[#allocation3 + $0xb0] sm:$0xff]
        %v3007 = vld [vmem:[#allocation3 + $0xb8] sm:$0xff]
        %v3008 = vld [vmem:[#allocation3 + $0xc0] sm:$0xff]
        %v3009 = vld [vmem:[#allocation3 + $0xc8] sm:$0xff]
        %v3010 = vld [vmem:[#allocation3 + $0xd0] sm:$0xff]
        %v3011 = vld [vmem:[#allocation3 + $0xd8] sm:$0xff]
        %v3012 = vld [vmem:[#allocation3 + $0xe0] sm:$0xff]
        %v3013 = vld [vmem:[#allocation3 + $0xe8] sm:$0xff]
        %v3014 = vld [vmem:[#allocation3 + $0xf0] sm:$0xff]
        %v3015 = vld [vmem:[#allocation3 + $0xf8] sm:$0xff]
        %v3016 = vsub.f32 %v2984, %v2968
        %v3017 = vsub.f32 %v2985, %v2968
        %v3018 = vsub.f32 %v2986, %v2968
        %v3019 = vsub.f32 %v2987, %v2968
        %v3020 = vsub.f32 %v2988, %v2968
        %v3021 = vsub.f32 %v2989, %v2968
        %v3022 = vsub.f32 %v2990, %v2968
        %v3023 = vsub.f32 %v2991, %v2968
        %v3024 = vsub.f32 %v2992, %v2968
        %v3025 = vsub.f32 %v2993, %v2968
        %v3026 = vsub.f32 %v2994, %v2968
        %v3027 = vsub.f32 %v2995, %v2968
        %v3028 = vsub.f32 %v2996, %v2968
        %v3029 = vsub.f32 %v2997, %v2968
        %v3030 = vsub.f32 %v2998, %v2968
        %v3031 = vsub.f32 %v2999, %v2968
        %v3032 = vsub.f32 %v3000, %v2968
        %v3033 = vsub.f32 %v3001, %v2968
        %v3034 = vsub.f32 %v3002, %v2968
        %v3035 = vsub.f32 %v3003, %v2968
        %v3036 = vsub.f32 %v3004, %v2968
        %v3037 = vsub.f32 %v3005, %v2968
        %v3038 = vsub.f32 %v3006, %v2968
        %v3039 = vsub.f32 %v3007, %v2968
        %v3040 = vsub.f32 %v3008, %v2968
        %v3041 = vsub.f32 %v3009, %v2968
        %v3042 = vsub.f32 %v3010, %v2968
        %v3043 = vsub.f32 %v3011, %v2968
        %v3044 = vsub.f32 %v3012, %v2968
        %v3045 = vsub.f32 %v3013, %v2968
        %v3046 = vsub.f32 %v3014, %v2968
        %v3047 = vsub.f32 %v3015, %v2968
        %v3048 = vmul.f32 %v3016, %v2983
        %v3049 = vmul.f32 %v3017, %v2983
        %v3050 = vmul.f32 %v3018, %v2983
        %v3051 = vmul.f32 %v3019, %v2983
        %v3052 = vmul.f32 %v3020, %v2983
        %v3053 = vmul.f32 %v3021, %v2983
        %v3054 = vmul.f32 %v3022, %v2983
        %v3055 = vmul.f32 %v3023, %v2983
        %v3056 = vmul.f32 %v3024, %v2983
        %v3057 = vmul.f32 %v3025, %v2983
        %v3058 = vmul.f32 %v3026, %v2983
        %v3059 = vmul.f32 %v3027, %v2983
        %v3060 = vmul.f32 %v3028, %v2983
        %v3061 = vmul.f32 %v3029, %v2983
        %v3062 = vmul.f32 %v3030, %v2983
        %v3063 = vmul.f32 %v3031, %v2983
        %v3064 = vmul.f32 %v3032, %v2983
        %v3065 = vmul.f32 %v3033, %v2983
        %v3066 = vmul.f32 %v3034, %v2983
        %v3067 = vmul.f32 %v3035, %v2983
        %v3068 = vmul.f32 %v3036, %v2983
        %v3069 = vmul.f32 %v3037, %v2983
        %v3070 = vmul.f32 %v3038, %v2983
        %v3071 = vmul.f32 %v3039, %v2983
        %v3072 = vmul.f32 %v3040, %v2983
        %v3073 = vmul.f32 %v3041, %v2983
        %v3074 = vmul.f32 %v3042, %v2983
        %v3075 = vmul.f32 %v3043, %v2983
        %v3076 = vmul.f32 %v3044, %v2983
        %v3077 = vmul.f32 %v3045, %v2983
        %v3078 = vmul.f32 %v3046, %v2983
        %v3079 = vmul.f32 %v3047, %v2983
        %vm3080 = vcmp.ge.f32.partialorder %v3048, 0.0
        %vm3081 = vcmp.ge.f32.partialorder %v3049, 0.0
        %vm3082 = vcmp.ge.f32.partialorder %v3050, 0.0
        %vm3083 = vcmp.ge.f32.partialorder %v3051, 0.0
        %vm3084 = vcmp.ge.f32.partialorder %v3052, 0.0
        %vm3085 = vcmp.ge.f32.partialorder %v3053, 0.0
        %vm3086 = vcmp.ge.f32.partialorder %v3054, 0.0
        %vm3087 = vcmp.ge.f32.partialorder %v3055, 0.0
        %vm3088 = vcmp.ge.f32.partialorder %v3056, 0.0
        %vm3089 = vcmp.ge.f32.partialorder %v3057, 0.0
        %vm3090 = vcmp.ge.f32.partialorder %v3058, 0.0
        %vm3091 = vcmp.ge.f32.partialorder %v3059, 0.0
        %vm3092 = vcmp.ge.f32.partialorder %v3060, 0.0
        %vm3093 = vcmp.ge.f32.partialorder %v3061, 0.0
        %vm3094 = vcmp.ge.f32.partialorder %v3062, 0.0
        %vm3095 = vcmp.ge.f32.partialorder %v3063, 0.0
        %vm3096 = vcmp.ge.f32.partialorder %v3064, 0.0
        %vm3097 = vcmp.ge.f32.partialorder %v3065, 0.0
        %vm3098 = vcmp.ge.f32.partialorder %v3066, 0.0
        %vm3099 = vcmp.ge.f32.partialorder %v3067, 0.0
        %vm3100 = vcmp.ge.f32.partialorder %v3068, 0.0
        %vm3101 = vcmp.ge.f32.partialorder %v3069, 0.0
        %vm3102 = vcmp.ge.f32.partialorder %v3070, 0.0
        %vm3103 = vcmp.ge.f32.partialorder %v3071, 0.0
        %vm3104 = vcmp.ge.f32.partialorder %v3072, 0.0
        %vm3105 = vcmp.ge.f32.partialorder %v3073, 0.0
        %vm3106 = vcmp.ge.f32.partialorder %v3074, 0.0
        %vm3107 = vcmp.ge.f32.partialorder %v3075, 0.0
        %vm3108 = vcmp.ge.f32.partialorder %v3076, 0.0
        %vm3109 = vcmp.ge.f32.partialorder %v3077, 0.0
        %vm3110 = vcmp.ge.f32.partialorder %v3078, 0.0
        %vm3111 = vcmp.ge.f32.partialorder %v3079, 0.0
        %v3112 = vmul.f32 %v3048, 0.2
        %v3113 = vmul.f32 %v3049, 0.2
        %v3114 = vmul.f32 %v3050, 0.2
        %v3115 = vmul.f32 %v3051, 0.2
        %v3116 = vmul.f32 %v3052, 0.2
        %v3117 = vmul.f32 %v3053, 0.2
        %v3118 = vmul.f32 %v3054, 0.2
        %v3119 = vmul.f32 %v3055, 0.2
        %v3120 = vmul.f32 %v3056, 0.2
        %v3121 = vmul.f32 %v3057, 0.2
        %v3122 = vmul.f32 %v3058, 0.2
        %v3123 = vmul.f32 %v3059, 0.2
        %v3124 = vmul.f32 %v3060, 0.2
        %v3125 = vmul.f32 %v3061, 0.2
        %v3126 = vmul.f32 %v3062, 0.2
        %v3127 = vmul.f32 %v3063, 0.2
        %v3128 = vmul.f32 %v3064, 0.2
        %v3129 = vmul.f32 %v3065, 0.2
        %v3130 = vmul.f32 %v3066, 0.2
        %v3131 = vmul.f32 %v3067, 0.2
        %v3132 = vmul.f32 %v3068, 0.2
        %v3133 = vmul.f32 %v3069, 0.2
        %v3134 = vmul.f32 %v3070, 0.2
        %v3135 = vmul.f32 %v3071, 0.2
        %v3136 = vmul.f32 %v3072, 0.2
        %v3137 = vmul.f32 %v3073, 0.2
        %v3138 = vmul.f32 %v3074, 0.2
        %v3139 = vmul.f32 %v3075, 0.2
        %v3140 = vmul.f32 %v3076, 0.2
        %v3141 = vmul.f32 %v3077, 0.2
        %v3142 = vmul.f32 %v3078, 0.2
        %v3143 = vmul.f32 %v3079, 0.2
        %v3144 = vsel %vm3080, %v3048, %v3112
        %v3145 = vsel %vm3081, %v3049, %v3113
        %v3146 = vsel %vm3082, %v3050, %v3114
        %v3147 = vsel %vm3083, %v3051, %v3115
        %v3148 = vsel %vm3084, %v3052, %v3116
        %v3149 = vsel %vm3085, %v3053, %v3117
        %v3150 = vsel %vm3086, %v3054, %v3118
        %v3151 = vsel %vm3087, %v3055, %v3119
        %v3152 = vsel %vm3088, %v3056, %v3120
        %v3153 = vsel %vm3089, %v3057, %v3121
        %v3154 = vsel %vm3090, %v3058, %v3122
        %v3155 = vsel %vm3091, %v3059, %v3123
        %v3156 = vsel %vm3092, %v3060, %v3124
        %v3157 = vsel %vm3093, %v3061, %v3125
        %v3158 = vsel %vm3094, %v3062, %v3126
        %v3159 = vsel %vm3095, %v3063, %v3127
        %v3160 = vsel %vm3096, %v3064, %v3128
        %v3161 = vsel %vm3097, %v3065, %v3129
        %v3162 = vsel %vm3098, %v3066, %v3130
        %v3163 = vsel %vm3099, %v3067, %v3131
        %v3164 = vsel %vm3100, %v3068, %v3132
        %v3165 = vsel %vm3101, %v3069, %v3133
        %v3166 = vsel %vm3102, %v3070, %v3134
        %v3167 = vsel %vm3103, %v3071, %v3135
        %v3168 = vsel %vm3104, %v3072, %v3136
        %v3169 = vsel %vm3105, %v3073, %v3137
        %v3170 = vsel %vm3106, %v3074, %v3138
        %v3171 = vsel %vm3107, %v3075, %v3139
        %v3172 = vsel %vm3108, %v3076, %v3140
        %v3173 = vsel %vm3109, %v3077, %v3141
        %v3174 = vsel %vm3110, %v3078, %v3142
        %v3175 = vsel %vm3111, %v3079, %v3143
        %3176 = vst.msk [vmem:[%s136] sm:$0xff] %vm1415, %v3144
        %3177 = vst.msk [vmem:[%s136 + $0x8] sm:$0xff] %vm1415, %v3145
        %3178 = vst.msk [vmem:[%s136 + $0x20] sm:$0xff] %vm1415, %v3146
        %3179 = vst.msk [vmem:[%s136 + $0x28] sm:$0xff] %vm1415, %v3147
        %3180 = vst.msk [vmem:[%s136 + $0x40] sm:$0xff] %vm1415, %v3148
        %3181 = vst.msk [vmem:[%s136 + $0x48] sm:$0xff] %vm1415, %v3149
        %3182 = vst.msk [vmem:[%s136 + $0x60] sm:$0xff] %vm1415, %v3150
        %3183 = vst.msk [vmem:[%s136 + $0x68] sm:$0xff] %vm1415, %v3151
        %3184 = vst.msk [vmem:[%s136 + $0x80] sm:$0xff] %vm1415, %v3152
        %3185 = vst.msk [vmem:[%s136 + $0x88] sm:$0xff] %vm1415, %v3153
        %3186 = vst.msk [vmem:[%s136 + $0xa0] sm:$0xff] %vm1415, %v3154
        %3187 = vst.msk [vmem:[%s136 + $0xa8] sm:$0xff] %vm1415, %v3155
        %3188 = vst.msk [vmem:[%s136 + $0xc0] sm:$0xff] %vm1415, %v3156
        %3189 = vst.msk [vmem:[%s136 + $0xc8] sm:$0xff] %vm1415, %v3157
        %3190 = vst.msk [vmem:[%s136 + $0xe0] sm:$0xff] %vm1415, %v3158
        %3191 = vst.msk [vmem:[%s136 + $0xe8] sm:$0xff] %vm1415, %v3159
        %3192 = vst.msk [vmem:[%s136 + $0x100] sm:$0xff] %vm1415, %v3160
        %3193 = vst.msk [vmem:[%s136 + $0x108] sm:$0xff] %vm1415, %v3161
        %3194 = vst.msk [vmem:[%s136 + $0x120] sm:$0xff] %vm1415, %v3162
        %3195 = vst.msk [vmem:[%s136 + $0x128] sm:$0xff] %vm1415, %v3163
        %3196 = vst.msk [vmem:[%s136 + $0x140] sm:$0xff] %vm1415, %v3164
        %3197 = vst.msk [vmem:[%s136 + $0x148] sm:$0xff] %vm1415, %v3165
        %3198 = vst.msk [vmem:[%s136 + $0x160] sm:$0xff] %vm1415, %v3166
        %3199 = vst.msk [vmem:[%s136 + $0x168] sm:$0xff] %vm1415, %v3167
        %3200 = vst.msk [vmem:[%s136 + $0x180] sm:$0xff] %vm1415, %v3168
        %3201 = vst.msk [vmem:[%s136 + $0x188] sm:$0xff] %vm1415, %v3169
        %3202 = vst.msk [vmem:[%s136 + $0x1a0] sm:$0xff] %vm1415, %v3170
        %3203 = vst.msk [vmem:[%s136 + $0x1a8] sm:$0xff] %vm1415, %v3171
        %3204 = vst.msk [vmem:[%s136 + $0x1c0] sm:$0xff] %vm1415, %v3172
        %3205 = vst.msk [vmem:[%s136 + $0x1c8] sm:$0xff] %vm1415, %v3173
        %3206 = vst.msk [vmem:[%s136 + $0x1e0] sm:$0xff] %vm1415, %v3174
        %3207 = vst.msk [vmem:[%s136 + $0x1e8] sm:$0xff] %vm1415, %v3175
        %v3208 = vld [vmem:[%s2036] sm:$0xff]
        %v3209 = vld [vmem:[%s2036 + $0x8] sm:$0xff]
        %v3210 = vld [vmem:[%s2036 + $0x10] sm:$0xff]
        %v3211 = vld [vmem:[%s2036 + $0x18] sm:$0xff]
        %v3212 = vld [vmem:[%s2036 + $0x20] sm:$0xff]
        %v3213 = vld [vmem:[%s2036 + $0x28] sm:$0xff]
        %v3214 = vld [vmem:[%s2036 + $0x30] sm:$0xff]
        %v3215 = vld [vmem:[%s2036 + $0x38] sm:$0xff]
        %v3216 = vld [vmem:[%s2036 + $0x40] sm:$0xff]
        %v3217 = vld [vmem:[%s2036 + $0x48] sm:$0xff]
        %v3218 = vld [vmem:[%s2036 + $0x50] sm:$0xff]
        %v3219 = vld [vmem:[%s2036 + $0x58] sm:$0xff]
        %v3220 = vld [vmem:[%s2036 + $0x60] sm:$0xff]
        %v3221 = vld [vmem:[%s2036 + $0x68] sm:$0xff]
        %v3222 = vld [vmem:[%s2036 + $0x70] sm:$0xff]
        %v3223 = vld [vmem:[%s2036 + $0x78] sm:$0xff]
        %v3224 = vld [vmem:[%s2036 + $0x80] sm:$0xff]
        %v3225 = vld [vmem:[%s2036 + $0x88] sm:$0xff]
        %v3226 = vld [vmem:[%s2036 + $0x90] sm:$0xff]
        %v3227 = vld [vmem:[%s2036 + $0x98] sm:$0xff]
        %v3228 = vld [vmem:[%s2036 + $0xa0] sm:$0xff]
        %v3229 = vld [vmem:[%s2036 + $0xa8] sm:$0xff]
        %v3230 = vld [vmem:[%s2036 + $0xb0] sm:$0xff]
        %v3231 = vld [vmem:[%s2036 + $0xb8] sm:$0xff]
        %v3232 = vld [vmem:[%s2036 + $0xc0] sm:$0xff]
        %v3233 = vld [vmem:[%s2036 + $0xc8] sm:$0xff]
        %v3234 = vld [vmem:[%s2036 + $0xd0] sm:$0xff]
        %v3235 = vld [vmem:[%s2036 + $0xd8] sm:$0xff]
        %v3236 = vld [vmem:[%s2036 + $0xe0] sm:$0xff]
        %v3237 = vld [vmem:[%s2036 + $0xe8] sm:$0xff]
        %v3238 = vld [vmem:[%s2036 + $0xf0] sm:$0xff]
        %v3239 = vld [vmem:[%s2036 + $0xf8] sm:$0xff]
        %v3240 = vsub.f32 %v3208, %v2968
        %v3241 = vsub.f32 %v3209, %v2968
        %v3242 = vsub.f32 %v3210, %v2968
        %v3243 = vsub.f32 %v3211, %v2968
        %v3244 = vsub.f32 %v3212, %v2968
        %v3245 = vsub.f32 %v3213, %v2968
        %v3246 = vsub.f32 %v3214, %v2968
        %v3247 = vsub.f32 %v3215, %v2968
        %v3248 = vsub.f32 %v3216, %v2968
        %v3249 = vsub.f32 %v3217, %v2968
        %v3250 = vsub.f32 %v3218, %v2968
        %v3251 = vsub.f32 %v3219, %v2968
        %v3252 = vsub.f32 %v3220, %v2968
        %v3253 = vsub.f32 %v3221, %v2968
        %v3254 = vsub.f32 %v3222, %v2968
        %v3255 = vsub.f32 %v3223, %v2968
        %v3256 = vsub.f32 %v3224, %v2968
        %v3257 = vsub.f32 %v3225, %v2968
        %v3258 = vsub.f32 %v3226, %v2968
        %v3259 = vsub.f32 %v3227, %v2968
        %v3260 = vsub.f32 %v3228, %v2968
        %v3261 = vsub.f32 %v3229, %v2968
        %v3262 = vsub.f32 %v3230, %v2968
        %v3263 = vsub.f32 %v3231, %v2968
        %v3264 = vsub.f32 %v3232, %v2968
        %v3265 = vsub.f32 %v3233, %v2968
        %v3266 = vsub.f32 %v3234, %v2968
        %v3267 = vsub.f32 %v3235, %v2968
        %v3268 = vsub.f32 %v3236, %v2968
        %v3269 = vsub.f32 %v3237, %v2968
        %v3270 = vsub.f32 %v3238, %v2968
        %v3271 = vsub.f32 %v3239, %v2968
        %v3272 = vmul.f32 %v3240, %v2983
        %v3273 = vmul.f32 %v3241, %v2983
        %v3274 = vmul.f32 %v3242, %v2983
        %v3275 = vmul.f32 %v3243, %v2983
        %v3276 = vmul.f32 %v3244, %v2983
        %v3277 = vmul.f32 %v3245, %v2983
        %v3278 = vmul.f32 %v3246, %v2983
        %v3279 = vmul.f32 %v3247, %v2983
        %v3280 = vmul.f32 %v3248, %v2983
        %v3281 = vmul.f32 %v3249, %v2983
        %v3282 = vmul.f32 %v3250, %v2983
        %v3283 = vmul.f32 %v3251, %v2983
        %v3284 = vmul.f32 %v3252, %v2983
        %v3285 = vmul.f32 %v3253, %v2983
        %v3286 = vmul.f32 %v3254, %v2983
        %v3287 = vmul.f32 %v3255, %v2983
        %v3288 = vmul.f32 %v3256, %v2983
        %v3289 = vmul.f32 %v3257, %v2983
        %v3290 = vmul.f32 %v3258, %v2983
        %v3291 = vmul.f32 %v3259, %v2983
        %v3292 = vmul.f32 %v3260, %v2983
        %v3293 = vmul.f32 %v3261, %v2983
        %v3294 = vmul.f32 %v3262, %v2983
        %v3295 = vmul.f32 %v3263, %v2983
        %v3296 = vmul.f32 %v3264, %v2983
        %v3297 = vmul.f32 %v3265, %v2983
        %v3298 = vmul.f32 %v3266, %v2983
        %v3299 = vmul.f32 %v3267, %v2983
        %v3300 = vmul.f32 %v3268, %v2983
        %v3301 = vmul.f32 %v3269, %v2983
        %v3302 = vmul.f32 %v3270, %v2983
        %v3303 = vmul.f32 %v3271, %v2983
        %vm3304 = vcmp.ge.f32.partialorder %v3272, 0.0
        %vm3305 = vcmp.ge.f32.partialorder %v3273, 0.0
        %vm3306 = vcmp.ge.f32.partialorder %v3274, 0.0
        %vm3307 = vcmp.ge.f32.partialorder %v3275, 0.0
        %vm3308 = vcmp.ge.f32.partialorder %v3276, 0.0
        %vm3309 = vcmp.ge.f32.partialorder %v3277, 0.0
        %vm3310 = vcmp.ge.f32.partialorder %v3278, 0.0
        %vm3311 = vcmp.ge.f32.partialorder %v3279, 0.0
        %vm3312 = vcmp.ge.f32.partialorder %v3280, 0.0
        %vm3313 = vcmp.ge.f32.partialorder %v3281, 0.0
        %vm3314 = vcmp.ge.f32.partialorder %v3282, 0.0
        %vm3315 = vcmp.ge.f32.partialorder %v3283, 0.0
        %vm3316 = vcmp.ge.f32.partialorder %v3284, 0.0
        %vm3317 = vcmp.ge.f32.partialorder %v3285, 0.0
        %vm3318 = vcmp.ge.f32.partialorder %v3286, 0.0
        %vm3319 = vcmp.ge.f32.partialorder %v3287, 0.0
        %vm3320 = vcmp.ge.f32.partialorder %v3288, 0.0
        %vm3321 = vcmp.ge.f32.partialorder %v3289, 0.0
        %vm3322 = vcmp.ge.f32.partialorder %v3290, 0.0
        %vm3323 = vcmp.ge.f32.partialorder %v3291, 0.0
        %vm3324 = vcmp.ge.f32.partialorder %v3292, 0.0
        %vm3325 = vcmp.ge.f32.partialorder %v3293, 0.0
        %vm3326 = vcmp.ge.f32.partialorder %v3294, 0.0
        %vm3327 = vcmp.ge.f32.partialorder %v3295, 0.0
        %vm3328 = vcmp.ge.f32.partialorder %v3296, 0.0
        %vm3329 = vcmp.ge.f32.partialorder %v3297, 0.0
        %vm3330 = vcmp.ge.f32.partialorder %v3298, 0.0
        %vm3331 = vcmp.ge.f32.partialorder %v3299, 0.0
        %vm3332 = vcmp.ge.f32.partialorder %v3300, 0.0
        %vm3333 = vcmp.ge.f32.partialorder %v3301, 0.0
        %vm3334 = vcmp.ge.f32.partialorder %v3302, 0.0
        %vm3335 = vcmp.ge.f32.partialorder %v3303, 0.0
        %v3336 = vmul.f32 %v3272, 0.2
        %v3337 = vmul.f32 %v3273, 0.2
        %v3338 = vmul.f32 %v3274, 0.2
        %v3339 = vmul.f32 %v3275, 0.2
        %v3340 = vmul.f32 %v3276, 0.2
        %v3341 = vmul.f32 %v3277, 0.2
        %v3342 = vmul.f32 %v3278, 0.2
        %v3343 = vmul.f32 %v3279, 0.2
        %v3344 = vmul.f32 %v3280, 0.2
        %v3345 = vmul.f32 %v3281, 0.2
        %v3346 = vmul.f32 %v3282, 0.2
        %v3347 = vmul.f32 %v3283, 0.2
        %v3348 = vmul.f32 %v3284, 0.2
        %v3349 = vmul.f32 %v3285, 0.2
        %v3350 = vmul.f32 %v3286, 0.2
        %v3351 = vmul.f32 %v3287, 0.2
        %v3352 = vmul.f32 %v3288, 0.2
        %v3353 = vmul.f32 %v3289, 0.2
        %v3354 = vmul.f32 %v3290, 0.2
        %v3355 = vmul.f32 %v3291, 0.2
        %v3356 = vmul.f32 %v3292, 0.2
        %v3357 = vmul.f32 %v3293, 0.2
        %v3358 = vmul.f32 %v3294, 0.2
        %v3359 = vmul.f32 %v3295, 0.2
        %v3360 = vmul.f32 %v3296, 0.2
        %v3361 = vmul.f32 %v3297, 0.2
        %v3362 = vmul.f32 %v3298, 0.2
        %v3363 = vmul.f32 %v3299, 0.2
        %v3364 = vmul.f32 %v3300, 0.2
        %v3365 = vmul.f32 %v3301, 0.2
        %v3366 = vmul.f32 %v3302, 0.2
        %v3367 = vmul.f32 %v3303, 0.2
        %v3368 = vsel %vm3304, %v3272, %v3336
        %v3369 = vsel %vm3305, %v3273, %v3337
        %v3370 = vsel %vm3306, %v3274, %v3338
        %v3371 = vsel %vm3307, %v3275, %v3339
        %v3372 = vsel %vm3308, %v3276, %v3340
        %v3373 = vsel %vm3309, %v3277, %v3341
        %v3374 = vsel %vm3310, %v3278, %v3342
        %v3375 = vsel %vm3311, %v3279, %v3343
        %v3376 = vsel %vm3312, %v3280, %v3344
        %v3377 = vsel %vm3313, %v3281, %v3345
        %v3378 = vsel %vm3314, %v3282, %v3346
        %v3379 = vsel %vm3315, %v3283, %v3347
        %v3380 = vsel %vm3316, %v3284, %v3348
        %v3381 = vsel %vm3317, %v3285, %v3349
        %v3382 = vsel %vm3318, %v3286, %v3350
        %v3383 = vsel %vm3319, %v3287, %v3351
        %v3384 = vsel %vm3320, %v3288, %v3352
        %v3385 = vsel %vm3321, %v3289, %v3353
        %v3386 = vsel %vm3322, %v3290, %v3354
        %v3387 = vsel %vm3323, %v3291, %v3355
        %v3388 = vsel %vm3324, %v3292, %v3356
        %v3389 = vsel %vm3325, %v3293, %v3357
        %v3390 = vsel %vm3326, %v3294, %v3358
        %v3391 = vsel %vm3327, %v3295, %v3359
        %v3392 = vsel %vm3328, %v3296, %v3360
        %v3393 = vsel %vm3329, %v3297, %v3361
        %v3394 = vsel %vm3330, %v3298, %v3362
        %v3395 = vsel %vm3331, %v3299, %v3363
        %v3396 = vsel %vm3332, %v3300, %v3364
        %v3397 = vsel %vm3333, %v3301, %v3365
        %v3398 = vsel %vm3334, %v3302, %v3366
        %v3399 = vsel %vm3335, %v3303, %v3367
        %3432 = vrot.lane.b32.xlu0 %v3368, 8
        %v3433 = vpop.permute.xlu0 %3432
        %3434 = vrot.lane.b32.xlu0 %v3369, 8
        %v3435 = vpop.permute.xlu0 %3434
        %3436 = vrot.lane.b32.xlu0 %v3370, 8
        %v3437 = vpop.permute.xlu0 %3436
        %3438 = vrot.lane.b32.xlu0 %v3371, 8
        %v3439 = vpop.permute.xlu0 %3438
        %3440 = vrot.lane.b32.xlu0 %v3372, 8
        %v3441 = vpop.permute.xlu0 %3440
        %3442 = vrot.lane.b32.xlu0 %v3373, 8
        %v3443 = vpop.permute.xlu0 %3442
        %3444 = vrot.lane.b32.xlu0 %v3374, 8
        %v3445 = vpop.permute.xlu0 %3444
        %3446 = vrot.lane.b32.xlu0 %v3375, 8
        %v3447 = vpop.permute.xlu0 %3446
        %3448 = vrot.lane.b32.xlu0 %v3376, 8
        %v3449 = vpop.permute.xlu0 %3448
        %3450 = vrot.lane.b32.xlu0 %v3377, 8
        %v3451 = vpop.permute.xlu0 %3450
        %3452 = vrot.lane.b32.xlu0 %v3378, 8
        %v3453 = vpop.permute.xlu0 %3452
        %3454 = vrot.lane.b32.xlu0 %v3379, 8
        %v3455 = vpop.permute.xlu0 %3454
        %3456 = vrot.lane.b32.xlu0 %v3380, 8
        %v3457 = vpop.permute.xlu0 %3456
        %3458 = vrot.lane.b32.xlu0 %v3381, 8
        %v3459 = vpop.permute.xlu0 %3458
        %3460 = vrot.lane.b32.xlu0 %v3382, 8
        %v3461 = vpop.permute.xlu0 %3460
        %3462 = vrot.lane.b32.xlu0 %v3383, 8
        %v3463 = vpop.permute.xlu0 %3462
        %3464 = vrot.lane.b32.xlu0 %v3384, 8
        %v3465 = vpop.permute.xlu0 %3464
        %3466 = vrot.lane.b32.xlu0 %v3385, 8
        %v3467 = vpop.permute.xlu0 %3466
        %3468 = vrot.lane.b32.xlu0 %v3386, 8
        %v3469 = vpop.permute.xlu0 %3468
        %3470 = vrot.lane.b32.xlu0 %v3387, 8
        %v3471 = vpop.permute.xlu0 %3470
        %3472 = vrot.lane.b32.xlu0 %v3388, 8
        %v3473 = vpop.permute.xlu0 %3472
        %3474 = vrot.lane.b32.xlu0 %v3389, 8
        %v3475 = vpop.permute.xlu0 %3474
        %3476 = vrot.lane.b32.xlu0 %v3390, 8
        %v3477 = vpop.permute.xlu0 %3476
        %3478 = vrot.lane.b32.xlu0 %v3391, 8
        %v3479 = vpop.permute.xlu0 %3478
        %3480 = vrot.lane.b32.xlu0 %v3392, 8
        %v3481 = vpop.permute.xlu0 %3480
        %3482 = vrot.lane.b32.xlu0 %v3393, 8
        %v3483 = vpop.permute.xlu0 %3482
        %3484 = vrot.lane.b32.xlu0 %v3394, 8
        %v3485 = vpop.permute.xlu0 %3484
        %3486 = vrot.lane.b32.xlu0 %v3395, 8
        %v3487 = vpop.permute.xlu0 %3486
        %3488 = vrot.lane.b32.xlu0 %v3396, 8
        %v3489 = vpop.permute.xlu0 %3488
        %3490 = vrot.lane.b32.xlu0 %v3397, 8
        %v3491 = vpop.permute.xlu0 %3490
        %3492 = vrot.lane.b32.xlu0 %v3398, 8
        %v3493 = vpop.permute.xlu0 %3492
        %3494 = vrot.lane.b32.xlu0 %v3399, 8
        %v3495 = vpop.permute.xlu0 %3494
        %vm3528 = vcmask 130112
        %3529 = vst.msk [vmem:[%s136] sm:$0xff] %vm3528, %v3433
        %3530 = vst.msk [vmem:[%s136 + $0x8] sm:$0xff] %vm3528, %v3435
        %3531 = vst.msk [vmem:[%s136 + $0x20] sm:$0xff] %vm3528, %v3437
        %3532 = vst.msk [vmem:[%s136 + $0x28] sm:$0xff] %vm3528, %v3439
        %3533 = vst.msk [vmem:[%s136 + $0x40] sm:$0xff] %vm3528, %v3441
        %3534 = vst.msk [vmem:[%s136 + $0x48] sm:$0xff] %vm3528, %v3443
        %3535 = vst.msk [vmem:[%s136 + $0x60] sm:$0xff] %vm3528, %v3445
        %3536 = vst.msk [vmem:[%s136 + $0x68] sm:$0xff] %vm3528, %v3447
        %3537 = vst.msk [vmem:[%s136 + $0x80] sm:$0xff] %vm3528, %v3449
        %3538 = vst.msk [vmem:[%s136 + $0x88] sm:$0xff] %vm3528, %v3451
        %3539 = vst.msk [vmem:[%s136 + $0xa0] sm:$0xff] %vm3528, %v3453
        %3540 = vst.msk [vmem:[%s136 + $0xa8] sm:$0xff] %vm3528, %v3455
        %3541 = vst.msk [vmem:[%s136 + $0xc0] sm:$0xff] %vm3528, %v3457
        %3542 = vst.msk [vmem:[%s136 + $0xc8] sm:$0xff] %vm3528, %v3459
        %3543 = vst.msk [vmem:[%s136 + $0xe0] sm:$0xff] %vm3528, %v3461
        %3544 = vst.msk [vmem:[%s136 + $0xe8] sm:$0xff] %vm3528, %v3463
        %3545 = vst.msk [vmem:[%s136 + $0x100] sm:$0xff] %vm3528, %v3465
        %3546 = vst.msk [vmem:[%s136 + $0x108] sm:$0xff] %vm3528, %v3467
        %3547 = vst.msk [vmem:[%s136 + $0x120] sm:$0xff] %vm3528, %v3469
        %3548 = vst.msk [vmem:[%s136 + $0x128] sm:$0xff] %vm3528, %v3471
        %3549 = vst.msk [vmem:[%s136 + $0x140] sm:$0xff] %vm3528, %v3473
        %3550 = vst.msk [vmem:[%s136 + $0x148] sm:$0xff] %vm3528, %v3475
        %3551 = vst.msk [vmem:[%s136 + $0x160] sm:$0xff] %vm3528, %v3477
        %3552 = vst.msk [vmem:[%s136 + $0x168] sm:$0xff] %vm3528, %v3479
        %3553 = vst.msk [vmem:[%s136 + $0x180] sm:$0xff] %vm3528, %v3481
        %3554 = vst.msk [vmem:[%s136 + $0x188] sm:$0xff] %vm3528, %v3483
        %3555 = vst.msk [vmem:[%s136 + $0x1a0] sm:$0xff] %vm3528, %v3485
        %3556 = vst.msk [vmem:[%s136 + $0x1a8] sm:$0xff] %vm3528, %v3487
        %3557 = vst.msk [vmem:[%s136 + $0x1c0] sm:$0xff] %vm3528, %v3489
        %3558 = vst.msk [vmem:[%s136 + $0x1c8] sm:$0xff] %vm3528, %v3491
        %3559 = vst.msk [vmem:[%s136 + $0x1e0] sm:$0xff] %vm3528, %v3493
        %3560 = vst.msk [vmem:[%s136 + $0x1e8] sm:$0xff] %vm3528, %v3495
        %v3561 = vld [vmem:[%s2486] sm:$0xff]
        %v3562 = vld [vmem:[%s2486 + $0x8] sm:$0xff]
        %v3563 = vld [vmem:[%s2486 + $0x10] sm:$0xff]
        %v3564 = vld [vmem:[%s2486 + $0x18] sm:$0xff]
        %v3565 = vld [vmem:[%s2486 + $0x20] sm:$0xff]
        %v3566 = vld [vmem:[%s2486 + $0x28] sm:$0xff]
        %v3567 = vld [vmem:[%s2486 + $0x30] sm:$0xff]
        %v3568 = vld [vmem:[%s2486 + $0x38] sm:$0xff]
        %v3569 = vld [vmem:[%s2486 + $0x40] sm:$0xff]
        %v3570 = vld [vmem:[%s2486 + $0x48] sm:$0xff]
        %v3571 = vld [vmem:[%s2486 + $0x50] sm:$0xff]
        %v3572 = vld [vmem:[%s2486 + $0x58] sm:$0xff]
        %v3573 = vld [vmem:[%s2486 + $0x60] sm:$0xff]
        %v3574 = vld [vmem:[%s2486 + $0x68] sm:$0xff]
        %v3575 = vld [vmem:[%s2486 + $0x70] sm:$0xff]
        %v3576 = vld [vmem:[%s2486 + $0x78] sm:$0xff]
        %v3577 = vld [vmem:[%s2486 + $0x80] sm:$0xff]
        %v3578 = vld [vmem:[%s2486 + $0x88] sm:$0xff]
        %v3579 = vld [vmem:[%s2486 + $0x90] sm:$0xff]
        %v3580 = vld [vmem:[%s2486 + $0x98] sm:$0xff]
        %v3581 = vld [vmem:[%s2486 + $0xa0] sm:$0xff]
        %v3582 = vld [vmem:[%s2486 + $0xa8] sm:$0xff]
        %v3583 = vld [vmem:[%s2486 + $0xb0] sm:$0xff]
        %v3584 = vld [vmem:[%s2486 + $0xb8] sm:$0xff]
        %v3585 = vld [vmem:[%s2486 + $0xc0] sm:$0xff]
        %v3586 = vld [vmem:[%s2486 + $0xc8] sm:$0xff]
        %v3587 = vld [vmem:[%s2486 + $0xd0] sm:$0xff]
        %v3588 = vld [vmem:[%s2486 + $0xd8] sm:$0xff]
        %v3589 = vld [vmem:[%s2486 + $0xe0] sm:$0xff]
        %v3590 = vld [vmem:[%s2486 + $0xe8] sm:$0xff]
        %v3591 = vld [vmem:[%s2486 + $0xf0] sm:$0xff]
        %v3592 = vld [vmem:[%s2486 + $0xf8] sm:$0xff]
        %v3593 = vsub.f32 %v3561, %v2968
        %v3594 = vsub.f32 %v3562, %v2968
        %v3595 = vsub.f32 %v3563, %v2968
        %v3596 = vsub.f32 %v3564, %v2968
        %v3597 = vsub.f32 %v3565, %v2968
        %v3598 = vsub.f32 %v3566, %v2968
        %v3599 = vsub.f32 %v3567, %v2968
        %v3600 = vsub.f32 %v3568, %v2968
        %v3601 = vsub.f32 %v3569, %v2968
        %v3602 = vsub.f32 %v3570, %v2968
        %v3603 = vsub.f32 %v3571, %v2968
        %v3604 = vsub.f32 %v3572, %v2968
        %v3605 = vsub.f32 %v3573, %v2968
        %v3606 = vsub.f32 %v3574, %v2968
        %v3607 = vsub.f32 %v3575, %v2968
        %v3608 = vsub.f32 %v3576, %v2968
        %v3609 = vsub.f32 %v3577, %v2968
        %v3610 = vsub.f32 %v3578, %v2968
        %v3611 = vsub.f32 %v3579, %v2968
        %v3612 = vsub.f32 %v3580, %v2968
        %v3613 = vsub.f32 %v3581, %v2968
        %v3614 = vsub.f32 %v3582, %v2968
        %v3615 = vsub.f32 %v3583, %v2968
        %v3616 = vsub.f32 %v3584, %v2968
        %v3617 = vsub.f32 %v3585, %v2968
        %v3618 = vsub.f32 %v3586, %v2968
        %v3619 = vsub.f32 %v3587, %v2968
        %v3620 = vsub.f32 %v3588, %v2968
        %v3621 = vsub.f32 %v3589, %v2968
        %v3622 = vsub.f32 %v3590, %v2968
        %v3623 = vsub.f32 %v3591, %v2968
        %v3624 = vsub.f32 %v3592, %v2968
        %v3625 = vmul.f32 %v3593, %v2983
        %v3626 = vmul.f32 %v3594, %v2983
        %v3627 = vmul.f32 %v3595, %v2983
        %v3628 = vmul.f32 %v3596, %v2983
        %v3629 = vmul.f32 %v3597, %v2983
        %v3630 = vmul.f32 %v3598, %v2983
        %v3631 = vmul.f32 %v3599, %v2983
        %v3632 = vmul.f32 %v3600, %v2983
        %v3633 = vmul.f32 %v3601, %v2983
        %v3634 = vmul.f32 %v3602, %v2983
        %v3635 = vmul.f32 %v3603, %v2983
        %v3636 = vmul.f32 %v3604, %v2983
        %v3637 = vmul.f32 %v3605, %v2983
        %v3638 = vmul.f32 %v3606, %v2983
        %v3639 = vmul.f32 %v3607, %v2983
        %v3640 = vmul.f32 %v3608, %v2983
        %v3641 = vmul.f32 %v3609, %v2983
        %v3642 = vmul.f32 %v3610, %v2983
        %v3643 = vmul.f32 %v3611, %v2983
        %v3644 = vmul.f32 %v3612, %v2983
        %v3645 = vmul.f32 %v3613, %v2983
        %v3646 = vmul.f32 %v3614, %v2983
        %v3647 = vmul.f32 %v3615, %v2983
        %v3648 = vmul.f32 %v3616, %v2983
        %v3649 = vmul.f32 %v3617, %v2983
        %v3650 = vmul.f32 %v3618, %v2983
        %v3651 = vmul.f32 %v3619, %v2983
        %v3652 = vmul.f32 %v3620, %v2983
        %v3653 = vmul.f32 %v3621, %v2983
        %v3654 = vmul.f32 %v3622, %v2983
        %v3655 = vmul.f32 %v3623, %v2983
        %v3656 = vmul.f32 %v3624, %v2983
        %vm3657 = vcmp.ge.f32.partialorder %v3625, 0.0
        %vm3658 = vcmp.ge.f32.partialorder %v3626, 0.0
        %vm3659 = vcmp.ge.f32.partialorder %v3627, 0.0
        %vm3660 = vcmp.ge.f32.partialorder %v3628, 0.0
        %vm3661 = vcmp.ge.f32.partialorder %v3629, 0.0
        %vm3662 = vcmp.ge.f32.partialorder %v3630, 0.0
        %vm3663 = vcmp.ge.f32.partialorder %v3631, 0.0
        %vm3664 = vcmp.ge.f32.partialorder %v3632, 0.0
        %vm3665 = vcmp.ge.f32.partialorder %v3633, 0.0
        %vm3666 = vcmp.ge.f32.partialorder %v3634, 0.0
        %vm3667 = vcmp.ge.f32.partialorder %v3635, 0.0
        %vm3668 = vcmp.ge.f32.partialorder %v3636, 0.0
        %vm3669 = vcmp.ge.f32.partialorder %v3637, 0.0
        %vm3670 = vcmp.ge.f32.partialorder %v3638, 0.0
        %vm3671 = vcmp.ge.f32.partialorder %v3639, 0.0
        %vm3672 = vcmp.ge.f32.partialorder %v3640, 0.0
        %vm3673 = vcmp.ge.f32.partialorder %v3641, 0.0
        %vm3674 = vcmp.ge.f32.partialorder %v3642, 0.0
        %vm3675 = vcmp.ge.f32.partialorder %v3643, 0.0
        %vm3676 = vcmp.ge.f32.partialorder %v3644, 0.0
        %vm3677 = vcmp.ge.f32.partialorder %v3645, 0.0
        %vm3678 = vcmp.ge.f32.partialorder %v3646, 0.0
        %vm3679 = vcmp.ge.f32.partialorder %v3647, 0.0
        %vm3680 = vcmp.ge.f32.partialorder %v3648, 0.0
        %vm3681 = vcmp.ge.f32.partialorder %v3649, 0.0
        %vm3682 = vcmp.ge.f32.partialorder %v3650, 0.0
        %vm3683 = vcmp.ge.f32.partialorder %v3651, 0.0
        %vm3684 = vcmp.ge.f32.partialorder %v3652, 0.0
        %vm3685 = vcmp.ge.f32.partialorder %v3653, 0.0
        %vm3686 = vcmp.ge.f32.partialorder %v3654, 0.0
        %vm3687 = vcmp.ge.f32.partialorder %v3655, 0.0
        %vm3688 = vcmp.ge.f32.partialorder %v3656, 0.0
        %v3689 = vmul.f32 %v3625, 0.2
        %v3690 = vmul.f32 %v3626, 0.2
        %v3691 = vmul.f32 %v3627, 0.2
        %v3692 = vmul.f32 %v3628, 0.2
        %v3693 = vmul.f32 %v3629, 0.2
        %v3694 = vmul.f32 %v3630, 0.2
        %v3695 = vmul.f32 %v3631, 0.2
        %v3696 = vmul.f32 %v3632, 0.2
        %v3697 = vmul.f32 %v3633, 0.2
        %v3698 = vmul.f32 %v3634, 0.2
        %v3699 = vmul.f32 %v3635, 0.2
        %v3700 = vmul.f32 %v3636, 0.2
        %v3701 = vmul.f32 %v3637, 0.2
        %v3702 = vmul.f32 %v3638, 0.2
        %v3703 = vmul.f32 %v3639, 0.2
        %v3704 = vmul.f32 %v3640, 0.2
        %v3705 = vmul.f32 %v3641, 0.2
        %v3706 = vmul.f32 %v3642, 0.2
        %v3707 = vmul.f32 %v3643, 0.2
        %v3708 = vmul.f32 %v3644, 0.2
        %v3709 = vmul.f32 %v3645, 0.2
        %v3710 = vmul.f32 %v3646, 0.2
        %v3711 = vmul.f32 %v3647, 0.2
        %v3712 = vmul.f32 %v3648, 0.2
        %v3713 = vmul.f32 %v3649, 0.2
        %v3714 = vmul.f32 %v3650, 0.2
        %v3715 = vmul.f32 %v3651, 0.2
        %v3716 = vmul.f32 %v3652, 0.2
        %v3717 = vmul.f32 %v3653, 0.2
        %v3718 = vmul.f32 %v3654, 0.2
        %v3719 = vmul.f32 %v3655, 0.2
        %v3720 = vmul.f32 %v3656, 0.2
        %v3721 = vsel %vm3657, %v3625, %v3689
        %v3722 = vsel %vm3658, %v3626, %v3690
        %v3723 = vsel %vm3659, %v3627, %v3691
        %v3724 = vsel %vm3660, %v3628, %v3692
        %v3725 = vsel %vm3661, %v3629, %v3693
        %v3726 = vsel %vm3662, %v3630, %v3694
        %v3727 = vsel %vm3663, %v3631, %v3695
        %v3728 = vsel %vm3664, %v3632, %v3696
        %v3729 = vsel %vm3665, %v3633, %v3697
        %v3730 = vsel %vm3666, %v3634, %v3698
        %v3731 = vsel %vm3667, %v3635, %v3699
        %v3732 = vsel %vm3668, %v3636, %v3700
        %v3733 = vsel %vm3669, %v3637, %v3701
        %v3734 = vsel %vm3670, %v3638, %v3702
        %v3735 = vsel %vm3671, %v3639, %v3703
        %v3736 = vsel %vm3672, %v3640, %v3704
        %v3737 = vsel %vm3673, %v3641, %v3705
        %v3738 = vsel %vm3674, %v3642, %v3706
        %v3739 = vsel %vm3675, %v3643, %v3707
        %v3740 = vsel %vm3676, %v3644, %v3708
        %v3741 = vsel %vm3677, %v3645, %v3709
        %v3742 = vsel %vm3678, %v3646, %v3710
        %v3743 = vsel %vm3679, %v3647, %v3711
        %v3744 = vsel %vm3680, %v3648, %v3712
        %v3745 = vsel %vm3681, %v3649, %v3713
        %v3746 = vsel %vm3682, %v3650, %v3714
        %v3747 = vsel %vm3683, %v3651, %v3715
        %v3748 = vsel %vm3684, %v3652, %v3716
        %v3749 = vsel %vm3685, %v3653, %v3717
        %v3750 = vsel %vm3686, %v3654, %v3718
        %v3751 = vsel %vm3687, %v3655, %v3719
        %v3752 = vsel %vm3688, %v3656, %v3720
        %s3753 = scalar_lea.vmem %s136, 16 [#allocation4]
        %3754 = vst.msk [vmem:[%s3753] sm:$0xff] %vm1415, %v3721
        %3755 = vst.msk [vmem:[%s3753 + $0x8] sm:$0xff] %vm1415, %v3722
        %3756 = vst.msk [vmem:[%s3753 + $0x20] sm:$0xff] %vm1415, %v3723
        %3757 = vst.msk [vmem:[%s3753 + $0x28] sm:$0xff] %vm1415, %v3724
        %3758 = vst.msk [vmem:[%s3753 + $0x40] sm:$0xff] %vm1415, %v3725
        %3759 = vst.msk [vmem:[%s3753 + $0x48] sm:$0xff] %vm1415, %v3726
        %3760 = vst.msk [vmem:[%s3753 + $0x60] sm:$0xff] %vm1415, %v3727
        %3761 = vst.msk [vmem:[%s3753 + $0x68] sm:$0xff] %vm1415, %v3728
        %3762 = vst.msk [vmem:[%s3753 + $0x80] sm:$0xff] %vm1415, %v3729
        %3763 = vst.msk [vmem:[%s3753 + $0x88] sm:$0xff] %vm1415, %v3730
        %3764 = vst.msk [vmem:[%s3753 + $0xa0] sm:$0xff] %vm1415, %v3731
        %3765 = vst.msk [vmem:[%s3753 + $0xa8] sm:$0xff] %vm1415, %v3732
        %3766 = vst.msk [vmem:[%s3753 + $0xc0] sm:$0xff] %vm1415, %v3733
        %3767 = vst.msk [vmem:[%s3753 + $0xc8] sm:$0xff] %vm1415, %v3734
        %3768 = vst.msk [vmem:[%s3753 + $0xe0] sm:$0xff] %vm1415, %v3735
        %3769 = vst.msk [vmem:[%s3753 + $0xe8] sm:$0xff] %vm1415, %v3736
        %3770 = vst.msk [vmem:[%s3753 + $0x100] sm:$0xff] %vm1415, %v3737
        %3771 = vst.msk [vmem:[%s3753 + $0x108] sm:$0xff] %vm1415, %v3738
        %3772 = vst.msk [vmem:[%s3753 + $0x120] sm:$0xff] %vm1415, %v3739
        %3773 = vst.msk [vmem:[%s3753 + $0x128] sm:$0xff] %vm1415, %v3740
        %3774 = vst.msk [vmem:[%s3753 + $0x140] sm:$0xff] %vm1415, %v3741
        %3775 = vst.msk [vmem:[%s3753 + $0x148] sm:$0xff] %vm1415, %v3742
        %3776 = vst.msk [vmem:[%s3753 + $0x160] sm:$0xff] %vm1415, %v3743
        %3777 = vst.msk [vmem:[%s3753 + $0x168] sm:$0xff] %vm1415, %v3744
        %3778 = vst.msk [vmem:[%s3753 + $0x180] sm:$0xff] %vm1415, %v3745
        %3779 = vst.msk [vmem:[%s3753 + $0x188] sm:$0xff] %vm1415, %v3746
        %3780 = vst.msk [vmem:[%s3753 + $0x1a0] sm:$0xff] %vm1415, %v3747
        %3781 = vst.msk [vmem:[%s3753 + $0x1a8] sm:$0xff] %vm1415, %v3748
        %3782 = vst.msk [vmem:[%s3753 + $0x1c0] sm:$0xff] %vm1415, %v3749
        %3783 = vst.msk [vmem:[%s3753 + $0x1c8] sm:$0xff] %vm1415, %v3750
        %3784 = vst.msk [vmem:[%s3753 + $0x1e0] sm:$0xff] %vm1415, %v3751
        %3785 = vst.msk [vmem:[%s3753 + $0x1e8] sm:$0xff] %vm1415, %v3752
        %v3786 = vld [vmem:[%s2935] sm:$0xff]
        %v3787 = vld [vmem:[%s2935 + $0x8] sm:$0xff]
        %v3788 = vld [vmem:[%s2935 + $0x10] sm:$0xff]
        %v3789 = vld [vmem:[%s2935 + $0x18] sm:$0xff]
        %v3790 = vld [vmem:[%s2935 + $0x20] sm:$0xff]
        %v3791 = vld [vmem:[%s2935 + $0x28] sm:$0xff]
        %v3792 = vld [vmem:[%s2935 + $0x30] sm:$0xff]
        %v3793 = vld [vmem:[%s2935 + $0x38] sm:$0xff]
        %v3794 = vld [vmem:[%s2935 + $0x40] sm:$0xff]
        %v3795 = vld [vmem:[%s2935 + $0x48] sm:$0xff]
        %v3796 = vld [vmem:[%s2935 + $0x50] sm:$0xff]
        %v3797 = vld [vmem:[%s2935 + $0x58] sm:$0xff]
        %v3798 = vld [vmem:[%s2935 + $0x60] sm:$0xff]
        %v3799 = vld [vmem:[%s2935 + $0x68] sm:$0xff]
        %v3800 = vld [vmem:[%s2935 + $0x70] sm:$0xff]
        %v3801 = vld [vmem:[%s2935 + $0x78] sm:$0xff]
        %v3802 = vld [vmem:[%s2935 + $0x80] sm:$0xff]
        %v3803 = vld [vmem:[%s2935 + $0x88] sm:$0xff]
        %v3804 = vld [vmem:[%s2935 + $0x90] sm:$0xff]
        %v3805 = vld [vmem:[%s2935 + $0x98] sm:$0xff]
        %v3806 = vld [vmem:[%s2935 + $0xa0] sm:$0xff]
        %v3807 = vld [vmem:[%s2935 + $0xa8] sm:$0xff]
        %v3808 = vld [vmem:[%s2935 + $0xb0] sm:$0xff]
        %v3809 = vld [vmem:[%s2935 + $0xb8] sm:$0xff]
        %v3810 = vld [vmem:[%s2935 + $0xc0] sm:$0xff]
        %v3811 = vld [vmem:[%s2935 + $0xc8] sm:$0xff]
        %v3812 = vld [vmem:[%s2935 + $0xd0] sm:$0xff]
        %v3813 = vld [vmem:[%s2935 + $0xd8] sm:$0xff]
        %v3814 = vld [vmem:[%s2935 + $0xe0] sm:$0xff]
        %v3815 = vld [vmem:[%s2935 + $0xe8] sm:$0xff]
        %v3816 = vld [vmem:[%s2935 + $0xf0] sm:$0xff]
        %v3817 = vld [vmem:[%s2935 + $0xf8] sm:$0xff]
        %v3818 = vsub.f32 %v3786, %v2968
        %v3819 = vsub.f32 %v3787, %v2968
        %v3820 = vsub.f32 %v3788, %v2968
        %v3821 = vsub.f32 %v3789, %v2968
        %v3822 = vsub.f32 %v3790, %v2968
        %v3823 = vsub.f32 %v3791, %v2968
        %v3824 = vsub.f32 %v3792, %v2968
        %v3825 = vsub.f32 %v3793, %v2968
        %v3826 = vsub.f32 %v3794, %v2968
        %v3827 = vsub.f32 %v3795, %v2968
        %v3828 = vsub.f32 %v3796, %v2968
        %v3829 = vsub.f32 %v3797, %v2968
        %v3830 = vsub.f32 %v3798, %v2968
        %v3831 = vsub.f32 %v3799, %v2968
        %v3832 = vsub.f32 %v3800, %v2968
        %v3833 = vsub.f32 %v3801, %v2968
        %v3834 = vsub.f32 %v3802, %v2968
        %v3835 = vsub.f32 %v3803, %v2968
        %v3836 = vsub.f32 %v3804, %v2968
        %v3837 = vsub.f32 %v3805, %v2968
        %v3838 = vsub.f32 %v3806, %v2968
        %v3839 = vsub.f32 %v3807, %v2968
        %v3840 = vsub.f32 %v3808, %v2968
        %v3841 = vsub.f32 %v3809, %v2968
        %v3842 = vsub.f32 %v3810, %v2968
        %v3843 = vsub.f32 %v3811, %v2968
        %v3844 = vsub.f32 %v3812, %v2968
        %v3845 = vsub.f32 %v3813, %v2968
        %v3846 = vsub.f32 %v3814, %v2968
        %v3847 = vsub.f32 %v3815, %v2968
        %v3848 = vsub.f32 %v3816, %v2968
        %v3849 = vsub.f32 %v3817, %v2968
        %v3850 = vmul.f32 %v3818, %v2983
        %v3851 = vmul.f32 %v3819, %v2983
        %v3852 = vmul.f32 %v3820, %v2983
        %v3853 = vmul.f32 %v3821, %v2983
        %v3854 = vmul.f32 %v3822, %v2983
        %v3855 = vmul.f32 %v3823, %v2983
        %v3856 = vmul.f32 %v3824, %v2983
        %v3857 = vmul.f32 %v3825, %v2983
        %v3858 = vmul.f32 %v3826, %v2983
        %v3859 = vmul.f32 %v3827, %v2983
        %v3860 = vmul.f32 %v3828, %v2983
        %v3861 = vmul.f32 %v3829, %v2983
        %v3862 = vmul.f32 %v3830, %v2983
        %v3863 = vmul.f32 %v3831, %v2983
        %v3864 = vmul.f32 %v3832, %v2983
        %v3865 = vmul.f32 %v3833, %v2983
        %v3866 = vmul.f32 %v3834, %v2983
        %v3867 = vmul.f32 %v3835, %v2983
        %v3868 = vmul.f32 %v3836, %v2983
        %v3869 = vmul.f32 %v3837, %v2983
        %v3870 = vmul.f32 %v3838, %v2983
        %v3871 = vmul.f32 %v3839, %v2983
        %v3872 = vmul.f32 %v3840, %v2983
        %v3873 = vmul.f32 %v3841, %v2983
        %v3874 = vmul.f32 %v3842, %v2983
        %v3875 = vmul.f32 %v3843, %v2983
        %v3876 = vmul.f32 %v3844, %v2983
        %v3877 = vmul.f32 %v3845, %v2983
        %v3878 = vmul.f32 %v3846, %v2983
        %v3879 = vmul.f32 %v3847, %v2983
        %v3880 = vmul.f32 %v3848, %v2983
        %v3881 = vmul.f32 %v3849, %v2983
        %vm3882 = vcmp.ge.f32.partialorder %v3850, 0.0
        %vm3883 = vcmp.ge.f32.partialorder %v3851, 0.0
        %vm3884 = vcmp.ge.f32.partialorder %v3852, 0.0
        %vm3885 = vcmp.ge.f32.partialorder %v3853, 0.0
        %vm3886 = vcmp.ge.f32.partialorder %v3854, 0.0
        %vm3887 = vcmp.ge.f32.partialorder %v3855, 0.0
        %vm3888 = vcmp.ge.f32.partialorder %v3856, 0.0
        %vm3889 = vcmp.ge.f32.partialorder %v3857, 0.0
        %vm3890 = vcmp.ge.f32.partialorder %v3858, 0.0
        %vm3891 = vcmp.ge.f32.partialorder %v3859, 0.0
        %vm3892 = vcmp.ge.f32.partialorder %v3860, 0.0
        %vm3893 = vcmp.ge.f32.partialorder %v3861, 0.0
        %vm3894 = vcmp.ge.f32.partialorder %v3862, 0.0
        %vm3895 = vcmp.ge.f32.partialorder %v3863, 0.0
        %vm3896 = vcmp.ge.f32.partialorder %v3864, 0.0
        %vm3897 = vcmp.ge.f32.partialorder %v3865, 0.0
        %vm3898 = vcmp.ge.f32.partialorder %v3866, 0.0
        %vm3899 = vcmp.ge.f32.partialorder %v3867, 0.0
        %vm3900 = vcmp.ge.f32.partialorder %v3868, 0.0
        %vm3901 = vcmp.ge.f32.partialorder %v3869, 0.0
        %vm3902 = vcmp.ge.f32.partialorder %v3870, 0.0
        %vm3903 = vcmp.ge.f32.partialorder %v3871, 0.0
        %vm3904 = vcmp.ge.f32.partialorder %v3872, 0.0
        %vm3905 = vcmp.ge.f32.partialorder %v3873, 0.0
        %vm3906 = vcmp.ge.f32.partialorder %v3874, 0.0
        %vm3907 = vcmp.ge.f32.partialorder %v3875, 0.0
        %vm3908 = vcmp.ge.f32.partialorder %v3876, 0.0
        %vm3909 = vcmp.ge.f32.partialorder %v3877, 0.0
        %vm3910 = vcmp.ge.f32.partialorder %v3878, 0.0
        %vm3911 = vcmp.ge.f32.partialorder %v3879, 0.0
        %vm3912 = vcmp.ge.f32.partialorder %v3880, 0.0
        %vm3913 = vcmp.ge.f32.partialorder %v3881, 0.0
        %v3914 = vmul.f32 %v3850, 0.2
        %v3915 = vmul.f32 %v3851, 0.2
        %v3916 = vmul.f32 %v3852, 0.2
        %v3917 = vmul.f32 %v3853, 0.2
        %v3918 = vmul.f32 %v3854, 0.2
        %v3919 = vmul.f32 %v3855, 0.2
        %v3920 = vmul.f32 %v3856, 0.2
        %v3921 = vmul.f32 %v3857, 0.2
        %v3922 = vmul.f32 %v3858, 0.2
        %v3923 = vmul.f32 %v3859, 0.2
        %v3924 = vmul.f32 %v3860, 0.2
        %v3925 = vmul.f32 %v3861, 0.2
        %v3926 = vmul.f32 %v3862, 0.2
        %v3927 = vmul.f32 %v3863, 0.2
        %v3928 = vmul.f32 %v3864, 0.2
        %v3929 = vmul.f32 %v3865, 0.2
        %v3930 = vmul.f32 %v3866, 0.2
        %v3931 = vmul.f32 %v3867, 0.2
        %v3932 = vmul.f32 %v3868, 0.2
        %v3933 = vmul.f32 %v3869, 0.2
        %v3934 = vmul.f32 %v3870, 0.2
        %v3935 = vmul.f32 %v3871, 0.2
        %v3936 = vmul.f32 %v3872, 0.2
        %v3937 = vmul.f32 %v3873, 0.2
        %v3938 = vmul.f32 %v3874, 0.2
        %v3939 = vmul.f32 %v3875, 0.2
        %v3940 = vmul.f32 %v3876, 0.2
        %v3941 = vmul.f32 %v3877, 0.2
        %v3942 = vmul.f32 %v3878, 0.2
        %v3943 = vmul.f32 %v3879, 0.2
        %v3944 = vmul.f32 %v3880, 0.2
        %v3945 = vmul.f32 %v3881, 0.2
        %v3946 = vsel %vm3882, %v3850, %v3914
        %v3947 = vsel %vm3883, %v3851, %v3915
        %v3948 = vsel %vm3884, %v3852, %v3916
        %v3949 = vsel %vm3885, %v3853, %v3917
        %v3950 = vsel %vm3886, %v3854, %v3918
        %v3951 = vsel %vm3887, %v3855, %v3919
        %v3952 = vsel %vm3888, %v3856, %v3920
        %v3953 = vsel %vm3889, %v3857, %v3921
        %v3954 = vsel %vm3890, %v3858, %v3922
        %v3955 = vsel %vm3891, %v3859, %v3923
        %v3956 = vsel %vm3892, %v3860, %v3924
        %v3957 = vsel %vm3893, %v3861, %v3925
        %v3958 = vsel %vm3894, %v3862, %v3926
        %v3959 = vsel %vm3895, %v3863, %v3927
        %v3960 = vsel %vm3896, %v3864, %v3928
        %v3961 = vsel %vm3897, %v3865, %v3929
        %v3962 = vsel %vm3898, %v3866, %v3930
        %v3963 = vsel %vm3899, %v3867, %v3931
        %v3964 = vsel %vm3900, %v3868, %v3932
        %v3965 = vsel %vm3901, %v3869, %v3933
        %v3966 = vsel %vm3902, %v3870, %v3934
        %v3967 = vsel %vm3903, %v3871, %v3935
        %v3968 = vsel %vm3904, %v3872, %v3936
        %v3969 = vsel %vm3905, %v3873, %v3937
        %v3970 = vsel %vm3906, %v3874, %v3938
        %v3971 = vsel %vm3907, %v3875, %v3939
        %v3972 = vsel %vm3908, %v3876, %v3940
        %v3973 = vsel %vm3909, %v3877, %v3941
        %v3974 = vsel %vm3910, %v3878, %v3942
        %v3975 = vsel %vm3911, %v3879, %v3943
        %v3976 = vsel %vm3912, %v3880, %v3944
        %v3977 = vsel %vm3913, %v3881, %v3945
        %4010 = vrot.lane.b32.xlu0 %v3946, 8
        %v4011 = vpop.permute.xlu0 %4010
        %4012 = vrot.lane.b32.xlu0 %v3947, 8
        %v4013 = vpop.permute.xlu0 %4012
        %4014 = vrot.lane.b32.xlu0 %v3948, 8
        %v4015 = vpop.permute.xlu0 %4014
        %4016 = vrot.lane.b32.xlu0 %v3949, 8
        %v4017 = vpop.permute.xlu0 %4016
        %4018 = vrot.lane.b32.xlu0 %v3950, 8
        %v4019 = vpop.permute.xlu0 %4018
        %4020 = vrot.lane.b32.xlu0 %v3951, 8
        %v4021 = vpop.permute.xlu0 %4020
        %4022 = vrot.lane.b32.xlu0 %v3952, 8
        %v4023 = vpop.permute.xlu0 %4022
        %4024 = vrot.lane.b32.xlu0 %v3953, 8
        %v4025 = vpop.permute.xlu0 %4024
        %4026 = vrot.lane.b32.xlu0 %v3954, 8
        %v4027 = vpop.permute.xlu0 %4026
        %4028 = vrot.lane.b32.xlu0 %v3955, 8
        %v4029 = vpop.permute.xlu0 %4028
        %4030 = vrot.lane.b32.xlu0 %v3956, 8
        %v4031 = vpop.permute.xlu0 %4030
        %4032 = vrot.lane.b32.xlu0 %v3957, 8
        %v4033 = vpop.permute.xlu0 %4032
        %4034 = vrot.lane.b32.xlu0 %v3958, 8
        %v4035 = vpop.permute.xlu0 %4034
        %4036 = vrot.lane.b32.xlu0 %v3959, 8
        %v4037 = vpop.permute.xlu0 %4036
        %4038 = vrot.lane.b32.xlu0 %v3960, 8
        %v4039 = vpop.permute.xlu0 %4038
        %4040 = vrot.lane.b32.xlu0 %v3961, 8
        %v4041 = vpop.permute.xlu0 %4040
        %4042 = vrot.lane.b32.xlu0 %v3962, 8
        %v4043 = vpop.permute.xlu0 %4042
        %4044 = vrot.lane.b32.xlu0 %v3963, 8
        %v4045 = vpop.permute.xlu0 %4044
        %4046 = vrot.lane.b32.xlu0 %v3964, 8
        %v4047 = vpop.permute.xlu0 %4046
        %4048 = vrot.lane.b32.xlu0 %v3965, 8
        %v4049 = vpop.permute.xlu0 %4048
        %4050 = vrot.lane.b32.xlu0 %v3966, 8
        %v4051 = vpop.permute.xlu0 %4050
        %4052 = vrot.lane.b32.xlu0 %v3967, 8
        %v4053 = vpop.permute.xlu0 %4052
        %4054 = vrot.lane.b32.xlu0 %v3968, 8
        %v4055 = vpop.permute.xlu0 %4054
        %4056 = vrot.lane.b32.xlu0 %v3969, 8
        %v4057 = vpop.permute.xlu0 %4056
        %4058 = vrot.lane.b32.xlu0 %v3970, 8
        %v4059 = vpop.permute.xlu0 %4058
        %4060 = vrot.lane.b32.xlu0 %v3971, 8
        %v4061 = vpop.permute.xlu0 %4060
        %4062 = vrot.lane.b32.xlu0 %v3972, 8
        %v4063 = vpop.permute.xlu0 %4062
        %4064 = vrot.lane.b32.xlu0 %v3973, 8
        %v4065 = vpop.permute.xlu0 %4064
        %4066 = vrot.lane.b32.xlu0 %v3974, 8
        %v4067 = vpop.permute.xlu0 %4066
        %4068 = vrot.lane.b32.xlu0 %v3975, 8
        %v4069 = vpop.permute.xlu0 %4068
        %4070 = vrot.lane.b32.xlu0 %v3976, 8
        %v4071 = vpop.permute.xlu0 %4070
        %4072 = vrot.lane.b32.xlu0 %v3977, 8
        %v4073 = vpop.permute.xlu0 %4072
        %4106 = vst.msk [vmem:[%s3753] sm:$0xff] %vm3528, %v4011
        %4107 = vst.msk [vmem:[%s3753 + $0x8] sm:$0xff] %vm3528, %v4013
        %4108 = vst.msk [vmem:[%s3753 + $0x20] sm:$0xff] %vm3528, %v4015
        %4109 = vst.msk [vmem:[%s3753 + $0x28] sm:$0xff] %vm3528, %v4017
        %4110 = vst.msk [vmem:[%s3753 + $0x40] sm:$0xff] %vm3528, %v4019
        %4111 = vst.msk [vmem:[%s3753 + $0x48] sm:$0xff] %vm3528, %v4021
        %4112 = vst.msk [vmem:[%s3753 + $0x60] sm:$0xff] %vm3528, %v4023
        %4113 = vst.msk [vmem:[%s3753 + $0x68] sm:$0xff] %vm3528, %v4025
        %4114 = vst.msk [vmem:[%s3753 + $0x80] sm:$0xff] %vm3528, %v4027
        %4115 = vst.msk [vmem:[%s3753 + $0x88] sm:$0xff] %vm3528, %v4029
        %4116 = vst.msk [vmem:[%s3753 + $0xa0] sm:$0xff] %vm3528, %v4031
        %4117 = vst.msk [vmem:[%s3753 + $0xa8] sm:$0xff] %vm3528, %v4033
        %4118 = vst.msk [vmem:[%s3753 + $0xc0] sm:$0xff] %vm3528, %v4035
        %4119 = vst.msk [vmem:[%s3753 + $0xc8] sm:$0xff] %vm3528, %v4037
        %4120 = vst.msk [vmem:[%s3753 + $0xe0] sm:$0xff] %vm3528, %v4039
        %4121 = vst.msk [vmem:[%s3753 + $0xe8] sm:$0xff] %vm3528, %v4041
        %4122 = vst.msk [vmem:[%s3753 + $0x100] sm:$0xff] %vm3528, %v4043
        %4123 = vst.msk [vmem:[%s3753 + $0x108] sm:$0xff] %vm3528, %v4045
        %4124 = vst.msk [vmem:[%s3753 + $0x120] sm:$0xff] %vm3528, %v4047
        %4125 = vst.msk [vmem:[%s3753 + $0x128] sm:$0xff] %vm3528, %v4049
        %4126 = vst.msk [vmem:[%s3753 + $0x140] sm:$0xff] %vm3528, %v4051
        %4127 = vst.msk [vmem:[%s3753 + $0x148] sm:$0xff] %vm3528, %v4053
        %4128 = vst.msk [vmem:[%s3753 + $0x160] sm:$0xff] %vm3528, %v4055
        %4129 = vst.msk [vmem:[%s3753 + $0x168] sm:$0xff] %vm3528, %v4057
        %4130 = vst.msk [vmem:[%s3753 + $0x180] sm:$0xff] %vm3528, %v4059
        %4131 = vst.msk [vmem:[%s3753 + $0x188] sm:$0xff] %vm3528, %v4061
        %4132 = vst.msk [vmem:[%s3753 + $0x1a0] sm:$0xff] %vm3528, %v4063
        %4133 = vst.msk [vmem:[%s3753 + $0x1a8] sm:$0xff] %vm3528, %v4065
        %4134 = vst.msk [vmem:[%s3753 + $0x1c0] sm:$0xff] %vm3528, %v4067
        %4135 = vst.msk [vmem:[%s3753 + $0x1c8] sm:$0xff] %vm3528, %v4069
        %4136 = vst.msk [vmem:[%s3753 + $0x1e0] sm:$0xff] %vm3528, %v4071
        %4137 = vst.msk [vmem:[%s3753 + $0x1e8] sm:$0xff] %vm3528, %v4073
        %s4138 = sand.u32 %s71, 1
        %s4139 = scalar_lea.sflag [#allocation5], %s4138
        %s4140 = sand.u32 %s71, 1
        %s4141 = smul.addr %s4140, 512
        %s4142 = scalar_lea.vmem [#allocation4], %s4141
        // Predicated region
        $region29: #{tpu_custom_call.1} parent=27 // pred_check
          %p4143 = pneg %p81
        $region30: #{tpu_custom_call.1} parent=27 // pred_check_branch
          %4145 = sbr.rel (%p4143) target = $region32
        $region31: #{tpu_custom_call.1} parent=27 // pred_region
          %4147 = vsyncadd %s4139, 0
          %s4148 = smul.addr %s16, 64
          %s4149 = smul.addr %s4148, 8
          %s4150 = scalar_lea.hbm %s2, %s4149
          %s4151 = sshll.u32 %s4142, 4
          %s4152 = int_to_ptr.vmem [resolvable:$true] %s4151
          %s4153 = sshll.u32 %s4150, 4
          %s4154 = int_to_ptr.hbm [resolvable:$true] %s4153
          %4159 = dma.vmem_to_hbm [thread:$0]  %s4152, 8192, %s4154, %s4139, 128, 128, 8
        $region32: #{tpu_custom_call.1} parent=27 // pred_fallthru
          _
      $region28: #{tpu_custom_call.1} parent=5 // pred_fallthru
        _
      %p4160 = scmp.le.s32.totalorder 2, %s11
      // Predicated region
      $region33: #{tpu_custom_call.1} parent=5 // pred_check
        %p4161 = pneg %p4160
      $region34: #{tpu_custom_call.1} parent=5 // pred_check_branch
        %4163 = sbr.rel (%p4161) target = $region36
      $region35: #{tpu_custom_call.1} parent=5 // pred_region
        %s4164 = ssub.s32 %s11, 2
        // Predicated region
        $region37: #{tpu_custom_call.1} parent=35 // pred_check
          %p4165 = pneg %p87
        $region38: #{tpu_custom_call.1} parent=35 // pred_check_branch
          %4167 = sbr.rel (%p4165) target = $region40
        $region39: #{tpu_custom_call.1} parent=35 // pred_region
          %s4168 = sand.u32 %s72, 1
          %s4169 = scalar_lea.sflag [#allocation5], %s4168
          %s4170 = sand.u32 %s72, 1
          %s4171 = smul.addr %s4170, 512
          %s4172 = scalar_lea.vmem [#allocation4], %s4171
          %4174 = dma.done %s4169, 8192
        $region40: #{tpu_custom_call.1} parent=35 // pred_fallthru
          _
      $region36: #{tpu_custom_call.1} parent=5 // pred_fallthru
        _
    $region6: #{tpu_custom_call.1} parent=1 // loop_footer
      %s15 = sadd.s32 1, %s11
    $region7: #{tpu_custom_call.1} parent=1 // loop_footer_branch
      %10 = sbr.rel target = $region3
    $region8: #{tpu_custom_call.1} parent=1 // loop_exit
      _
    %4175 = vsyncpa [#allocation5], 1
    %s4176 = scalar_lea.sflag [#allocation5], 1
    %4177 = vsyncpa %s4176, 1

</llo_original>
